<compile_context>
chip_gen: v6e
topology: v6e:2x2x1
jax: 0.10.0
libtpu: 0.0.40
codegen_flags: <defaults>
</compile_context>

<pallas_src>
import functools
import math

import jax
import jax.numpy as jnp
from jax.experimental import pallas as pl
from jax.experimental.pallas import tpu as pltpu


_MXU_DTYPE = jnp.bfloat16  # MXU input dtype; accumulation stays f32.


# ----------------------------------------------------------------------------
# Pallas kernels
# ----------------------------------------------------------------------------
def _conv_im2col_kernel(*refs, relu, has_residual):
    """out = im2col @ W (+ residual) (-> ReLU); single K=9*Cin matmul, f32 accumulate."""
    if has_residual:
        x_ref, w_ref, res_ref, out_ref = refs
    else:
        x_ref, w_ref, out_ref = refs

    acc = jnp.dot(x_ref[...], w_ref[...], preferred_element_type=jnp.float32)
    if has_residual:
        acc = acc + res_ref[...]
    if relu:
        acc = jnp.maximum(acc, 0.0)
    out_ref[...] = acc.astype(out_ref.dtype)


def _l1_normalize_kernel(x_ref, o_ref):
    """F.normalize(x, p=1, dim=channel): x / max(sum(|x|, channel), 1e-12)."""
    x = x_ref[...]
    denom = jnp.maximum(jnp.sum(jnp.abs(x), axis=-1, keepdims=True), 1e-12)
    o_ref[...] = x / denom


# ----------------------------------------------------------------------------
# Tiling helper
# ----------------------------------------------------------------------------
def _pick_row_tile(M, max_tile=512):
    """Largest multiple-of-16 divisor of M that is <= max_tile; prefer >= 2 grid steps
    (so the parallel grid axis can be split across 2 TensorCores on v7x)."""
    candidates = [t for t in range(16, min(M, max_tile) + 1, 16) if M % t == 0]
    if not candidates:
        return M  # fall back to a single whole-array block (always layout-legal)
    multi = [t for t in candidates if M // t >= 2]
    return max(multi) if multi else max(candidates)


# ----------------------------------------------------------------------------
# Pallas-backed ops
# ----------------------------------------------------------------------------
def conv3x3_pallas(x, w, *, stride=1, relu=False, residual=None):
    """3x3 conv, padding=1, bias=False on NHWC input; optional fused residual+ReLU.

    x:        (N, H, W, Cin)  float32
    w:        (3, 3, Cin, Cout) float32  (HWIO)
    residual: optional (N, Ho, Wo, Cout) float32 added before ReLU
    """
    N, H, W, Cin = x.shape
    Cout = w.shape[-1]
    Ho = (H + 2 - 3) // stride + 1
    Wo = (W + 2 - 3) // stride + 1
    M = N * Ho * Wo
    K = 9 * Cin

    # Single fused, lane-dense im2col (bf16) — data movement only, stays in JAX/XLA.
    xp = jnp.pad(x, ((0, 0), (1, 1), (1, 1), (0, 0))).astype(_MXU_DTYPE)
    cols = []
    for kh in range(3):          # static Python ints -> static strided slices
        for kw in range(3):
            cols.append(
                xp[:, kh:kh + stride * Ho:stride, kw:kw + stride * Wo:stride, :])
    im2col = jnp.concatenate(cols, axis=-1).reshape(M, K)        # (M, 9*Cin) bf16
    wflat = w.reshape(K, Cout).astype(_MXU_DTYPE)                # (9*Cin, Cout) bf16

    tm = _pick_row_tile(M)
    grid = (M // tm,)

    in_specs = [
        pl.BlockSpec((tm, K), lambda i: (i, 0)),
        pl.BlockSpec((K, Cout), lambda i: (0, 0)),   # constant block index -> no re-DMA
    ]
    args = [im2col, wflat]
    has_residual = residual is not None
    if has_residual:
        in_specs.append(pl.BlockSpec((tm, Cout), lambda i: (i, 0)))
        args.append(residual.reshape(M, Cout).astype(jnp.float32))

    kernel = functools.partial(_conv_im2col_kernel, relu=relu,
                               has_residual=has_residual)
    out = pl.pallas_call(
        kernel,
        out_shape=jax.ShapeDtypeStruct((M, Cout), jnp.float32),
        grid=grid,
        in_specs=in_specs,
        out_specs=pl.BlockSpec((tm, Cout), lambda i: (i, 0)),
        compiler_params=pltpu.CompilerParams(
            dimension_semantics=("parallel",)),
    )(*args)
    return out.reshape(N, Ho, Wo, Cout)


def l1_normalize_pallas(x):
    """L1-normalize along channel (last dim). x: (N, H, W, C) float32."""
    N, H, W, C = x.shape
    M = N * H * W
    flat = x.reshape(M, C)
    tm = _pick_row_tile(M)
    out = pl.pallas_call(
        _l1_normalize_kernel,
        out_shape=jax.ShapeDtypeStruct((M, C), jnp.float32),
        grid=(M // tm,),
        in_specs=[pl.BlockSpec((tm, C), lambda i: (i, 0))],
        out_specs=pl.BlockSpec((tm, C), lambda i: (i, 0)),
        compiler_params=pltpu.CompilerParams(
            dimension_semantics=("parallel",)),
    )(flat)
    return out.reshape(N, H, W, C)


# ----------------------------------------------------------------------------
# Parameter init (deterministic, Kaiming-like; matches the nn.Module shapes)
# ----------------------------------------------------------------------------
def _init_conv(key, cin, cout):
    std = math.sqrt(2.0 / (9 * cin))
    return jax.random.normal(key, (3, 3, cin, cout), jnp.float32) * std


def init_uresencoder(key, *, input_channels, layers, layer_num, neck_planes,
                     last_layer_softmax):
    neck = neck_planes * 2
    inplanes = neck // 2
    keys = iter(jax.random.split(key, 128))

    # NOTE: strides are NOT stored in params (they must stay static under jit);
    # they are derived from block position in the forward pass.
    params = {"layer0": _init_conv(next(keys), input_channels, inplanes)}
    stages = []
    for li in range(layer_num):
        planes = neck * (2 ** li)
        blocks = []
        for bi in range(layers[li]):
            stride = 2 if bi == 0 else 1
            blk = {
                "conv1": _init_conv(next(keys), inplanes, planes),
                "conv2": _init_conv(next(keys), planes, planes),
            }
            if stride != 1 or inplanes != planes:  # BasicBlock.expansion == 1
                blk["downsample"] = _init_conv(next(keys), inplanes, planes)
            inplanes = planes
            blocks.append(blk)
        stage = {"blocks": blocks}
        if last_layer_softmax and li + 1 == layer_num:
            stage["last_layer"] = _init_conv(next(keys), inplanes, inplanes)
        stages.append(stage)
    params["stages"] = stages
    return params


# ----------------------------------------------------------------------------
# Forward pass (Pallas-backed)
# ----------------------------------------------------------------------------
def _basic_block(x, blk, stride):
    out = conv3x3_pallas(x, blk["conv1"], stride=stride, relu=True)
    if "downsample" in blk:
        residual = conv3x3_pallas(x, blk["downsample"], stride=stride, relu=False)
    else:
        residual = x
    # conv2 + residual add + ReLU fused in one Pallas kernel
    return conv3x3_pallas(out, blk["conv2"], stride=1, relu=True, residual=residual)


def uresencoder_forward(x_nchw, params, *, last_layer_softmax=False):
    # NCHW (PyTorch) -> NHWC (kernel layout)
    x = jnp.transpose(x_nchw, (0, 2, 3, 1)).astype(jnp.float32)
    x = conv3x3_pallas(x, params["layer0"], stride=1, relu=True)

    out_list = []
    for stage in params["stages"]:
        for bi, blk in enumerate(stage["blocks"]):
            stride = 2 if bi == 0 else 1  # _make_layer(..., stride=2): only 1st block strides
            x = _basic_block(x, blk, stride)
        if "last_layer" in stage:
            x = conv3x3_pallas(x, stage["last_layer"], stride=1, relu=False)
        out_list.append(x)

    if last_layer_softmax:
        out_list[-1] = l1_normalize_pallas(out_list[-1])

    out_list = out_list[::-1]
    # back to NCHW to match PyTorch output convention
    return [jnp.transpose(o, (0, 3, 1, 2)) for o in out_list]


# TODO(synk): att_tag=True path requires Variance_Attention, whose definition is not
# provided in the reference source; only the default att_tag=False path is implemented.


# ----------------------------------------------------------------------------
# Pure-JAX reference (lax.conv) for verification.
# Inputs are cast to bf16 (f32 accumulation) to match the kernel's MXU precision.
# ----------------------------------------------------------------------------
def _ref_conv(x, w, stride=1):
    return jax.lax.conv_general_dilated(
        x.astype(_MXU_DTYPE), w.astype(_MXU_DTYPE),
        window_strides=(stride, stride), padding=((1, 1), (1, 1)),
        dimension_numbers=("NHWC", "HWIO", "NHWC"),
        preferred_element_type=jnp.float32)


def reference_forward(x_nchw, params, *, last_layer_softmax=False):
    x = jnp.transpose(x_nchw, (0, 2, 3, 1)).astype(jnp.float32)
    x = jnp.maximum(_ref_conv(x, params["layer0"], 1), 0.0)
    outs = []
    for stage in params["stages"]:
        for bi, blk in enumerate(stage["blocks"]):
            s = 2 if bi == 0 else 1
            out = jnp.maximum(_ref_conv(x, blk["conv1"], s), 0.0)
            out = _ref_conv(out, blk["conv2"], 1)
            residual = _ref_conv(x, blk["downsample"], s) if "downsample" in blk else x
            x = jnp.maximum(out + residual, 0.0)
        if "last_layer" in stage:
            x = _ref_conv(x, stage["last_layer"], 1)
        outs.append(x)
    if last_layer_softmax:
        last = outs[-1]
        denom = jnp.maximum(jnp.sum(jnp.abs(last), axis=-1, keepdims=True), 1e-12)
        outs[-1] = last / denom
    outs = outs[::-1]
    return [jnp.transpose(o, (0, 3, 1, 2)) for o in outs]


# ----------------------------------------------------------------------------
if __name__ == "__main__":
    key = jax.random.PRNGKey(0)
    k_x, k_p = jax.random.split(key)

    # Small shapes consistent with the module: batch=2, input_channels=4, 16x16 spatial.
    N, C, H, W = 2, 4, 16, 16
    x = jax.random.normal(k_x, (N, C, H, W), jnp.float32)  # NCHW like PyTorch

    cfg = dict(input_channels=C, layers=(2, 2), layer_num=2, neck_planes=8,
               last_layer_softmax=True)
    params = init_uresencoder(k_p, **cfg)

    fwd = jax.jit(functools.partial(uresencoder_forward,
                                    last_layer_softmax=cfg["last_layer_softmax"]))
    outs = fwd(x, params)
    outs = jax.block_until_ready(outs)

    refs = reference_forward(x, params,
                             last_layer_softmax=cfg["last_layer_softmax"])
    assert len(outs) == len(refs)
    for o, r in zip(outs, refs):
        assert o.shape == r.shape, (o.shape, r.shape)
        assert jnp.allclose(o, r, rtol=2e-2, atol=2e-2), \
            float(jnp.max(jnp.abs(o - r)))

    print("KERNEL_OK")
</pallas_src>

<mosaic_0001>
module attributes {stable_mosaic.version = 11 : i64} {
  func.func @_conv_im2col_kernel(%arg0: i32, %arg1: memref<256x36xbf16, #tpu.memory_space<vmem>>, %arg2: memref<36x8xbf16, #tpu.memory_space<vmem>>, %arg3: memref<256x8xf32, #tpu.memory_space<vmem>>) attributes {dimension_semantics = [#tpu.dimension_semantics<parallel>], iteration_bounds = array<i64: 2>, scalar_prefetch = 0 : i64, scratch_operands = 0 : i64, tpu.core_type = #tpu.core_type<tc>, window_params = [{transform_indices = @transform_0, window_bounds = array<i64: 256, 36>}, {pipeline_mode = #tpu.pipeline_mode<synchronous>, transform_indices = @transform_1, window_bounds = array<i64: 36, 8>}, {transform_indices = @transform_2, window_bounds = array<i64: 256, 8>}]} {
    %c0 = arith.constant 0 : index
    %c0_0 = arith.constant 0 : index
    %0 = vector.load %arg1[%c0, %c0_0] : memref<256x36xbf16, #tpu.memory_space<vmem>>, vector<256x36xbf16>
    %c0_1 = arith.constant 0 : index
    %c0_2 = arith.constant 0 : index
    %1 = vector.load %arg2[%c0_1, %c0_2] : memref<36x8xbf16, #tpu.memory_space<vmem>>, vector<36x8xbf16>
    %cst = arith.constant dense<0.000000e+00> : vector<256x8xf32>
    %2 = tpu.matmul %0, %1, %cst {dimension_numbers = #tpu.dot_dimension_numbers<[1], [0], [0], [1], [0, 0, 1, 1], [], []>} : vector<256x36xbf16>, vector<36x8xbf16>, vector<256x8xf32> -> vector<256x8xf32>
    %cst_3 = arith.constant 0.000000e+00 : f32
    %3 = vector.broadcast %cst_3 : f32 to vector<256x8xf32>
    %4 = arith.maximumf %2, %3 : vector<256x8xf32>
    %c0_4 = arith.constant 0 : index
    %c0_5 = arith.constant 0 : index
    %5 = vector.load %arg3[%c0_4, %c0_5] : memref<256x8xf32, #tpu.memory_space<vmem>>, vector<256x8xf32>
    tpu.vector_store %arg3[%c0_4, %c0_5], %4 {strides = array<i32>} : memref<256x8xf32, #tpu.memory_space<vmem>>, vector<256x8xf32>,
    return
  }
  func.func @transform_0(%arg0: i32) -> (i32, i32) {
    %c0_i32 = arith.constant 0 : i32
    %c0_i32_0 = arith.constant 0 : i32
    return %arg0, %c0_i32 : i32, i32
  }
  func.func @transform_1(%arg0: i32) -> (i32, i32) {
    %c0_i32 = arith.constant 0 : i32
    %c0_i32_0 = arith.constant 0 : i32
    %c0_i32_1 = arith.constant 0 : i32
    return %c0_i32, %c0_i32_0 : i32, i32
  }
  func.func @transform_2(%arg0: i32) -> (i32, i32) {
    %c0_i32 = arith.constant 0 : i32
    %c0_i32_0 = arith.constant 0 : i32
    return %arg0, %c0_i32 : i32, i32
  }
}

module attributes {stable_mosaic.version = 11 : i64} {
  func.func @_conv_im2col_kernel(%arg0: i32, %arg1: memref<64x72xbf16, #tpu.memory_space<vmem>>, %arg2: memref<72x16xbf16, #tpu.memory_space<vmem>>, %arg3: memref<64x16xf32, #tpu.memory_space<vmem>>) attributes {dimension_semantics = [#tpu.dimension_semantics<parallel>], iteration_bounds = array<i64: 2>, scalar_prefetch = 0 : i64, scratch_operands = 0 : i64, tpu.core_type = #tpu.core_type<tc>, window_params = [{transform_indices = @transform_0, window_bounds = array<i64: 64, 72>}, {pipeline_mode = #tpu.pipeline_mode<synchronous>, transform_indices = @transform_1, window_bounds = array<i64: 72, 16>}, {transform_indices = @transform_2, window_bounds = array<i64: 64, 16>}]} {
    %c0 = arith.constant 0 : index
    %c0_0 = arith.constant 0 : index
    %0 = vector.load %arg1[%c0, %c0_0] : memref<64x72xbf16, #tpu.memory_space<vmem>>, vector<64x72xbf16>
    %c0_1 = arith.constant 0 : index
    %c0_2 = arith.constant 0 : index
    %1 = vector.load %arg2[%c0_1, %c0_2] : memref<72x16xbf16, #tpu.memory_space<vmem>>, vector<72x16xbf16>
    %cst = arith.constant dense<0.000000e+00> : vector<64x16xf32>
    %2 = tpu.matmul %0, %1, %cst {dimension_numbers = #tpu.dot_dimension_numbers<[1], [0], [0], [1], [0, 0, 1, 1], [], []>} : vector<64x72xbf16>, vector<72x16xbf16>, vector<64x16xf32> -> vector<64x16xf32>
    %cst_3 = arith.constant 0.000000e+00 : f32
    %3 = vector.broadcast %cst_3 : f32 to vector<64x16xf32>
    %4 = arith.maximumf %2, %3 : vector<64x16xf32>
    %c0_4 = arith.constant 0 : index
    %c0_5 = arith.constant 0 : index
    %5 = vector.load %arg3[%c0_4, %c0_5] : memref<64x16xf32, #tpu.memory_space<vmem>>, vector<64x16xf32>
    tpu.vector_store %arg3[%c0_4, %c0_5], %4 {strides = array<i32>} : memref<64x16xf32, #tpu.memory_space<vmem>>, vector<64x16xf32>,
    return
  }
  func.func @transform_0(%arg0: i32) -> (i32, i32) {
    %c0_i32 = arith.constant 0 : i32
    %c0_i32_0 = arith.constant 0 : i32
    return %arg0, %c0_i32 : i32, i32
  }
  func.func @transform_1(%arg0: i32) -> (i32, i32) {
    %c0_i32 = arith.constant 0 : i32
    %c0_i32_0 = arith.constant 0 : i32
    %c0_i32_1 = arith.constant 0 : i32
    return %c0_i32, %c0_i32_0 : i32, i32
  }
  func.func @transform_2(%arg0: i32) -> (i32, i32) {
    %c0_i32 = arith.constant 0 : i32
    %c0_i32_0 = arith.constant 0 : i32
    return %arg0, %c0_i32 : i32, i32
  }
}

module attributes {stable_mosaic.version = 11 : i64} {
  func.func @_conv_im2col_kernel(%arg0: i32, %arg1: memref<64x72xbf16, #tpu.memory_space<vmem>>, %arg2: memref<72x16xbf16, #tpu.memory_space<vmem>>, %arg3: memref<64x16xf32, #tpu.memory_space<vmem>>) attributes {dimension_semantics = [#tpu.dimension_semantics<parallel>], iteration_bounds = array<i64: 2>, scalar_prefetch = 0 : i64, scratch_operands = 0 : i64, tpu.core_type = #tpu.core_type<tc>, window_params = [{transform_indices = @transform_0, window_bounds = array<i64: 64, 72>}, {pipeline_mode = #tpu.pipeline_mode<synchronous>, transform_indices = @transform_1, window_bounds = array<i64: 72, 16>}, {transform_indices = @transform_2, window_bounds = array<i64: 64, 16>}]} {
    %c0 = arith.constant 0 : index
    %c0_0 = arith.constant 0 : index
    %0 = vector.load %arg1[%c0, %c0_0] : memref<64x72xbf16, #tpu.memory_space<vmem>>, vector<64x72xbf16>
    %c0_1 = arith.constant 0 : index
    %c0_2 = arith.constant 0 : index
    %1 = vector.load %arg2[%c0_1, %c0_2] : memref<72x16xbf16, #tpu.memory_space<vmem>>, vector<72x16xbf16>
    %cst = arith.constant dense<0.000000e+00> : vector<64x16xf32>
    %2 = tpu.matmul %0, %1, %cst {dimension_numbers = #tpu.dot_dimension_numbers<[1], [0], [0], [1], [0, 0, 1, 1], [], []>} : vector<64x72xbf16>, vector<72x16xbf16>, vector<64x16xf32> -> vector<64x16xf32>
    %c0_3 = arith.constant 0 : index
    %c0_4 = arith.constant 0 : index
    %3 = vector.load %arg3[%c0_3, %c0_4] : memref<64x16xf32, #tpu.memory_space<vmem>>, vector<64x16xf32>
    tpu.vector_store %arg3[%c0_3, %c0_4], %2 {strides = array<i32>} : memref<64x16xf32, #tpu.memory_space<vmem>>, vector<64x16xf32>,
    return
  }
  func.func @transform_0(%arg0: i32) -> (i32, i32) {
    %c0_i32 = arith.constant 0 : i32
    %c0_i32_0 = arith.constant 0 : i32
    return %arg0, %c0_i32 : i32, i32
  }
  func.func @transform_1(%arg0: i32) -> (i32, i32) {
    %c0_i32 = arith.constant 0 : i32
    %c0_i32_0 = arith.constant 0 : i32
    %c0_i32_1 = arith.constant 0 : i32
    return %c0_i32, %c0_i32_0 : i32, i32
  }
  func.func @transform_2(%arg0: i32) -> (i32, i32) {
    %c0_i32 = arith.constant 0 : i32
    %c0_i32_0 = arith.constant 0 : i32
    return %arg0, %c0_i32 : i32, i32
  }
}

module attributes {stable_mosaic.version = 11 : i64} {
  func.func @_conv_im2col_kernel(%arg0: i32, %arg1: memref<64x144xbf16, #tpu.memory_space<vmem>>, %arg2: memref<144x16xbf16, #tpu.memory_space<vmem>>, %arg3: memref<64x16xf32, #tpu.memory_space<vmem>>, %arg4: memref<64x16xf32, #tpu.memory_space<vmem>>) attributes {dimension_semantics = [#tpu.dimension_semantics<parallel>], iteration_bounds = array<i64: 2>, scalar_prefetch = 0 : i64, scratch_operands = 0 : i64, tpu.core_type = #tpu.core_type<tc>, window_params = [{transform_indices = @transform_0, window_bounds = array<i64: 64, 144>}, {pipeline_mode = #tpu.pipeline_mode<synchronous>, transform_indices = @transform_1, window_bounds = array<i64: 144, 16>}, {transform_indices = @transform_2, window_bounds = array<i64: 64, 16>}, {transform_indices = @transform_3, window_bounds = array<i64: 64, 16>}]} {
    %c0 = arith.constant 0 : index
    %c0_0 = arith.constant 0 : index
    %0 = vector.load %arg1[%c0, %c0_0] : memref<64x144xbf16, #tpu.memory_space<vmem>>, vector<64x144xbf16>
    %c0_1 = arith.constant 0 : index
    %c0_2 = arith.constant 0 : index
    %1 = vector.load %arg2[%c0_1, %c0_2] : memref<144x16xbf16, #tpu.memory_space<vmem>>, vector<144x16xbf16>
    %cst = arith.constant dense<0.000000e+00> : vector<64x16xf32>
    %2 = tpu.matmul %0, %1, %cst {dimension_numbers = #tpu.dot_dimension_numbers<[1], [0], [0], [1], [0, 0, 1, 1], [], []>} : vector<64x144xbf16>, vector<144x16xbf16>, vector<64x16xf32> -> vector<64x16xf32>
    %c0_3 = arith.constant 0 : index
    %c0_4 = arith.constant 0 : index
    %3 = vector.load %arg3[%c0_3, %c0_4] : memref<64x16xf32, #tpu.memory_space<vmem>>, vector<64x16xf32>
    %4 = arith.addf %2, %3 : vector<64x16xf32>
    %cst_5 = arith.constant 0.000000e+00 : f32
    %5 = vector.broadcast %cst_5 : f32 to vector<64x16xf32>
    %6 = arith.maximumf %4, %5 : vector<64x16xf32>
    %c0_6 = arith.constant 0 : index
    %c0_7 = arith.constant 0 : index
    %7 = vector.load %arg4[%c0_6, %c0_7] : memref<64x16xf32, #tpu.memory_space<vmem>>, vector<64x16xf32>
    tpu.vector_store %arg4[%c0_6, %c0_7], %6 {strides = array<i32>} : memref<64x16xf32, #tpu.memory_space<vmem>>, vector<64x16xf32>,
    return
  }
  func.func @transform_0(%arg0: i32) -> (i32, i32) {
    %c0_i32 = arith.constant 0 : i32
    %c0_i32_0 = arith.constant 0 : i32
    return %arg0, %c0_i32 : i32, i32
  }
  func.func @transform_1(%arg0: i32) -> (i32, i32) {
    %c0_i32 = arith.constant 0 : i32
    %c0_i32_0 = arith.constant 0 : i32
    %c0_i32_1 = arith.constant 0 : i32
    return %c0_i32, %c0_i32_0 : i32, i32
  }
  func.func @transform_2(%arg0: i32) -> (i32, i32) {
    %c0_i32 = arith.constant 0 : i32
    %c0_i32_0 = arith.constant 0 : i32
    return %arg0, %c0_i32 : i32, i32
  }
  func.func @transform_3(%arg0: i32) -> (i32, i32) {
    %c0_i32 = arith.constant 0 : i32
    %c0_i32_0 = arith.constant 0 : i32
    return %arg0, %c0_i32 : i32, i32
  }
}

module attributes {stable_mosaic.version = 11 : i64} {
  func.func @_conv_im2col_kernel(%arg0: i32, %arg1: memref<64x144xbf16, #tpu.memory_space<vmem>>, %arg2: memref<144x16xbf16, #tpu.memory_space<vmem>>, %arg3: memref<64x16xf32, #tpu.memory_space<vmem>>) attributes {dimension_semantics = [#tpu.dimension_semantics<parallel>], iteration_bounds = array<i64: 2>, scalar_prefetch = 0 : i64, scratch_operands = 0 : i64, tpu.core_type = #tpu.core_type<tc>, window_params = [{transform_indices = @transform_0, window_bounds = array<i64: 64, 144>}, {pipeline_mode = #tpu.pipeline_mode<synchronous>, transform_indices = @transform_1, window_bounds = array<i64: 144, 16>}, {transform_indices = @transform_2, window_bounds = array<i64: 64, 16>}]} {
    %c0 = arith.constant 0 : index
    %c0_0 = arith.constant 0 : index
    %0 = vector.load %arg1[%c0, %c0_0] : memref<64x144xbf16, #tpu.memory_space<vmem>>, vector<64x144xbf16>
    %c0_1 = arith.constant 0 : index
    %c0_2 = arith.constant 0 : index
    %1 = vector.load %arg2[%c0_1, %c0_2] : memref<144x16xbf16, #tpu.memory_space<vmem>>, vector<144x16xbf16>
    %cst = arith.constant dense<0.000000e+00> : vector<64x16xf32>
    %2 = tpu.matmul %0, %1, %cst {dimension_numbers = #tpu.dot_dimension_numbers<[1], [0], [0], [1], [0, 0, 1, 1], [], []>} : vector<64x144xbf16>, vector<144x16xbf16>, vector<64x16xf32> -> vector<64x16xf32>
    %cst_3 = arith.constant 0.000000e+00 : f32
    %3 = vector.broadcast %cst_3 : f32 to vector<64x16xf32>
    %4 = arith.maximumf %2, %3 : vector<64x16xf32>
    %c0_4 = arith.constant 0 : index
    %c0_5 = arith.constant 0 : index
    %5 = vector.load %arg3[%c0_4, %c0_5] : memref<64x16xf32, #tpu.memory_space<vmem>>, vector<64x16xf32>
    tpu.vector_store %arg3[%c0_4, %c0_5], %4 {strides = array<i32>} : memref<64x16xf32, #tpu.memory_space<vmem>>, vector<64x16xf32>,
    return
  }
  func.func @transform_0(%arg0: i32) -> (i32, i32) {
    %c0_i32 = arith.constant 0 : i32
    %c0_i32_0 = arith.constant 0 : i32
    return %arg0, %c0_i32 : i32, i32
  }
  func.func @transform_1(%arg0: i32) -> (i32, i32) {
    %c0_i32 = arith.constant 0 : i32
    %c0_i32_0 = arith.constant 0 : i32
    %c0_i32_1 = arith.constant 0 : i32
    return %c0_i32, %c0_i32_0 : i32, i32
  }
  func.func @transform_2(%arg0: i32) -> (i32, i32) {
    %c0_i32 = arith.constant 0 : i32
    %c0_i32_0 = arith.constant 0 : i32
    return %arg0, %c0_i32 : i32, i32
  }
}

module attributes {stable_mosaic.version = 11 : i64} {
  func.func @_conv_im2col_kernel(%arg0: i32, %arg1: memref<16x144xbf16, #tpu.memory_space<vmem>>, %arg2: memref<144x32xbf16, #tpu.memory_space<vmem>>, %arg3: memref<16x32xf32, #tpu.memory_space<vmem>>) attributes {dimension_semantics = [#tpu.dimension_semantics<parallel>], iteration_bounds = array<i64: 2>, scalar_prefetch = 0 : i64, scratch_operands = 0 : i64, tpu.core_type = #tpu.core_type<tc>, window_params = [{transform_indices = @transform_0, window_bounds = array<i64: 16, 144>}, {pipeline_mode = #tpu.pipeline_mode<synchronous>, transform_indices = @transform_1, window_bounds = array<i64: 144, 32>}, {transform_indices = @transform_2, window_bounds = array<i64: 16, 32>}]} {
    %c0 = arith.constant 0 : index
    %c0_0 = arith.constant 0 : index
    %0 = vector.load %arg1[%c0, %c0_0] : memref<16x144xbf16, #tpu.memory_space<vmem>>, vector<16x144xbf16>
    %c0_1 = arith.constant 0 : index
    %c0_2 = arith.constant 0 : index
    %1 = vector.load %arg2[%c0_1, %c0_2] : memref<144x32xbf16, #tpu.memory_space<vmem>>, vector<144x32xbf16>
    %cst = arith.constant dense<0.000000e+00> : vector<16x32xf32>
    %2 = tpu.matmul %0, %1, %cst {dimension_numbers = #tpu.dot_dimension_numbers<[1], [0], [0], [1], [0, 0, 1, 1], [], []>} : vector<16x144xbf16>, vector<144x32xbf16>, vector<16x32xf32> -> vector<16x32xf32>
    %cst_3 = arith.constant 0.000000e+00 : f32
    %3 = vector.broadcast %cst_3 : f32 to vector<16x32xf32>
    %4 = arith.maximumf %2, %3 : vector<16x32xf32>
    %c0_4 = arith.constant 0 : index
    %c0_5 = arith.constant 0 : index
    %5 = vector.load %arg3[%c0_4, %c0_5] : memref<16x32xf32, #tpu.memory_space<vmem>>, vector<16x32xf32>
    tpu.vector_store %arg3[%c0_4, %c0_5], %4 {strides = array<i32>} : memref<16x32xf32, #tpu.memory_space<vmem>>, vector<16x32xf32>,
    return
  }
  func.func @transform_0(%arg0: i32) -> (i32, i32) {
    %c0_i32 = arith.constant 0 : i32
    %c0_i32_0 = arith.constant 0 : i32
    return %arg0, %c0_i32 : i32, i32
  }
  func.func @transform_1(%arg0: i32) -> (i32, i32) {
    %c0_i32 = arith.constant 0 : i32
    %c0_i32_0 = arith.constant 0 : i32
    %c0_i32_1 = arith.constant 0 : i32
    return %c0_i32, %c0_i32_0 : i32, i32
  }
  func.func @transform_2(%arg0: i32) -> (i32, i32) {
    %c0_i32 = arith.constant 0 : i32
    %c0_i32_0 = arith.constant 0 : i32
    return %arg0, %c0_i32 : i32, i32
  }
}

module attributes {stable_mosaic.version = 11 : i64} {
  func.func @_conv_im2col_kernel(%arg0: i32, %arg1: memref<16x144xbf16, #tpu.memory_space<vmem>>, %arg2: memref<144x32xbf16, #tpu.memory_space<vmem>>, %arg3: memref<16x32xf32, #tpu.memory_space<vmem>>) attributes {dimension_semantics = [#tpu.dimension_semantics<parallel>], iteration_bounds = array<i64: 2>, scalar_prefetch = 0 : i64, scratch_operands = 0 : i64, tpu.core_type = #tpu.core_type<tc>, window_params = [{transform_indices = @transform_0, window_bounds = array<i64: 16, 144>}, {pipeline_mode = #tpu.pipeline_mode<synchronous>, transform_indices = @transform_1, window_bounds = array<i64: 144, 32>}, {transform_indices = @transform_2, window_bounds = array<i64: 16, 32>}]} {
    %c0 = arith.constant 0 : index
    %c0_0 = arith.constant 0 : index
    %0 = vector.load %arg1[%c0, %c0_0] : memref<16x144xbf16, #tpu.memory_space<vmem>>, vector<16x144xbf16>
    %c0_1 = arith.constant 0 : index
    %c0_2 = arith.constant 0 : index
    %1 = vector.load %arg2[%c0_1, %c0_2] : memref<144x32xbf16, #tpu.memory_space<vmem>>, vector<144x32xbf16>
    %cst = arith.constant dense<0.000000e+00> : vector<16x32xf32>
    %2 = tpu.matmul %0, %1, %cst {dimension_numbers = #tpu.dot_dimension_numbers<[1], [0], [0], [1], [0, 0, 1, 1], [], []>} : vector<16x144xbf16>, vector<144x32xbf16>, vector<16x32xf32> -> vector<16x32xf32>
    %c0_3 = arith.constant 0 : index
    %c0_4 = arith.constant 0 : index
    %3 = vector.load %arg3[%c0_3, %c0_4] : memref<16x32xf32, #tpu.memory_space<vmem>>, vector<16x32xf32>
    tpu.vector_store %arg3[%c0_3, %c0_4], %2 {strides = array<i32>} : memref<16x32xf32, #tpu.memory_space<vmem>>, vector<16x32xf32>,
    return
  }
  func.func @transform_0(%arg0: i32) -> (i32, i32) {
    %c0_i32 = arith.constant 0 : i32
    %c0_i32_0 = arith.constant 0 : i32
    return %arg0, %c0_i32 : i32, i32
  }
  func.func @transform_1(%arg0: i32) -> (i32, i32) {
    %c0_i32 = arith.constant 0 : i32
    %c0_i32_0 = arith.constant 0 : i32
    %c0_i32_1 = arith.constant 0 : i32
    return %c0_i32, %c0_i32_0 : i32, i32
  }
  func.func @transform_2(%arg0: i32) -> (i32, i32) {
    %c0_i32 = arith.constant 0 : i32
    %c0_i32_0 = arith.constant 0 : i32
    return %arg0, %c0_i32 : i32, i32
  }
}

module attributes {stable_mosaic.version = 11 : i64} {
  func.func @_conv_im2col_kernel(%arg0: i32, %arg1: memref<16x288xbf16, #tpu.memory_space<vmem>>, %arg2: memref<288x32xbf16, #tpu.memory_space<vmem>>, %arg3: memref<16x32xf32, #tpu.memory_space<vmem>>, %arg4: memref<16x32xf32, #tpu.memory_space<vmem>>) attributes {dimension_semantics = [#tpu.dimension_semantics<parallel>], iteration_bounds = array<i64: 2>, scalar_prefetch = 0 : i64, scratch_operands = 0 : i64, tpu.core_type = #tpu.core_type<tc>, window_params = [{transform_indices = @transform_0, window_bounds = array<i64: 16, 288>}, {pipeline_mode = #tpu.pipeline_mode<synchronous>, transform_indices = @transform_1, window_bounds = array<i64: 288, 32>}, {transform_indices = @transform_2, window_bounds = array<i64: 16, 32>}, {transform_indices = @transform_3, window_bounds = array<i64: 16, 32>}]} {
    %c0 = arith.constant 0 : index
    %c0_0 = arith.constant 0 : index
    %0 = vector.load %arg1[%c0, %c0_0] : memref<16x288xbf16, #tpu.memory_space<vmem>>, vector<16x288xbf16>
    %c0_1 = arith.constant 0 : index
    %c0_2 = arith.constant 0 : index
    %1 = vector.load %arg2[%c0_1, %c0_2] : memref<288x32xbf16, #tpu.memory_space<vmem>>, vector<288x32xbf16>
    %cst = arith.constant dense<0.000000e+00> : vector<16x32xf32>
    %2 = tpu.matmul %0, %1, %cst {dimension_numbers = #tpu.dot_dimension_numbers<[1], [0], [0], [1], [0, 0, 1, 1], [], []>} : vector<16x288xbf16>, vector<288x32xbf16>, vector<16x32xf32> -> vector<16x32xf32>
    %c0_3 = arith.constant 0 : index
    %c0_4 = arith.constant 0 : index
    %3 = vector.load %arg3[%c0_3, %c0_4] : memref<16x32xf32, #tpu.memory_space<vmem>>, vector<16x32xf32>
    %4 = arith.addf %2, %3 : vector<16x32xf32>
    %cst_5 = arith.constant 0.000000e+00 : f32
    %5 = vector.broadcast %cst_5 : f32 to vector<16x32xf32>
    %6 = arith.maximumf %4, %5 : vector<16x32xf32>
    %c0_6 = arith.constant 0 : index
    %c0_7 = arith.constant 0 : index
    %7 = vector.load %arg4[%c0_6, %c0_7] : memref<16x32xf32, #tpu.memory_space<vmem>>, vector<16x32xf32>
    tpu.vector_store %arg4[%c0_6, %c0_7], %6 {strides = array<i32>} : memref<16x32xf32, #tpu.memory_space<vmem>>, vector<16x32xf32>,
    return
  }
  func.func @transform_0(%arg0: i32) -> (i32, i32) {
    %c0_i32 = arith.constant 0 : i32
    %c0_i32_0 = arith.constant 0 : i32
    return %arg0, %c0_i32 : i32, i32
  }
  func.func @transform_1(%arg0: i32) -> (i32, i32) {
    %c0_i32 = arith.constant 0 : i32
    %c0_i32_0 = arith.constant 0 : i32
    %c0_i32_1 = arith.constant 0 : i32
    return %c0_i32, %c0_i32_0 : i32, i32
  }
  func.func @transform_2(%arg0: i32) -> (i32, i32) {
    %c0_i32 = arith.constant 0 : i32
    %c0_i32_0 = arith.constant 0 : i32
    return %arg0, %c0_i32 : i32, i32
  }
  func.func @transform_3(%arg0: i32) -> (i32, i32) {
    %c0_i32 = arith.constant 0 : i32
    %c0_i32_0 = arith.constant 0 : i32
    return %arg0, %c0_i32 : i32, i32
  }
}

module attributes {stable_mosaic.version = 11 : i64} {
  func.func @_conv_im2col_kernel(%arg0: i32, %arg1: memref<16x288xbf16, #tpu.memory_space<vmem>>, %arg2: memref<288x32xbf16, #tpu.memory_space<vmem>>, %arg3: memref<16x32xf32, #tpu.memory_space<vmem>>) attributes {dimension_semantics = [#tpu.dimension_semantics<parallel>], iteration_bounds = array<i64: 2>, scalar_prefetch = 0 : i64, scratch_operands = 0 : i64, tpu.core_type = #tpu.core_type<tc>, window_params = [{transform_indices = @transform_0, window_bounds = array<i64: 16, 288>}, {pipeline_mode = #tpu.pipeline_mode<synchronous>, transform_indices = @transform_1, window_bounds = array<i64: 288, 32>}, {transform_indices = @transform_2, window_bounds = array<i64: 16, 32>}]} {
    %c0 = arith.constant 0 : index
    %c0_0 = arith.constant 0 : index
    %0 = vector.load %arg1[%c0, %c0_0] : memref<16x288xbf16, #tpu.memory_space<vmem>>, vector<16x288xbf16>
    %c0_1 = arith.constant 0 : index
    %c0_2 = arith.constant 0 : index
    %1 = vector.load %arg2[%c0_1, %c0_2] : memref<288x32xbf16, #tpu.memory_space<vmem>>, vector<288x32xbf16>
    %cst = arith.constant dense<0.000000e+00> : vector<16x32xf32>
    %2 = tpu.matmul %0, %1, %cst {dimension_numbers = #tpu.dot_dimension_numbers<[1], [0], [0], [1], [0, 0, 1, 1], [], []>} : vector<16x288xbf16>, vector<288x32xbf16>, vector<16x32xf32> -> vector<16x32xf32>
    %cst_3 = arith.constant 0.000000e+00 : f32
    %3 = vector.broadcast %cst_3 : f32 to vector<16x32xf32>
    %4 = arith.maximumf %2, %3 : vector<16x32xf32>
    %c0_4 = arith.constant 0 : index
    %c0_5 = arith.constant 0 : index
    %5 = vector.load %arg3[%c0_4, %c0_5] : memref<16x32xf32, #tpu.memory_space<vmem>>, vector<16x32xf32>
    tpu.vector_store %arg3[%c0_4, %c0_5], %4 {strides = array<i32>} : memref<16x32xf32, #tpu.memory_space<vmem>>, vector<16x32xf32>,
    return
  }
  func.func @transform_0(%arg0: i32) -> (i32, i32) {
    %c0_i32 = arith.constant 0 : i32
    %c0_i32_0 = arith.constant 0 : i32
    return %arg0, %c0_i32 : i32, i32
  }
  func.func @transform_1(%arg0: i32) -> (i32, i32) {
    %c0_i32 = arith.constant 0 : i32
    %c0_i32_0 = arith.constant 0 : i32
    %c0_i32_1 = arith.constant 0 : i32
    return %c0_i32, %c0_i32_0 : i32, i32
  }
  func.func @transform_2(%arg0: i32) -> (i32, i32) {
    %c0_i32 = arith.constant 0 : i32
    %c0_i32_0 = arith.constant 0 : i32
    return %arg0, %c0_i32 : i32, i32
  }
}

module attributes {stable_mosaic.version = 11 : i64} {
  func.func @_conv_im2col_kernel(%arg0: i32, %arg1: memref<16x288xbf16, #tpu.memory_space<vmem>>, %arg2: memref<288x32xbf16, #tpu.memory_space<vmem>>, %arg3: memref<16x32xf32, #tpu.memory_space<vmem>>) attributes {dimension_semantics = [#tpu.dimension_semantics<parallel>], iteration_bounds = array<i64: 2>, scalar_prefetch = 0 : i64, scratch_operands = 0 : i64, tpu.core_type = #tpu.core_type<tc>, window_params = [{transform_indices = @transform_0, window_bounds = array<i64: 16, 288>}, {pipeline_mode = #tpu.pipeline_mode<synchronous>, transform_indices = @transform_1, window_bounds = array<i64: 288, 32>}, {transform_indices = @transform_2, window_bounds = array<i64: 16, 32>}]} {
    %c0 = arith.constant 0 : index
    %c0_0 = arith.constant 0 : index
    %0 = vector.load %arg1[%c0, %c0_0] : memref<16x288xbf16, #tpu.memory_space<vmem>>, vector<16x288xbf16>
    %c0_1 = arith.constant 0 : index
    %c0_2 = arith.constant 0 : index
    %1 = vector.load %arg2[%c0_1, %c0_2] : memref<288x32xbf16, #tpu.memory_space<vmem>>, vector<288x32xbf16>
    %cst = arith.constant dense<0.000000e+00> : vector<16x32xf32>
    %2 = tpu.matmul %0, %1, %cst {dimension_numbers = #tpu.dot_dimension_numbers<[1], [0], [0], [1], [0, 0, 1, 1], [], []>} : vector<16x288xbf16>, vector<288x32xbf16>, vector<16x32xf32> -> vector<16x32xf32>
    %c0_3 = arith.constant 0 : index
    %c0_4 = arith.constant 0 : index
    %3 = vector.load %arg3[%c0_3, %c0_4] : memref<16x32xf32, #tpu.memory_space<vmem>>, vector<16x32xf32>
    tpu.vector_store %arg3[%c0_3, %c0_4], %2 {strides = array<i32>} : memref<16x32xf32, #tpu.memory_space<vmem>>, vector<16x32xf32>,
    return
  }
  func.func @transform_0(%arg0: i32) -> (i32, i32) {
    %c0_i32 = arith.constant 0 : i32
    %c0_i32_0 = arith.constant 0 : i32
    return %arg0, %c0_i32 : i32, i32
  }
  func.func @transform_1(%arg0: i32) -> (i32, i32) {
    %c0_i32 = arith.constant 0 : i32
    %c0_i32_0 = arith.constant 0 : i32
    %c0_i32_1 = arith.constant 0 : i32
    return %c0_i32, %c0_i32_0 : i32, i32
  }
  func.func @transform_2(%arg0: i32) -> (i32, i32) {
    %c0_i32 = arith.constant 0 : i32
    %c0_i32_0 = arith.constant 0 : i32
    return %arg0, %c0_i32 : i32, i32
  }
}

module attributes {stable_mosaic.version = 11 : i64} {
  func.func @_l1_normalize_kernel(%arg0: i32, %arg1: memref<16x32xf32, #tpu.memory_space<vmem>>, %arg2: memref<16x32xf32, #tpu.memory_space<vmem>>) attributes {dimension_semantics = [#tpu.dimension_semantics<parallel>], iteration_bounds = array<i64: 2>, scalar_prefetch = 0 : i64, scratch_operands = 0 : i64, tpu.core_type = #tpu.core_type<tc>, window_params = [{transform_indices = @transform_0, window_bounds = array<i64: 16, 32>}, {transform_indices = @transform_1, window_bounds = array<i64: 16, 32>}]} {
    %c0 = arith.constant 0 : index
    %c0_0 = arith.constant 0 : index
    %0 = vector.load %arg1[%c0, %c0_0] : memref<16x32xf32, #tpu.memory_space<vmem>>, vector<16x32xf32>
    %1 = math.absf %0 : vector<16x32xf32>
    %cst = arith.constant dense<0.000000e+00> : vector<16xf32>
    %2 = vector.multi_reduction <add>, %1, %cst [1] : vector<16x32xf32> to vector<16xf32>
    %3 = vector.shape_cast %2 : vector<16xf32> to vector<16x1xf32>
    %cst_1 = arith.constant 9.99999996E-13 : f32
    %4 = vector.broadcast %cst_1 : f32 to vector<16x1xf32>
    %5 = arith.maximumf %3, %4 : vector<16x1xf32>
    %6 = vector.broadcast %5 : vector<16x1xf32> to vector<16x32xf32>
    %7 = arith.divf %0, %6 : vector<16x32xf32>
    %c0_2 = arith.constant 0 : index
    %c0_3 = arith.constant 0 : index
    %8 = vector.load %arg2[%c0_2, %c0_3] : memref<16x32xf32, #tpu.memory_space<vmem>>, vector<16x32xf32>
    tpu.vector_store %arg2[%c0_2, %c0_3], %7 {strides = array<i32>} : memref<16x32xf32, #tpu.memory_space<vmem>>, vector<16x32xf32>,
    return
  }
  func.func @transform_0(%arg0: i32) -> (i32, i32) {
    %c0_i32 = arith.constant 0 : i32
    %c0_i32_0 = arith.constant 0 : i32
    return %arg0, %c0_i32 : i32, i32
  }
  func.func @transform_1(%arg0: i32) -> (i32, i32) {
    %c0_i32 = arith.constant 0 : i32
    %c0_i32_0 = arith.constant 0 : i32
    return %arg0, %c0_i32 : i32, i32
  }
}

</mosaic_0001>

<llo_original>
// kernel: uresencoder_forward.13
$region0: #{uresencoder_forward.13}
  #allocation0 [shape = 'u32[]', space=smem, size = 0x4, offset = 0x4, fixed_abs, tag = 'smem constant byte address 0x4 - core index']
  #allocation1 [shape = 'u32[144,128]{1,0:T(1,128)}', space=vmem, size = 0x12000, scoped, tag = 'internal scratch']
  %s0 = inlined_call_operand.vmem [shape: bf16[512,36], index: 0, kind: input, shape index: {}]
  %s1 = inlined_call_operand.vmem [shape: bf16[36,8], index: 1, kind: input, shape index: {}]
  %s2 = inlined_call_operand.vmem [shape: f32[512,8], index: 2, kind: output, shape index: {}]
  %s3 = sld [smem:[#allocation0]]
  $region41: #{uresencoder_forward.13} parent=0
    _
  %s5 = ssub.s32 1, %s3
  %s6 = scalar_select 0, %s5, %s3
  loop: start=0, step=1, limit=4
  $region2: #{uresencoder_forward.13} parent=0 // loop_pre_header
    _
  $region3: #{uresencoder_forward.13} parent=0 // loop_header
    %s8 = sphi 0, %s12
    %p9 = scmp.ge.s32.totalorder %s8, 4
    %s18 = sphi 0, %s20
    %s21 = sphi 0, %s18
    %s22 = sphi 0, %s21
    %s38 = sphi 0, %s22
    %s42 = sphi 0, %s42
    %s44 = sphi 0, %s42
    %s45 = sphi 0, %s44
    %s59 = sphi 0, %s45
    %s65 = sphi 0, %s67
    %s68 = sphi 0, %s65
    %s69 = sphi 0, %s68
    %s85 = sphi 0, %s69
  $region4: #{uresencoder_forward.13} parent=0 // loop_header_branch
    %11 = sbr.rel (%p9) target = $region8
  $region5: #{uresencoder_forward.13} parent=0 // loop_body
    %s13 = ssub.s32 %s8, 1
    %s14 = ssub.s32 %s8, 2
    %s15 = sadd.s32 %s8, 1
    %s16 = ssub.s32 %s8, %s15
    %p17 = scmp.eq.s32.totalorder %s16, 0
    %s19 = sadd.s32 %s18, 1
    %s20 = scalar_select %p17, %s18, %s19
    %p23 = pneg %p17
    %p24 = scmp.eq.s32.totalorder %s8, 1
    %p25 = por %p23, %p24
    %p26 = scmp.ne.s32.totalorder %s18, %s21
    %p27 = scmp.eq.s32.totalorder %s8, 0
    %p28 = por %p26, %p27
    %p29 = scmp.ne.s32.totalorder %s18, %s21
    %p30 = scmp.eq.s32.totalorder %s13, 1
    %p31 = por %p29, %p30
    %p32 = scmp.ne.s32.totalorder %s21, %s22
    %p33 = scmp.eq.s32.totalorder %s13, 0
    %p34 = por %p32, %p33
    %p35 = scmp.ne.s32.totalorder %s21, %s22
    %p36 = scmp.eq.s32.totalorder %s14, 1
    %p37 = por %p35, %p36
    %p39 = scmp.ne.s32.totalorder %s22, %s38
    %p40 = scmp.eq.s32.totalorder %s14, 0
    %p41 = por %p39, %p40
    %s43 = sadd.s32 %s42, 1
    %p46 = scmp.eq.s32.totalorder %s8, 1
    %p47 = scmp.ne.s32.totalorder %s42, %s44
    %p48 = scmp.eq.s32.totalorder %s8, 0
    %p49 = por %p47, %p48
    %p50 = scmp.ne.s32.totalorder %s42, %s44
    %p51 = scmp.eq.s32.totalorder %s13, 1
    %p52 = por %p50, %p51
    %p53 = scmp.ne.s32.totalorder %s44, %s45
    %p54 = scmp.eq.s32.totalorder %s13, 0
    %p55 = por %p53, %p54
    %p56 = scmp.ne.s32.totalorder %s44, %s45
    %p57 = scmp.eq.s32.totalorder %s14, 1
    %p58 = por %p56, %p57
    %p60 = scmp.ne.s32.totalorder %s45, %s59
    %p61 = scmp.eq.s32.totalorder %s14, 0
    %p62 = por %p60, %p61
    %s63 = ssub.s32 %s8, %s15
    %p64 = scmp.eq.s32.totalorder %s63, 0
    %s66 = sadd.s32 %s65, 1
    %s67 = scalar_select %p64, %s65, %s66
    %p70 = pneg %p64
    %p71 = scmp.eq.s32.totalorder %s8, 1
    %p72 = por %p70, %p71
    %p73 = scmp.ne.s32.totalorder %s65, %s68
    %p74 = scmp.eq.s32.totalorder %s8, 0
    %p75 = por %p73, %p74
    %p76 = scmp.ne.s32.totalorder %s65, %s68
    %p77 = scmp.eq.s32.totalorder %s13, 1
    %p78 = por %p76, %p77
    %p79 = scmp.ne.s32.totalorder %s68, %s69
    %p80 = scmp.eq.s32.totalorder %s13, 0
    %p81 = por %p79, %p80
    %p82 = scmp.ne.s32.totalorder %s68, %s69
    %p83 = scmp.eq.s32.totalorder %s14, 1
    %p84 = por %p82, %p83
    %p86 = scmp.ne.s32.totalorder %s69, %s85
    %p87 = scmp.eq.s32.totalorder %s14, 0
    %p88 = por %p86, %p87
    %p89 = scmp.le.s32.totalorder 1, %s8
    %p90 = scmp.lt.s32.totalorder %s8, 3
    %p91 = pnand %p89, %p90
    %p92 = pneg %p91
    // Predicated region
    $region9: #{uresencoder_forward.13} parent=5 // pred_check
      _
    $region10: #{uresencoder_forward.13} parent=5 // pred_check_branch
      %94 = sbr.rel (%p91) target = $region12
    $region11: #{uresencoder_forward.13} parent=5 // pred_region
      %s95 = ssub.s32 %s8, 1
      // Predicated region
      $region13: #{uresencoder_forward.13} parent=11 // pred_check
        %p96 = pneg %p55
      $region14: #{uresencoder_forward.13} parent=11 // pred_check_branch
        %98 = sbr.rel (%p96) target = $region16
      $region15: #{uresencoder_forward.13} parent=11 // pred_region
        _
      $region16: #{uresencoder_forward.13} parent=11 // pred_fallthru
        _
    $region12: #{uresencoder_forward.13} parent=5 // pred_fallthru
      _
    %p99 = scmp.lt.s32.totalorder %s8, 2
    // Predicated region
    $region17: #{uresencoder_forward.13} parent=5 // pred_check
      %p100 = pneg %p99
    $region18: #{uresencoder_forward.13} parent=5 // pred_check_branch
      %102 = sbr.rel (%p100) target = $region20
    $region19: #{uresencoder_forward.13} parent=5 // pred_region
      // Predicated region
      $region21: #{uresencoder_forward.13} parent=19 // pred_check
        %p103 = pneg %p28
      $region22: #{uresencoder_forward.13} parent=19 // pred_check_branch
        %105 = sbr.rel (%p103) target = $region24
      $region23: #{uresencoder_forward.13} parent=19 // pred_region
        %s106 = smul.u32 32, %s8
        %p107 = scmp.lt.s32.totalorder %s106, 63
        %s108 = scalar_select %p107, %s106, 63
        %s109 = smul.addr %s108, 4
        %s110 = scalar_lea.vmem %s0, %s109
        %s111 = smul.u32 32, %s8
      $region24: #{uresencoder_forward.13} parent=19 // pred_fallthru
        _
    $region20: #{uresencoder_forward.13} parent=5 // pred_fallthru
      _
    %p112 = scmp.le.s32.totalorder 1, %s8
    %p113 = scmp.lt.s32.totalorder %s8, 3
    %p114 = pnand %p112, %p113
    %p115 = pneg %p114
    // Predicated region
    $region25: #{uresencoder_forward.13} parent=5 // pred_check
      _
    $region26: #{uresencoder_forward.13} parent=5 // pred_check_branch
      %117 = sbr.rel (%p114) target = $region28
    $region27: #{uresencoder_forward.13} parent=5 // pred_region
      %s118 = ssub.s32 %s8, 1
      %s119 = smul.u32 32, %s13
      %p120 = scmp.lt.s32.totalorder %s119, 63
      %s121 = scalar_select %p120, %s119, 63
      %s122 = smul.addr %s121, 4
      %s123 = scalar_lea.vmem %s0, %s122
      %p124 = pneg %p34
      %p125 = pneg %p31
      %p126 = pneg %p55
      %p127 = pneg %p52
      %p128 = pneg %p81
      %p129 = pneg %p78
      %s130 = smul.u32 32, %s13
      %p131 = scmp.lt.s32.totalorder %s130, 63
      %s132 = scalar_select %p131, %s130, 63
      %s133 = smul.addr %s132, 8
      %s134 = scalar_lea.vmem %s2, %s133
      %s135 = smul.u32 32, %s13
      %p136 = scmp.lt.s32.totalorder %s135, 63
      %s137 = scalar_select %p136, %s135, 63
      %s138 = smul.addr %s137, 4
      %s139 = scalar_lea.vmem %s0, %s138
      %s140 = smul.u32 32, %s13
      %s141 = smul.u32 32, %s13
      %p142 = scmp.lt.s32.totalorder %s141, 63
      %s143 = scalar_select %p142, %s141, 63
      %s144 = smul.addr %s143, 8
      %s145 = scalar_lea.vmem %s2, %s144
      %s146 = smul.u32 32, %s13
      %v148 = vld [vmem:[%s139] sm:$0xf]
      %v149 = vld [vmem:[%s139 + $0x4] sm:$0xf]
      %v150 = vld [vmem:[%s139 + $0x8] sm:$0xf]
      %v151 = vld [vmem:[%s139 + $0xc] sm:$0xf]
      %v152 = vld [vmem:[%s139 + $0x10] sm:$0xf]
      %v153 = vld [vmem:[%s139 + $0x14] sm:$0xf]
      %v154 = vld [vmem:[%s139 + $0x18] sm:$0xf]
      %v155 = vld [vmem:[%s139 + $0x1c] sm:$0xf]
      %v156 = vld [vmem:[%s139 + $0x20] sm:$0xf]
      %v157 = vld [vmem:[%s139 + $0x24] sm:$0xf]
      %v158 = vld [vmem:[%s139 + $0x28] sm:$0xf]
      %v159 = vld [vmem:[%s139 + $0x2c] sm:$0xf]
      %v160 = vld [vmem:[%s139 + $0x30] sm:$0xf]
      %v161 = vld [vmem:[%s139 + $0x34] sm:$0xf]
      %v162 = vld [vmem:[%s139 + $0x38] sm:$0xf]
      %v163 = vld [vmem:[%s139 + $0x3c] sm:$0xf]
      %v164 = vld [vmem:[%s139 + $0x40] sm:$0xf]
      %v165 = vld [vmem:[%s139 + $0x44] sm:$0xf]
      %v166 = vld [vmem:[%s139 + $0x48] sm:$0xf]
      %v167 = vld [vmem:[%s139 + $0x4c] sm:$0xf]
      %v168 = vld [vmem:[%s139 + $0x50] sm:$0xf]
      %v169 = vld [vmem:[%s139 + $0x54] sm:$0xf]
      %v170 = vld [vmem:[%s139 + $0x58] sm:$0xf]
      %v171 = vld [vmem:[%s139 + $0x5c] sm:$0xf]
      %v172 = vld [vmem:[%s139 + $0x60] sm:$0xf]
      %v173 = vld [vmem:[%s139 + $0x64] sm:$0xf]
      %v174 = vld [vmem:[%s139 + $0x68] sm:$0xf]
      %v175 = vld [vmem:[%s139 + $0x6c] sm:$0xf]
      %v176 = vld [vmem:[%s139 + $0x70] sm:$0xf]
      %v177 = vld [vmem:[%s139 + $0x74] sm:$0xf]
      %v178 = vld [vmem:[%s139 + $0x78] sm:$0xf]
      %v179 = vld [vmem:[%s139 + $0x7c] sm:$0xf]
      %v180 = vld [vmem:[%s1] sm:$0xf]
      %v181 = vld [vmem:[%s1 + $0x4] sm:$0xf]
      %v182 = vld [vmem:[%s1 + $0x8] sm:$0xf]
      %v183 = vld [vmem:[%s1 + $0xc] sm:$0xf]
      %v184 = vld [vmem:[%s1 + $0x10] sm:$0x3]
      %v217 = vunpack.c.l.b16 %v148
      %v218 = vunpack.c.l.b16 %v149
      %v219 = vunpack.c.l.b16 %v150
      %v220 = vunpack.c.l.b16 %v151
      %v221 = vunpack.c.l.b16 %v152
      %v222 = vunpack.c.l.b16 %v153
      %v223 = vunpack.c.l.b16 %v154
      %v224 = vunpack.c.l.b16 %v155
      %v225 = vunpack.c.l.b16 %v156
      %v226 = vunpack.c.l.b16 %v157
      %v227 = vunpack.c.l.b16 %v158
      %v228 = vunpack.c.l.b16 %v159
      %v229 = vunpack.c.l.b16 %v160
      %v230 = vunpack.c.l.b16 %v161
      %v231 = vunpack.c.l.b16 %v162
      %v232 = vunpack.c.l.b16 %v163
      %v233 = vunpack.c.l.b16 %v164
      %v234 = vunpack.c.l.b16 %v165
      %v235 = vunpack.c.l.b16 %v166
      %v236 = vunpack.c.l.b16 %v167
      %v237 = vunpack.c.l.b16 %v168
      %v238 = vunpack.c.l.b16 %v169
      %v239 = vunpack.c.l.b16 %v170
      %v240 = vunpack.c.l.b16 %v171
      %v241 = vunpack.c.l.b16 %v172
      %v242 = vunpack.c.l.b16 %v173
      %v243 = vunpack.c.l.b16 %v174
      %v244 = vunpack.c.l.b16 %v175
      %v245 = vunpack.c.l.b16 %v176
      %v246 = vunpack.c.l.b16 %v177
      %v247 = vunpack.c.l.b16 %v178
      %v248 = vunpack.c.l.b16 %v179
      %v249 = vpack.c.b16 %v218, %v217
      %v250 = vpack.c.b16 %v220, %v219
      %v251 = vpack.c.b16 %v222, %v221
      %v252 = vpack.c.b16 %v224, %v223
      %v253 = vpack.c.b16 %v226, %v225
      %v254 = vpack.c.b16 %v228, %v227
      %v255 = vpack.c.b16 %v230, %v229
      %v256 = vpack.c.b16 %v232, %v231
      %v257 = vpack.c.b16 %v234, %v233
      %v258 = vpack.c.b16 %v236, %v235
      %v259 = vpack.c.b16 %v238, %v237
      %v260 = vpack.c.b16 %v240, %v239
      %v261 = vpack.c.b16 %v242, %v241
      %v262 = vpack.c.b16 %v244, %v243
      %v263 = vpack.c.b16 %v246, %v245
      %v264 = vpack.c.b16 %v248, %v247
      %v270 = vunpack.c.l.b16 %v180
      %v271 = vunpack.c.l.b16 %v181
      %v272 = vunpack.c.l.b16 %v182
      %v273 = vunpack.c.l.b16 %v183
      %v274 = vunpack.c.l.b16 %v184
      %v275 = vpack.c.b16 %v271, %v270
      %v276 = vpack.c.b16 %v273, %v272
      %v277 = vpack.c.b16 %v274, %v274
      %vm280 = vcmask 293888
      %v282 = vsel %vm280, %v249, 0
      %v285 = vsel %vm280, %v250, 0
      %v288 = vsel %vm280, %v251, 0
      %v291 = vsel %vm280, %v252, 0
      %v294 = vsel %vm280, %v253, 0
      %v297 = vsel %vm280, %v254, 0
      %v300 = vsel %vm280, %v255, 0
      %v303 = vsel %vm280, %v256, 0
      %v306 = vsel %vm280, %v257, 0
      %v309 = vsel %vm280, %v258, 0
      %v312 = vsel %vm280, %v259, 0
      %v315 = vsel %vm280, %v260, 0
      %v318 = vsel %vm280, %v261, 0
      %v321 = vsel %vm280, %v262, 0
      %v324 = vsel %vm280, %v263, 0
      %v327 = vsel %vm280, %v264, 0
      %vm329 = vcmask 1041408
      %v331 = vsel %vm329, %v277, 0
      %333 = vmatprep.subr.bf16.mxu0 0
      %334 = vmatpush1.bf16.msra.mxu0 0
      %335 = vmatprep.subr.bf16.mxu0 0
      %336 = vmatpush1.bf16.msra.mxu0 0
      %337 = vmatprep.subr.bf16.mxu0 0
      %338 = vmatpush1.bf16.msra.mxu0 0
      %339 = vmatprep.subr.bf16.mxu0 0
      %340 = vmatpush1.bf16.msra.mxu0 0
      %341 = vmatprep.subr.bf16.mxu0 0
      %342 = vmatpush1.bf16.msra.mxu0 0
      %343 = vmatprep.subr.bf16.mxu0 0
      %344 = vmatpush1.bf16.msra.mxu0 %v331
      %345 = vmatprep.subr.bf16.mxu0 0
      %346 = vmatpush1.bf16.msra.mxu0 %v276
      %347 = vmatprep.subr.bf16.mxu0 0
      %348 = vmatpush1.bf16.msra.mxu0 %v275
      %349 = vmatprep.subr.bf16.mxu0 0
      %350 = vmatpush2.bf16.msra.mxu0 0
      %351 = vmatprep.subr.bf16.mxu0 0
      %352 = vmatpush2.bf16.msra.mxu0 0
      %353 = vmatprep.subr.bf16.mxu0 0
      %354 = vmatpush2.bf16.msra.mxu0 0
      %355 = vmatprep.subr.bf16.mxu0 0
      %356 = vmatpush2.bf16.msra.mxu0 0
      %357 = vmatprep.subr.bf16.mxu0 0
      %358 = vmatpush2.bf16.msra.mxu0 0
      %359 = vmatprep.subr.bf16.mxu0 0
      %360 = vmatpush2.bf16.msra.mxu0 0
      %361 = vmatprep.subr.bf16.mxu0 0
      %362 = vmatpush2.bf16.msra.mxu0 0
      %363 = vmatprep.subr.bf16.mxu0 0
      %364 = vmatpush2.bf16.msra.mxu0 0
      %365 = vmatprep.mubr.bf16.mxu0 0
      %366 = vmatmul.mubr.bf16.gmra.mxu0 %v282
      %v367 = vpop.f32.mrf.mxu0
      %v368 = vadd.f32 0.0, %v367
      %v369 = vpop.f32.mrf.mxu0
      %v370 = vpop.f32.mrf.mxu0
      %v371 = vadd.f32 0.0, %v370
      %v372 = vpop.f32.mrf.mxu0
      %373 = vmatprep.mubr.bf16.mxu0 0
      %374 = vmatmul.mubr.bf16.gmra.mxu0 %v285
      %v375 = vpop.f32.mrf.mxu0
      %v376 = vadd.f32 0.0, %v375
      %v377 = vpop.f32.mrf.mxu0
      %v378 = vpop.f32.mrf.mxu0
      %v379 = vadd.f32 0.0, %v378
      %v380 = vpop.f32.mrf.mxu0
      %381 = vmatprep.mubr.bf16.mxu0 0
      %382 = vmatmul.mubr.bf16.gmra.mxu0 %v288
      %v383 = vpop.f32.mrf.mxu0
      %v384 = vadd.f32 0.0, %v383
      %v385 = vpop.f32.mrf.mxu0
      %v386 = vpop.f32.mrf.mxu0
      %v387 = vadd.f32 0.0, %v386
      %v388 = vpop.f32.mrf.mxu0
      %389 = vmatprep.mubr.bf16.mxu0 0
      %390 = vmatmul.mubr.bf16.gmra.mxu0 %v291
      %v391 = vpop.f32.mrf.mxu0
      %v392 = vadd.f32 0.0, %v391
      %v393 = vpop.f32.mrf.mxu0
      %v394 = vpop.f32.mrf.mxu0
      %v395 = vadd.f32 0.0, %v394
      %v396 = vpop.f32.mrf.mxu0
      %397 = vmatprep.mubr.bf16.mxu0 0
      %398 = vmatmul.mubr.bf16.gmra.mxu0 %v294
      %v399 = vpop.f32.mrf.mxu0
      %v400 = vadd.f32 0.0, %v399
      %v401 = vpop.f32.mrf.mxu0
      %v402 = vpop.f32.mrf.mxu0
      %v403 = vadd.f32 0.0, %v402
      %v404 = vpop.f32.mrf.mxu0
      %405 = vmatprep.mubr.bf16.mxu0 0
      %406 = vmatmul.mubr.bf16.gmra.mxu0 %v297
      %v407 = vpop.f32.mrf.mxu0
      %v408 = vadd.f32 0.0, %v407
      %v409 = vpop.f32.mrf.mxu0
      %v410 = vpop.f32.mrf.mxu0
      %v411 = vadd.f32 0.0, %v410
      %v412 = vpop.f32.mrf.mxu0
      %413 = vmatprep.mubr.bf16.mxu0 0
      %414 = vmatmul.mubr.bf16.gmra.mxu0 %v300
      %v415 = vpop.f32.mrf.mxu0
      %v416 = vadd.f32 0.0, %v415
      %v417 = vpop.f32.mrf.mxu0
      %v418 = vpop.f32.mrf.mxu0
      %v419 = vadd.f32 0.0, %v418
      %v420 = vpop.f32.mrf.mxu0
      %421 = vmatprep.mubr.bf16.mxu0 0
      %422 = vmatmul.mubr.bf16.gmra.mxu0 %v303
      %v423 = vpop.f32.mrf.mxu0
      %v424 = vadd.f32 0.0, %v423
      %v425 = vpop.f32.mrf.mxu0
      %v426 = vpop.f32.mrf.mxu0
      %v427 = vadd.f32 0.0, %v426
      %v428 = vpop.f32.mrf.mxu0
      %429 = vmatprep.mubr.bf16.mxu0 0
      %430 = vmatmul.mubr.bf16.gmra.mxu0 %v306
      %v431 = vpop.f32.mrf.mxu0
      %v432 = vadd.f32 0.0, %v431
      %v433 = vpop.f32.mrf.mxu0
      %v434 = vpop.f32.mrf.mxu0
      %v435 = vadd.f32 0.0, %v434
      %v436 = vpop.f32.mrf.mxu0
      %437 = vmatprep.mubr.bf16.mxu0 0
      %438 = vmatmul.mubr.bf16.gmra.mxu0 %v309
      %v439 = vpop.f32.mrf.mxu0
      %v440 = vadd.f32 0.0, %v439
      %v441 = vpop.f32.mrf.mxu0
      %v442 = vpop.f32.mrf.mxu0
      %v443 = vadd.f32 0.0, %v442
      %v444 = vpop.f32.mrf.mxu0
      %445 = vmatprep.mubr.bf16.mxu0 0
      %446 = vmatmul.mubr.bf16.gmra.mxu0 %v312
      %v447 = vpop.f32.mrf.mxu0
      %v448 = vadd.f32 0.0, %v447
      %v449 = vpop.f32.mrf.mxu0
      %v450 = vpop.f32.mrf.mxu0
      %v451 = vadd.f32 0.0, %v450
      %v452 = vpop.f32.mrf.mxu0
      %453 = vmatprep.mubr.bf16.mxu0 0
      %454 = vmatmul.mubr.bf16.gmra.mxu0 %v315
      %v455 = vpop.f32.mrf.mxu0
      %v456 = vadd.f32 0.0, %v455
      %v457 = vpop.f32.mrf.mxu0
      %v458 = vpop.f32.mrf.mxu0
      %v459 = vadd.f32 0.0, %v458
      %v460 = vpop.f32.mrf.mxu0
      %461 = vmatprep.mubr.bf16.mxu0 0
      %462 = vmatmul.mubr.bf16.gmra.mxu0 %v318
      %v463 = vpop.f32.mrf.mxu0
      %v464 = vadd.f32 0.0, %v463
      %v465 = vpop.f32.mrf.mxu0
      %v466 = vpop.f32.mrf.mxu0
      %v467 = vadd.f32 0.0, %v466
      %v468 = vpop.f32.mrf.mxu0
      %469 = vmatprep.mubr.bf16.mxu0 0
      %470 = vmatmul.mubr.bf16.gmra.mxu0 %v321
      %v471 = vpop.f32.mrf.mxu0
      %v472 = vadd.f32 0.0, %v471
      %v473 = vpop.f32.mrf.mxu0
      %v474 = vpop.f32.mrf.mxu0
      %v475 = vadd.f32 0.0, %v474
      %v476 = vpop.f32.mrf.mxu0
      %477 = vmatprep.mubr.bf16.mxu0 0
      %478 = vmatmul.mubr.bf16.gmra.mxu0 %v324
      %v479 = vpop.f32.mrf.mxu0
      %v480 = vadd.f32 0.0, %v479
      %v481 = vpop.f32.mrf.mxu0
      %v482 = vpop.f32.mrf.mxu0
      %v483 = vadd.f32 0.0, %v482
      %v484 = vpop.f32.mrf.mxu0
      %485 = vmatprep.mubr.bf16.mxu0 0
      %486 = vmatmul.mubr.bf16.gmra.mxu0 %v327
      %v487 = vpop.f32.mrf.mxu0
      %v488 = vadd.f32 0.0, %v487
      %v489 = vpop.f32.mrf.mxu0
      %v490 = vpop.f32.mrf.mxu0
      %v491 = vadd.f32 0.0, %v490
      %v492 = vpop.f32.mrf.mxu0
      %493 = vdwg.mxu0
      %v494 = vmax.f32 %v368, 0.0
      %v495 = vmax.f32 %v371, 0.0
      %v496 = vmax.f32 %v376, 0.0
      %v497 = vmax.f32 %v379, 0.0
      %v498 = vmax.f32 %v384, 0.0
      %v499 = vmax.f32 %v387, 0.0
      %v500 = vmax.f32 %v392, 0.0
      %v501 = vmax.f32 %v395, 0.0
      %v502 = vmax.f32 %v400, 0.0
      %v503 = vmax.f32 %v403, 0.0
      %v504 = vmax.f32 %v408, 0.0
      %v505 = vmax.f32 %v411, 0.0
      %v506 = vmax.f32 %v416, 0.0
      %v507 = vmax.f32 %v419, 0.0
      %v508 = vmax.f32 %v424, 0.0
      %v509 = vmax.f32 %v427, 0.0
      %v510 = vmax.f32 %v432, 0.0
      %v511 = vmax.f32 %v435, 0.0
      %v512 = vmax.f32 %v440, 0.0
      %v513 = vmax.f32 %v443, 0.0
      %v514 = vmax.f32 %v448, 0.0
      %v515 = vmax.f32 %v451, 0.0
      %v516 = vmax.f32 %v456, 0.0
      %v517 = vmax.f32 %v459, 0.0
      %v518 = vmax.f32 %v464, 0.0
      %v519 = vmax.f32 %v467, 0.0
      %v520 = vmax.f32 %v472, 0.0
      %v521 = vmax.f32 %v475, 0.0
      %v522 = vmax.f32 %v480, 0.0
      %v523 = vmax.f32 %v483, 0.0
      %v524 = vmax.f32 %v488, 0.0
      %v525 = vmax.f32 %v491, 0.0
      %vm526 = vcmask 64512
      %527 = vst.msk [vmem:[%s145] sm:$0xff] %vm526, %v494
      %528 = vst.msk [vmem:[%s145 + $0x8] sm:$0xff] %vm526, %v495
      %529 = vst.msk [vmem:[%s145 + $0x10] sm:$0xff] %vm526, %v496
      %530 = vst.msk [vmem:[%s145 + $0x18] sm:$0xff] %vm526, %v497
      %531 = vst.msk [vmem:[%s145 + $0x20] sm:$0xff] %vm526, %v498
      %532 = vst.msk [vmem:[%s145 + $0x28] sm:$0xff] %vm526, %v499
      %533 = vst.msk [vmem:[%s145 + $0x30] sm:$0xff] %vm526, %v500
      %534 = vst.msk [vmem:[%s145 + $0x38] sm:$0xff] %vm526, %v501
      %535 = vst.msk [vmem:[%s145 + $0x40] sm:$0xff] %vm526, %v502
      %536 = vst.msk [vmem:[%s145 + $0x48] sm:$0xff] %vm526, %v503
      %537 = vst.msk [vmem:[%s145 + $0x50] sm:$0xff] %vm526, %v504
      %538 = vst.msk [vmem:[%s145 + $0x58] sm:$0xff] %vm526, %v505
      %539 = vst.msk [vmem:[%s145 + $0x60] sm:$0xff] %vm526, %v506
      %540 = vst.msk [vmem:[%s145 + $0x68] sm:$0xff] %vm526, %v507
      %541 = vst.msk [vmem:[%s145 + $0x70] sm:$0xff] %vm526, %v508
      %542 = vst.msk [vmem:[%s145 + $0x78] sm:$0xff] %vm526, %v509
      %543 = vst.msk [vmem:[%s145 + $0x80] sm:$0xff] %vm526, %v510
      %544 = vst.msk [vmem:[%s145 + $0x88] sm:$0xff] %vm526, %v511
      %545 = vst.msk [vmem:[%s145 + $0x90] sm:$0xff] %vm526, %v512
      %546 = vst.msk [vmem:[%s145 + $0x98] sm:$0xff] %vm526, %v513
      %547 = vst.msk [vmem:[%s145 + $0xa0] sm:$0xff] %vm526, %v514
      %548 = vst.msk [vmem:[%s145 + $0xa8] sm:$0xff] %vm526, %v515
      %549 = vst.msk [vmem:[%s145 + $0xb0] sm:$0xff] %vm526, %v516
      %550 = vst.msk [vmem:[%s145 + $0xb8] sm:$0xff] %vm526, %v517
      %551 = vst.msk [vmem:[%s145 + $0xc0] sm:$0xff] %vm526, %v518
      %552 = vst.msk [vmem:[%s145 + $0xc8] sm:$0xff] %vm526, %v519
      %553 = vst.msk [vmem:[%s145 + $0xd0] sm:$0xff] %vm526, %v520
      %554 = vst.msk [vmem:[%s145 + $0xd8] sm:$0xff] %vm526, %v521
      %555 = vst.msk [vmem:[%s145 + $0xe0] sm:$0xff] %vm526, %v522
      %556 = vst.msk [vmem:[%s145 + $0xe8] sm:$0xff] %vm526, %v523
      %557 = vst.msk [vmem:[%s145 + $0xf0] sm:$0xff] %vm526, %v524
      %558 = vst.msk [vmem:[%s145 + $0xf8] sm:$0xff] %vm526, %v525
      %s559 = smul.u32 32, %s13
      %p560 = scmp.lt.s32.totalorder %s559, 63
      %s561 = scalar_select %p560, %s559, 63
      %s562 = smul.addr %s561, 8
      %s563 = scalar_lea.vmem %s2, %s562
      // Predicated region
      $region29: #{uresencoder_forward.13} parent=27 // pred_check
        %p564 = pneg %p78
      $region30: #{uresencoder_forward.13} parent=27 // pred_check_branch
        %566 = sbr.rel (%p564) target = $region32
      $region31: #{uresencoder_forward.13} parent=27 // pred_region
        %s567 = smul.u32 32, %s13
      $region32: #{uresencoder_forward.13} parent=27 // pred_fallthru
        _
    $region28: #{uresencoder_forward.13} parent=5 // pred_fallthru
      _
    %p568 = scmp.le.s32.totalorder 2, %s8
    // Predicated region
    $region33: #{uresencoder_forward.13} parent=5 // pred_check
      %p569 = pneg %p568
    $region34: #{uresencoder_forward.13} parent=5 // pred_check_branch
      %571 = sbr.rel (%p569) target = $region36
    $region35: #{uresencoder_forward.13} parent=5 // pred_region
      %s572 = ssub.s32 %s8, 2
      // Predicated region
      $region37: #{uresencoder_forward.13} parent=35 // pred_check
        %p573 = pneg %p84
      $region38: #{uresencoder_forward.13} parent=35 // pred_check_branch
        %575 = sbr.rel (%p573) target = $region40
      $region39: #{uresencoder_forward.13} parent=35 // pred_region
        %s576 = smul.u32 32, %s14
        %p577 = scmp.lt.s32.totalorder %s576, 63
        %s578 = scalar_select %p577, %s576, 63
        %s579 = smul.addr %s578, 8
        %s580 = scalar_lea.vmem %s2, %s579
      $region40: #{uresencoder_forward.13} parent=35 // pred_fallthru
        _
    $region36: #{uresencoder_forward.13} parent=5 // pred_fallthru
      _
  $region6: #{uresencoder_forward.13} parent=0 // loop_footer
    %s12 = sadd.s32 1, %s8
  $region7: #{uresencoder_forward.13} parent=0 // loop_footer_branch
    %7 = sbr.rel target = $region3
  $region8: #{uresencoder_forward.13} parent=0 // loop_exit
    _

// kernel: uresencoder_forward.14
$region0: #{uresencoder_forward.14}
  #allocation0 [shape = 'u32[]', space=smem, size = 0x4, offset = 0x4, fixed_abs, tag = 'smem constant byte address 0x4 - core index']
  #allocation1 [shape = 'u32[144,128]{1,0:T(1,128)}', space=vmem, size = 0x12000, scoped, tag = 'internal scratch']
  %s0 = inlined_call_operand.vmem [shape: bf16[128,72], index: 0, kind: input, shape index: {}]
  %s1 = inlined_call_operand.vmem [shape: bf16[72,16], index: 1, kind: input, shape index: {}]
  %s2 = inlined_call_operand.vmem [shape: f32[128,16], index: 2, kind: output, shape index: {}]
  %s3 = sld [smem:[#allocation0]]
  $region41: #{uresencoder_forward.14} parent=0
    _
  %s5 = ssub.s32 1, %s3
  %s6 = scalar_select 0, %s5, %s3
  loop: start=0, step=1, limit=4
  $region2: #{uresencoder_forward.14} parent=0 // loop_pre_header
    _
  $region3: #{uresencoder_forward.14} parent=0 // loop_header
    %s8 = sphi 0, %s12
    %p9 = scmp.ge.s32.totalorder %s8, 4
    %s18 = sphi 0, %s20
    %s21 = sphi 0, %s18
    %s22 = sphi 0, %s21
    %s38 = sphi 0, %s22
    %s42 = sphi 0, %s42
    %s44 = sphi 0, %s42
    %s45 = sphi 0, %s44
    %s59 = sphi 0, %s45
    %s65 = sphi 0, %s67
    %s68 = sphi 0, %s65
    %s69 = sphi 0, %s68
    %s85 = sphi 0, %s69
  $region4: #{uresencoder_forward.14} parent=0 // loop_header_branch
    %11 = sbr.rel (%p9) target = $region8
  $region5: #{uresencoder_forward.14} parent=0 // loop_body
    %s13 = ssub.s32 %s8, 1
    %s14 = ssub.s32 %s8, 2
    %s15 = sadd.s32 %s8, 1
    %s16 = ssub.s32 %s8, %s15
    %p17 = scmp.eq.s32.totalorder %s16, 0
    %s19 = sadd.s32 %s18, 1
    %s20 = scalar_select %p17, %s18, %s19
    %p23 = pneg %p17
    %p24 = scmp.eq.s32.totalorder %s8, 1
    %p25 = por %p23, %p24
    %p26 = scmp.ne.s32.totalorder %s18, %s21
    %p27 = scmp.eq.s32.totalorder %s8, 0
    %p28 = por %p26, %p27
    %p29 = scmp.ne.s32.totalorder %s18, %s21
    %p30 = scmp.eq.s32.totalorder %s13, 1
    %p31 = por %p29, %p30
    %p32 = scmp.ne.s32.totalorder %s21, %s22
    %p33 = scmp.eq.s32.totalorder %s13, 0
    %p34 = por %p32, %p33
    %p35 = scmp.ne.s32.totalorder %s21, %s22
    %p36 = scmp.eq.s32.totalorder %s14, 1
    %p37 = por %p35, %p36
    %p39 = scmp.ne.s32.totalorder %s22, %s38
    %p40 = scmp.eq.s32.totalorder %s14, 0
    %p41 = por %p39, %p40
    %s43 = sadd.s32 %s42, 1
    %p46 = scmp.eq.s32.totalorder %s8, 1
    %p47 = scmp.ne.s32.totalorder %s42, %s44
    %p48 = scmp.eq.s32.totalorder %s8, 0
    %p49 = por %p47, %p48
    %p50 = scmp.ne.s32.totalorder %s42, %s44
    %p51 = scmp.eq.s32.totalorder %s13, 1
    %p52 = por %p50, %p51
    %p53 = scmp.ne.s32.totalorder %s44, %s45
    %p54 = scmp.eq.s32.totalorder %s13, 0
    %p55 = por %p53, %p54
    %p56 = scmp.ne.s32.totalorder %s44, %s45
    %p57 = scmp.eq.s32.totalorder %s14, 1
    %p58 = por %p56, %p57
    %p60 = scmp.ne.s32.totalorder %s45, %s59
    %p61 = scmp.eq.s32.totalorder %s14, 0
    %p62 = por %p60, %p61
    %s63 = ssub.s32 %s8, %s15
    %p64 = scmp.eq.s32.totalorder %s63, 0
    %s66 = sadd.s32 %s65, 1
    %s67 = scalar_select %p64, %s65, %s66
    %p70 = pneg %p64
    %p71 = scmp.eq.s32.totalorder %s8, 1
    %p72 = por %p70, %p71
    %p73 = scmp.ne.s32.totalorder %s65, %s68
    %p74 = scmp.eq.s32.totalorder %s8, 0
    %p75 = por %p73, %p74
    %p76 = scmp.ne.s32.totalorder %s65, %s68
    %p77 = scmp.eq.s32.totalorder %s13, 1
    %p78 = por %p76, %p77
    %p79 = scmp.ne.s32.totalorder %s68, %s69
    %p80 = scmp.eq.s32.totalorder %s13, 0
    %p81 = por %p79, %p80
    %p82 = scmp.ne.s32.totalorder %s68, %s69
    %p83 = scmp.eq.s32.totalorder %s14, 1
    %p84 = por %p82, %p83
    %p86 = scmp.ne.s32.totalorder %s69, %s85
    %p87 = scmp.eq.s32.totalorder %s14, 0
    %p88 = por %p86, %p87
    %p89 = scmp.le.s32.totalorder 1, %s8
    %p90 = scmp.lt.s32.totalorder %s8, 3
    %p91 = pnand %p89, %p90
    %p92 = pneg %p91
    // Predicated region
    $region9: #{uresencoder_forward.14} parent=5 // pred_check
      _
    $region10: #{uresencoder_forward.14} parent=5 // pred_check_branch
      %94 = sbr.rel (%p91) target = $region12
    $region11: #{uresencoder_forward.14} parent=5 // pred_region
      %s95 = ssub.s32 %s8, 1
      // Predicated region
      $region13: #{uresencoder_forward.14} parent=11 // pred_check
        %p96 = pneg %p55
      $region14: #{uresencoder_forward.14} parent=11 // pred_check_branch
        %98 = sbr.rel (%p96) target = $region16
      $region15: #{uresencoder_forward.14} parent=11 // pred_region
        _
      $region16: #{uresencoder_forward.14} parent=11 // pred_fallthru
        _
    $region12: #{uresencoder_forward.14} parent=5 // pred_fallthru
      _
    %p99 = scmp.lt.s32.totalorder %s8, 2
    // Predicated region
    $region17: #{uresencoder_forward.14} parent=5 // pred_check
      %p100 = pneg %p99
    $region18: #{uresencoder_forward.14} parent=5 // pred_check_branch
      %102 = sbr.rel (%p100) target = $region20
    $region19: #{uresencoder_forward.14} parent=5 // pred_region
      // Predicated region
      $region21: #{uresencoder_forward.14} parent=19 // pred_check
        %p103 = pneg %p28
      $region22: #{uresencoder_forward.14} parent=19 // pred_check_branch
        %105 = sbr.rel (%p103) target = $region24
      $region23: #{uresencoder_forward.14} parent=19 // pred_region
        %s106 = smul.u32 8, %s8
        %p107 = scmp.lt.s32.totalorder %s106, 15
        %s108 = scalar_select %p107, %s106, 15
        %s109 = smul.addr %s108, 4
        %s110 = scalar_lea.vmem %s0, %s109
        %s111 = smul.u32 8, %s8
      $region24: #{uresencoder_forward.14} parent=19 // pred_fallthru
        _
    $region20: #{uresencoder_forward.14} parent=5 // pred_fallthru
      _
    %p112 = scmp.le.s32.totalorder 1, %s8
    %p113 = scmp.lt.s32.totalorder %s8, 3
    %p114 = pnand %p112, %p113
    %p115 = pneg %p114
    // Predicated region
    $region25: #{uresencoder_forward.14} parent=5 // pred_check
      _
    $region26: #{uresencoder_forward.14} parent=5 // pred_check_branch
      %117 = sbr.rel (%p114) target = $region28
    $region27: #{uresencoder_forward.14} parent=5 // pred_region
      %s118 = ssub.s32 %s8, 1
      %s119 = smul.u32 8, %s13
      %p120 = scmp.lt.s32.totalorder %s119, 15
      %s121 = scalar_select %p120, %s119, 15
      %s122 = smul.addr %s121, 4
      %s123 = scalar_lea.vmem %s0, %s122
      %p124 = pneg %p34
      %p125 = pneg %p31
      %p126 = pneg %p55
      %p127 = pneg %p52
      %p128 = pneg %p81
      %p129 = pneg %p78
      %s130 = smul.u32 8, %s13
      %p131 = scmp.lt.s32.totalorder %s130, 15
      %s132 = scalar_select %p131, %s130, 15
      %s133 = smul.addr %s132, 8
      %s134 = scalar_lea.vmem %s2, %s133
      %s135 = smul.u32 8, %s13
      %p136 = scmp.lt.s32.totalorder %s135, 15
      %s137 = scalar_select %p136, %s135, 15
      %s138 = smul.addr %s137, 4
      %s139 = scalar_lea.vmem %s0, %s138
      %s140 = smul.u32 8, %s13
      %s141 = smul.u32 8, %s13
      %p142 = scmp.lt.s32.totalorder %s141, 15
      %s143 = scalar_select %p142, %s141, 15
      %s144 = smul.addr %s143, 8
      %s145 = scalar_lea.vmem %s2, %s144
      %s146 = smul.u32 8, %s13
      %v148 = vld [vmem:[%s139] sm:$0xf]
      %v149 = vld [vmem:[%s139 + $0x4] sm:$0xf]
      %v150 = vld [vmem:[%s139 + $0x8] sm:$0xf]
      %v151 = vld [vmem:[%s139 + $0xc] sm:$0xf]
      %v152 = vld [vmem:[%s139 + $0x10] sm:$0xf]
      %v153 = vld [vmem:[%s139 + $0x14] sm:$0xf]
      %v154 = vld [vmem:[%s139 + $0x18] sm:$0xf]
      %v155 = vld [vmem:[%s139 + $0x1c] sm:$0xf]
      %v156 = vld [vmem:[%s1] sm:$0xf]
      %v157 = vld [vmem:[%s1 + $0x4] sm:$0xf]
      %v158 = vld [vmem:[%s1 + $0x8] sm:$0xf]
      %v159 = vld [vmem:[%s1 + $0xc] sm:$0xf]
      %v160 = vld [vmem:[%s1 + $0x10] sm:$0xf]
      %v161 = vld [vmem:[%s1 + $0x14] sm:$0xf]
      %v162 = vld [vmem:[%s1 + $0x18] sm:$0xf]
      %v163 = vld [vmem:[%s1 + $0x1c] sm:$0xf]
      %v164 = vld [vmem:[%s1 + $0x20] sm:$0xf]
      %v173 = vunpack.c.l.b16 %v148
      %v174 = vunpack.c.l.b16 %v149
      %v175 = vunpack.c.l.b16 %v150
      %v176 = vunpack.c.l.b16 %v151
      %v177 = vunpack.c.l.b16 %v152
      %v178 = vunpack.c.l.b16 %v153
      %v179 = vunpack.c.l.b16 %v154
      %v180 = vunpack.c.l.b16 %v155
      %v181 = vpack.c.b16 %v174, %v173
      %v182 = vpack.c.b16 %v176, %v175
      %v183 = vpack.c.b16 %v178, %v177
      %v184 = vpack.c.b16 %v180, %v179
      %v194 = vunpack.c.l.b16 %v156
      %v195 = vunpack.c.l.b16 %v157
      %v196 = vunpack.c.l.b16 %v158
      %v197 = vunpack.c.l.b16 %v159
      %v198 = vunpack.c.l.b16 %v160
      %v199 = vunpack.c.l.b16 %v161
      %v200 = vunpack.c.l.b16 %v162
      %v201 = vunpack.c.l.b16 %v163
      %v202 = vunpack.c.l.b16 %v164
      %v203 = vpack.c.b16 %v195, %v194
      %v204 = vpack.c.b16 %v197, %v196
      %v205 = vpack.c.b16 %v199, %v198
      %v206 = vpack.c.b16 %v201, %v200
      %v207 = vpack.c.b16 %v202, %v202
      %vm212 = vcmask 588800
      %v214 = vsel %vm212, %v181, 0
      %v217 = vsel %vm212, %v182, 0
      %v220 = vsel %vm212, %v183, 0
      %v223 = vsel %vm212, %v184, 0
      %vm225 = vcmask 1043456
      %v227 = vsel %vm225, %v207, 0
      %229 = vmatprep.subr.bf16.mxu0 0
      %230 = vmatpush1.bf16.msra.mxu0 0
      %231 = vmatprep.subr.bf16.mxu0 0
      %232 = vmatpush1.bf16.msra.mxu0 0
      %233 = vmatprep.subr.bf16.mxu0 0
      %234 = vmatpush1.bf16.msra.mxu0 0
      %235 = vmatprep.subr.bf16.mxu0 0
      %236 = vmatpush1.bf16.msra.mxu0 %v227
      %237 = vmatprep.subr.bf16.mxu0 0
      %238 = vmatpush1.bf16.msra.mxu0 %v206
      %239 = vmatprep.subr.bf16.mxu0 0
      %240 = vmatpush1.bf16.msra.mxu0 %v205
      %241 = vmatprep.subr.bf16.mxu0 0
      %242 = vmatpush1.bf16.msra.mxu0 %v204
      %243 = vmatprep.subr.bf16.mxu0 0
      %244 = vmatpush1.bf16.msra.mxu0 %v203
      %245 = vmatprep.subr.bf16.mxu0 0
      %246 = vmatpush2.bf16.msra.mxu0 0
      %247 = vmatprep.subr.bf16.mxu0 0
      %248 = vmatpush2.bf16.msra.mxu0 0
      %249 = vmatprep.subr.bf16.mxu0 0
      %250 = vmatpush2.bf16.msra.mxu0 0
      %251 = vmatprep.subr.bf16.mxu0 0
      %252 = vmatpush2.bf16.msra.mxu0 0
      %253 = vmatprep.subr.bf16.mxu0 0
      %254 = vmatpush2.bf16.msra.mxu0 0
      %255 = vmatprep.subr.bf16.mxu0 0
      %256 = vmatpush2.bf16.msra.mxu0 0
      %257 = vmatprep.subr.bf16.mxu0 0
      %258 = vmatpush2.bf16.msra.mxu0 0
      %259 = vmatprep.subr.bf16.mxu0 0
      %260 = vmatpush2.bf16.msra.mxu0 0
      %261 = vmatprep.mubr.bf16.mxu0 0
      %262 = vmatmul.mubr.bf16.gmra.mxu0 %v214
      %v263 = vpop.f32.mrf.mxu0
      %v264 = vadd.f32 0.0, %v263
      %v265 = vpop.f32.mrf.mxu0
      %v266 = vpop.f32.mrf.mxu0
      %v267 = vadd.f32 0.0, %v266
      %v268 = vpop.f32.mrf.mxu0
      %269 = vmatprep.mubr.bf16.mxu0 0
      %270 = vmatmul.mubr.bf16.gmra.mxu0 %v217
      %v271 = vpop.f32.mrf.mxu0
      %v272 = vadd.f32 0.0, %v271
      %v273 = vpop.f32.mrf.mxu0
      %v274 = vpop.f32.mrf.mxu0
      %v275 = vadd.f32 0.0, %v274
      %v276 = vpop.f32.mrf.mxu0
      %277 = vmatprep.mubr.bf16.mxu0 0
      %278 = vmatmul.mubr.bf16.gmra.mxu0 %v220
      %v279 = vpop.f32.mrf.mxu0
      %v280 = vadd.f32 0.0, %v279
      %v281 = vpop.f32.mrf.mxu0
      %v282 = vpop.f32.mrf.mxu0
      %v283 = vadd.f32 0.0, %v282
      %v284 = vpop.f32.mrf.mxu0
      %285 = vmatprep.mubr.bf16.mxu0 0
      %286 = vmatmul.mubr.bf16.gmra.mxu0 %v223
      %v287 = vpop.f32.mrf.mxu0
      %v288 = vadd.f32 0.0, %v287
      %v289 = vpop.f32.mrf.mxu0
      %v290 = vpop.f32.mrf.mxu0
      %v291 = vadd.f32 0.0, %v290
      %v292 = vpop.f32.mrf.mxu0
      %293 = vdwg.mxu0
      %v294 = vmax.f32 %v264, 0.0
      %v295 = vmax.f32 %v267, 0.0
      %v296 = vmax.f32 %v272, 0.0
      %v297 = vmax.f32 %v275, 0.0
      %v298 = vmax.f32 %v280, 0.0
      %v299 = vmax.f32 %v283, 0.0
      %v300 = vmax.f32 %v288, 0.0
      %v301 = vmax.f32 %v291, 0.0
      %vm302 = vcmask 130048
      %303 = vst.msk [vmem:[%s145] sm:$0xff] %vm302, %v294
      %304 = vst.msk [vmem:[%s145 + $0x8] sm:$0xff] %vm302, %v295
      %305 = vst.msk [vmem:[%s145 + $0x10] sm:$0xff] %vm302, %v296
      %306 = vst.msk [vmem:[%s145 + $0x18] sm:$0xff] %vm302, %v297
      %307 = vst.msk [vmem:[%s145 + $0x20] sm:$0xff] %vm302, %v298
      %308 = vst.msk [vmem:[%s145 + $0x28] sm:$0xff] %vm302, %v299
      %309 = vst.msk [vmem:[%s145 + $0x30] sm:$0xff] %vm302, %v300
      %310 = vst.msk [vmem:[%s145 + $0x38] sm:$0xff] %vm302, %v301
      %s311 = smul.u32 8, %s13
      %p312 = scmp.lt.s32.totalorder %s311, 15
      %s313 = scalar_select %p312, %s311, 15
      %s314 = smul.addr %s313, 8
      %s315 = scalar_lea.vmem %s2, %s314
      // Predicated region
      $region29: #{uresencoder_forward.14} parent=27 // pred_check
        %p316 = pneg %p78
      $region30: #{uresencoder_forward.14} parent=27 // pred_check_branch
        %318 = sbr.rel (%p316) target = $region32
      $region31: #{uresencoder_forward.14} parent=27 // pred_region
        %s319 = smul.u32 8, %s13
      $region32: #{uresencoder_forward.14} parent=27 // pred_fallthru
        _
    $region28: #{uresencoder_forward.14} parent=5 // pred_fallthru
      _
    %p320 = scmp.le.s32.totalorder 2, %s8
    // Predicated region
    $region33: #{uresencoder_forward.14} parent=5 // pred_check
      %p321 = pneg %p320
    $region34: #{uresencoder_forward.14} parent=5 // pred_check_branch
      %323 = sbr.rel (%p321) target = $region36
    $region35: #{uresencoder_forward.14} parent=5 // pred_region
      %s324 = ssub.s32 %s8, 2
      // Predicated region
      $region37: #{uresencoder_forward.14} parent=35 // pred_check
        %p325 = pneg %p84
      $region38: #{uresencoder_forward.14} parent=35 // pred_check_branch
        %327 = sbr.rel (%p325) target = $region40
      $region39: #{uresencoder_forward.14} parent=35 // pred_region
        %s328 = smul.u32 8, %s14
        %p329 = scmp.lt.s32.totalorder %s328, 15
        %s330 = scalar_select %p329, %s328, 15
        %s331 = smul.addr %s330, 8
        %s332 = scalar_lea.vmem %s2, %s331
      $region40: #{uresencoder_forward.14} parent=35 // pred_fallthru
        _
    $region36: #{uresencoder_forward.14} parent=5 // pred_fallthru
      _
  $region6: #{uresencoder_forward.14} parent=0 // loop_footer
    %s12 = sadd.s32 1, %s8
  $region7: #{uresencoder_forward.14} parent=0 // loop_footer_branch
    %7 = sbr.rel target = $region3
  $region8: #{uresencoder_forward.14} parent=0 // loop_exit
    _

// kernel: uresencoder_forward.15
$region0: #{uresencoder_forward.15}
  #allocation0 [shape = 'u32[]', space=smem, size = 0x4, offset = 0x4, fixed_abs, tag = 'smem constant byte address 0x4 - core index']
  #allocation1 [shape = 'u32[144,128]{1,0:T(1,128)}', space=vmem, size = 0x12000, scoped, tag = 'internal scratch']
  %s0 = inlined_call_operand.vmem [shape: bf16[128,72], index: 0, kind: input, shape index: {}]
  %s1 = inlined_call_operand.vmem [shape: bf16[72,16], index: 1, kind: input, shape index: {}]
  %s2 = inlined_call_operand.vmem [shape: f32[128,16], index: 2, kind: output, shape index: {}]
  %s3 = sld [smem:[#allocation0]]
  $region41: #{uresencoder_forward.15} parent=0
    _
  %s5 = ssub.s32 1, %s3
  %s6 = scalar_select 0, %s5, %s3
  loop: start=0, step=1, limit=4
  $region2: #{uresencoder_forward.15} parent=0 // loop_pre_header
    _
  $region3: #{uresencoder_forward.15} parent=0 // loop_header
    %s8 = sphi 0, %s12
    %p9 = scmp.ge.s32.totalorder %s8, 4
    %s18 = sphi 0, %s20
    %s21 = sphi 0, %s18
    %s22 = sphi 0, %s21
    %s38 = sphi 0, %s22
    %s42 = sphi 0, %s42
    %s44 = sphi 0, %s42
    %s45 = sphi 0, %s44
    %s59 = sphi 0, %s45
    %s65 = sphi 0, %s67
    %s68 = sphi 0, %s65
    %s69 = sphi 0, %s68
    %s85 = sphi 0, %s69
  $region4: #{uresencoder_forward.15} parent=0 // loop_header_branch
    %11 = sbr.rel (%p9) target = $region8
  $region5: #{uresencoder_forward.15} parent=0 // loop_body
    %s13 = ssub.s32 %s8, 1
    %s14 = ssub.s32 %s8, 2
    %s15 = sadd.s32 %s8, 1
    %s16 = ssub.s32 %s8, %s15
    %p17 = scmp.eq.s32.totalorder %s16, 0
    %s19 = sadd.s32 %s18, 1
    %s20 = scalar_select %p17, %s18, %s19
    %p23 = pneg %p17
    %p24 = scmp.eq.s32.totalorder %s8, 1
    %p25 = por %p23, %p24
    %p26 = scmp.ne.s32.totalorder %s18, %s21
    %p27 = scmp.eq.s32.totalorder %s8, 0
    %p28 = por %p26, %p27
    %p29 = scmp.ne.s32.totalorder %s18, %s21
    %p30 = scmp.eq.s32.totalorder %s13, 1
    %p31 = por %p29, %p30
    %p32 = scmp.ne.s32.totalorder %s21, %s22
    %p33 = scmp.eq.s32.totalorder %s13, 0
    %p34 = por %p32, %p33
    %p35 = scmp.ne.s32.totalorder %s21, %s22
    %p36 = scmp.eq.s32.totalorder %s14, 1
    %p37 = por %p35, %p36
    %p39 = scmp.ne.s32.totalorder %s22, %s38
    %p40 = scmp.eq.s32.totalorder %s14, 0
    %p41 = por %p39, %p40
    %s43 = sadd.s32 %s42, 1
    %p46 = scmp.eq.s32.totalorder %s8, 1
    %p47 = scmp.ne.s32.totalorder %s42, %s44
    %p48 = scmp.eq.s32.totalorder %s8, 0
    %p49 = por %p47, %p48
    %p50 = scmp.ne.s32.totalorder %s42, %s44
    %p51 = scmp.eq.s32.totalorder %s13, 1
    %p52 = por %p50, %p51
    %p53 = scmp.ne.s32.totalorder %s44, %s45
    %p54 = scmp.eq.s32.totalorder %s13, 0
    %p55 = por %p53, %p54
    %p56 = scmp.ne.s32.totalorder %s44, %s45
    %p57 = scmp.eq.s32.totalorder %s14, 1
    %p58 = por %p56, %p57
    %p60 = scmp.ne.s32.totalorder %s45, %s59
    %p61 = scmp.eq.s32.totalorder %s14, 0
    %p62 = por %p60, %p61
    %s63 = ssub.s32 %s8, %s15
    %p64 = scmp.eq.s32.totalorder %s63, 0
    %s66 = sadd.s32 %s65, 1
    %s67 = scalar_select %p64, %s65, %s66
    %p70 = pneg %p64
    %p71 = scmp.eq.s32.totalorder %s8, 1
    %p72 = por %p70, %p71
    %p73 = scmp.ne.s32.totalorder %s65, %s68
    %p74 = scmp.eq.s32.totalorder %s8, 0
    %p75 = por %p73, %p74
    %p76 = scmp.ne.s32.totalorder %s65, %s68
    %p77 = scmp.eq.s32.totalorder %s13, 1
    %p78 = por %p76, %p77
    %p79 = scmp.ne.s32.totalorder %s68, %s69
    %p80 = scmp.eq.s32.totalorder %s13, 0
    %p81 = por %p79, %p80
    %p82 = scmp.ne.s32.totalorder %s68, %s69
    %p83 = scmp.eq.s32.totalorder %s14, 1
    %p84 = por %p82, %p83
    %p86 = scmp.ne.s32.totalorder %s69, %s85
    %p87 = scmp.eq.s32.totalorder %s14, 0
    %p88 = por %p86, %p87
    %p89 = scmp.le.s32.totalorder 1, %s8
    %p90 = scmp.lt.s32.totalorder %s8, 3
    %p91 = pnand %p89, %p90
    %p92 = pneg %p91
    // Predicated region
    $region9: #{uresencoder_forward.15} parent=5 // pred_check
      _
    $region10: #{uresencoder_forward.15} parent=5 // pred_check_branch
      %94 = sbr.rel (%p91) target = $region12
    $region11: #{uresencoder_forward.15} parent=5 // pred_region
      %s95 = ssub.s32 %s8, 1
      // Predicated region
      $region13: #{uresencoder_forward.15} parent=11 // pred_check
        %p96 = pneg %p55
      $region14: #{uresencoder_forward.15} parent=11 // pred_check_branch
        %98 = sbr.rel (%p96) target = $region16
      $region15: #{uresencoder_forward.15} parent=11 // pred_region
        _
      $region16: #{uresencoder_forward.15} parent=11 // pred_fallthru
        _
    $region12: #{uresencoder_forward.15} parent=5 // pred_fallthru
      _
    %p99 = scmp.lt.s32.totalorder %s8, 2
    // Predicated region
    $region17: #{uresencoder_forward.15} parent=5 // pred_check
      %p100 = pneg %p99
    $region18: #{uresencoder_forward.15} parent=5 // pred_check_branch
      %102 = sbr.rel (%p100) target = $region20
    $region19: #{uresencoder_forward.15} parent=5 // pred_region
      // Predicated region
      $region21: #{uresencoder_forward.15} parent=19 // pred_check
        %p103 = pneg %p28
      $region22: #{uresencoder_forward.15} parent=19 // pred_check_branch
        %105 = sbr.rel (%p103) target = $region24
      $region23: #{uresencoder_forward.15} parent=19 // pred_region
        %s106 = smul.u32 8, %s8
        %p107 = scmp.lt.s32.totalorder %s106, 15
        %s108 = scalar_select %p107, %s106, 15
        %s109 = smul.addr %s108, 4
        %s110 = scalar_lea.vmem %s0, %s109
        %s111 = smul.u32 8, %s8
      $region24: #{uresencoder_forward.15} parent=19 // pred_fallthru
        _
    $region20: #{uresencoder_forward.15} parent=5 // pred_fallthru
      _
    %p112 = scmp.le.s32.totalorder 1, %s8
    %p113 = scmp.lt.s32.totalorder %s8, 3
    %p114 = pnand %p112, %p113
    %p115 = pneg %p114
    // Predicated region
    $region25: #{uresencoder_forward.15} parent=5 // pred_check
      _
    $region26: #{uresencoder_forward.15} parent=5 // pred_check_branch
      %117 = sbr.rel (%p114) target = $region28
    $region27: #{uresencoder_forward.15} parent=5 // pred_region
      %s118 = ssub.s32 %s8, 1
      %s119 = smul.u32 8, %s13
      %p120 = scmp.lt.s32.totalorder %s119, 15
      %s121 = scalar_select %p120, %s119, 15
      %s122 = smul.addr %s121, 4
      %s123 = scalar_lea.vmem %s0, %s122
      %p124 = pneg %p34
      %p125 = pneg %p31
      %p126 = pneg %p55
      %p127 = pneg %p52
      %p128 = pneg %p81
      %p129 = pneg %p78
      %s130 = smul.u32 8, %s13
      %p131 = scmp.lt.s32.totalorder %s130, 15
      %s132 = scalar_select %p131, %s130, 15
      %s133 = smul.addr %s132, 8
      %s134 = scalar_lea.vmem %s2, %s133
      %s135 = smul.u32 8, %s13
      %p136 = scmp.lt.s32.totalorder %s135, 15
      %s137 = scalar_select %p136, %s135, 15
      %s138 = smul.addr %s137, 4
      %s139 = scalar_lea.vmem %s0, %s138
      %s140 = smul.u32 8, %s13
      %s141 = smul.u32 8, %s13
      %p142 = scmp.lt.s32.totalorder %s141, 15
      %s143 = scalar_select %p142, %s141, 15
      %s144 = smul.addr %s143, 8
      %s145 = scalar_lea.vmem %s2, %s144
      %s146 = smul.u32 8, %s13
      %v148 = vld [vmem:[%s139] sm:$0xf]
      %v149 = vld [vmem:[%s139 + $0x4] sm:$0xf]
      %v150 = vld [vmem:[%s139 + $0x8] sm:$0xf]
      %v151 = vld [vmem:[%s139 + $0xc] sm:$0xf]
      %v152 = vld [vmem:[%s139 + $0x10] sm:$0xf]
      %v153 = vld [vmem:[%s139 + $0x14] sm:$0xf]
      %v154 = vld [vmem:[%s139 + $0x18] sm:$0xf]
      %v155 = vld [vmem:[%s139 + $0x1c] sm:$0xf]
      %v156 = vld [vmem:[%s1] sm:$0xf]
      %v157 = vld [vmem:[%s1 + $0x4] sm:$0xf]
      %v158 = vld [vmem:[%s1 + $0x8] sm:$0xf]
      %v159 = vld [vmem:[%s1 + $0xc] sm:$0xf]
      %v160 = vld [vmem:[%s1 + $0x10] sm:$0xf]
      %v161 = vld [vmem:[%s1 + $0x14] sm:$0xf]
      %v162 = vld [vmem:[%s1 + $0x18] sm:$0xf]
      %v163 = vld [vmem:[%s1 + $0x1c] sm:$0xf]
      %v164 = vld [vmem:[%s1 + $0x20] sm:$0xf]
      %v173 = vunpack.c.l.b16 %v148
      %v174 = vunpack.c.l.b16 %v149
      %v175 = vunpack.c.l.b16 %v150
      %v176 = vunpack.c.l.b16 %v151
      %v177 = vunpack.c.l.b16 %v152
      %v178 = vunpack.c.l.b16 %v153
      %v179 = vunpack.c.l.b16 %v154
      %v180 = vunpack.c.l.b16 %v155
      %v181 = vpack.c.b16 %v174, %v173
      %v182 = vpack.c.b16 %v176, %v175
      %v183 = vpack.c.b16 %v178, %v177
      %v184 = vpack.c.b16 %v180, %v179
      %v194 = vunpack.c.l.b16 %v156
      %v195 = vunpack.c.l.b16 %v157
      %v196 = vunpack.c.l.b16 %v158
      %v197 = vunpack.c.l.b16 %v159
      %v198 = vunpack.c.l.b16 %v160
      %v199 = vunpack.c.l.b16 %v161
      %v200 = vunpack.c.l.b16 %v162
      %v201 = vunpack.c.l.b16 %v163
      %v202 = vunpack.c.l.b16 %v164
      %v203 = vpack.c.b16 %v195, %v194
      %v204 = vpack.c.b16 %v197, %v196
      %v205 = vpack.c.b16 %v199, %v198
      %v206 = vpack.c.b16 %v201, %v200
      %v207 = vpack.c.b16 %v202, %v202
      %vm212 = vcmask 588800
      %v214 = vsel %vm212, %v181, 0
      %v217 = vsel %vm212, %v182, 0
      %v220 = vsel %vm212, %v183, 0
      %v223 = vsel %vm212, %v184, 0
      %vm225 = vcmask 1043456
      %v227 = vsel %vm225, %v207, 0
      %229 = vmatprep.subr.bf16.mxu0 0
      %230 = vmatpush1.bf16.msra.mxu0 0
      %231 = vmatprep.subr.bf16.mxu0 0
      %232 = vmatpush1.bf16.msra.mxu0 0
      %233 = vmatprep.subr.bf16.mxu0 0
      %234 = vmatpush1.bf16.msra.mxu0 0
      %235 = vmatprep.subr.bf16.mxu0 0
      %236 = vmatpush1.bf16.msra.mxu0 %v227
      %237 = vmatprep.subr.bf16.mxu0 0
      %238 = vmatpush1.bf16.msra.mxu0 %v206
      %239 = vmatprep.subr.bf16.mxu0 0
      %240 = vmatpush1.bf16.msra.mxu0 %v205
      %241 = vmatprep.subr.bf16.mxu0 0
      %242 = vmatpush1.bf16.msra.mxu0 %v204
      %243 = vmatprep.subr.bf16.mxu0 0
      %244 = vmatpush1.bf16.msra.mxu0 %v203
      %245 = vmatprep.subr.bf16.mxu0 0
      %246 = vmatpush2.bf16.msra.mxu0 0
      %247 = vmatprep.subr.bf16.mxu0 0
      %248 = vmatpush2.bf16.msra.mxu0 0
      %249 = vmatprep.subr.bf16.mxu0 0
      %250 = vmatpush2.bf16.msra.mxu0 0
      %251 = vmatprep.subr.bf16.mxu0 0
      %252 = vmatpush2.bf16.msra.mxu0 0
      %253 = vmatprep.subr.bf16.mxu0 0
      %254 = vmatpush2.bf16.msra.mxu0 0
      %255 = vmatprep.subr.bf16.mxu0 0
      %256 = vmatpush2.bf16.msra.mxu0 0
      %257 = vmatprep.subr.bf16.mxu0 0
      %258 = vmatpush2.bf16.msra.mxu0 0
      %259 = vmatprep.subr.bf16.mxu0 0
      %260 = vmatpush2.bf16.msra.mxu0 0
      %261 = vmatprep.mubr.bf16.mxu0 0
      %262 = vmatmul.mubr.bf16.gmra.mxu0 %v214
      %v263 = vpop.f32.mrf.mxu0
      %v264 = vadd.f32 0.0, %v263
      %v265 = vpop.f32.mrf.mxu0
      %v266 = vpop.f32.mrf.mxu0
      %v267 = vadd.f32 0.0, %v266
      %v268 = vpop.f32.mrf.mxu0
      %269 = vmatprep.mubr.bf16.mxu0 0
      %270 = vmatmul.mubr.bf16.gmra.mxu0 %v217
      %v271 = vpop.f32.mrf.mxu0
      %v272 = vadd.f32 0.0, %v271
      %v273 = vpop.f32.mrf.mxu0
      %v274 = vpop.f32.mrf.mxu0
      %v275 = vadd.f32 0.0, %v274
      %v276 = vpop.f32.mrf.mxu0
      %277 = vmatprep.mubr.bf16.mxu0 0
      %278 = vmatmul.mubr.bf16.gmra.mxu0 %v220
      %v279 = vpop.f32.mrf.mxu0
      %v280 = vadd.f32 0.0, %v279
      %v281 = vpop.f32.mrf.mxu0
      %v282 = vpop.f32.mrf.mxu0
      %v283 = vadd.f32 0.0, %v282
      %v284 = vpop.f32.mrf.mxu0
      %285 = vmatprep.mubr.bf16.mxu0 0
      %286 = vmatmul.mubr.bf16.gmra.mxu0 %v223
      %v287 = vpop.f32.mrf.mxu0
      %v288 = vadd.f32 0.0, %v287
      %v289 = vpop.f32.mrf.mxu0
      %v290 = vpop.f32.mrf.mxu0
      %v291 = vadd.f32 0.0, %v290
      %v292 = vpop.f32.mrf.mxu0
      %293 = vdwg.mxu0
      %vm294 = vcmask 130048
      %295 = vst.msk [vmem:[%s145] sm:$0xff] %vm294, %v264
      %296 = vst.msk [vmem:[%s145 + $0x8] sm:$0xff] %vm294, %v267
      %297 = vst.msk [vmem:[%s145 + $0x10] sm:$0xff] %vm294, %v272
      %298 = vst.msk [vmem:[%s145 + $0x18] sm:$0xff] %vm294, %v275
      %299 = vst.msk [vmem:[%s145 + $0x20] sm:$0xff] %vm294, %v280
      %300 = vst.msk [vmem:[%s145 + $0x28] sm:$0xff] %vm294, %v283
      %301 = vst.msk [vmem:[%s145 + $0x30] sm:$0xff] %vm294, %v288
      %302 = vst.msk [vmem:[%s145 + $0x38] sm:$0xff] %vm294, %v291
      %s303 = smul.u32 8, %s13
      %p304 = scmp.lt.s32.totalorder %s303, 15
      %s305 = scalar_select %p304, %s303, 15
      %s306 = smul.addr %s305, 8
      %s307 = scalar_lea.vmem %s2, %s306
      // Predicated region
      $region29: #{uresencoder_forward.15} parent=27 // pred_check
        %p308 = pneg %p78
      $region30: #{uresencoder_forward.15} parent=27 // pred_check_branch
        %310 = sbr.rel (%p308) target = $region32
      $region31: #{uresencoder_forward.15} parent=27 // pred_region
        %s311 = smul.u32 8, %s13
      $region32: #{uresencoder_forward.15} parent=27 // pred_fallthru
        _
    $region28: #{uresencoder_forward.15} parent=5 // pred_fallthru
      _
    %p312 = scmp.le.s32.totalorder 2, %s8
    // Predicated region
    $region33: #{uresencoder_forward.15} parent=5 // pred_check
      %p313 = pneg %p312
    $region34: #{uresencoder_forward.15} parent=5 // pred_check_branch
      %315 = sbr.rel (%p313) target = $region36
    $region35: #{uresencoder_forward.15} parent=5 // pred_region
      %s316 = ssub.s32 %s8, 2
      // Predicated region
      $region37: #{uresencoder_forward.15} parent=35 // pred_check
        %p317 = pneg %p84
      $region38: #{uresencoder_forward.15} parent=35 // pred_check_branch
        %319 = sbr.rel (%p317) target = $region40
      $region39: #{uresencoder_forward.15} parent=35 // pred_region
        %s320 = smul.u32 8, %s14
        %p321 = scmp.lt.s32.totalorder %s320, 15
        %s322 = scalar_select %p321, %s320, 15
        %s323 = smul.addr %s322, 8
        %s324 = scalar_lea.vmem %s2, %s323
      $region40: #{uresencoder_forward.15} parent=35 // pred_fallthru
        _
    $region36: #{uresencoder_forward.15} parent=5 // pred_fallthru
      _
  $region6: #{uresencoder_forward.15} parent=0 // loop_footer
    %s12 = sadd.s32 1, %s8
  $region7: #{uresencoder_forward.15} parent=0 // loop_footer_branch
    %7 = sbr.rel target = $region3
  $region8: #{uresencoder_forward.15} parent=0 // loop_exit
    _

// kernel: uresencoder_forward.16
$region0: #{uresencoder_forward.16}
  #allocation0 [shape = 'u32[]', space=smem, size = 0x4, offset = 0x4, fixed_abs, tag = 'smem constant byte address 0x4 - core index']
  #allocation1 [shape = 'u32[144,128]{1,0:T(1,128)}', space=vmem, size = 0x12000, scoped, tag = 'internal scratch']
  %s0 = inlined_call_operand.vmem [shape: bf16[128,144], index: 0, kind: input, shape index: {}]
  %s1 = inlined_call_operand.vmem [shape: bf16[144,16], index: 1, kind: input, shape index: {}]
  %s2 = inlined_call_operand.vmem [shape: f32[128,16], index: 2, kind: input, shape index: {}]
  %s3 = inlined_call_operand.vmem [shape: f32[128,16], index: 3, kind: output, shape index: {}]
  %s4 = sld [smem:[#allocation0]]
  $region45: #{uresencoder_forward.16} parent=0
    _
  %s6 = ssub.s32 1, %s4
  %s7 = scalar_select 0, %s6, %s4
  loop: start=0, step=1, limit=4
  $region2: #{uresencoder_forward.16} parent=0 // loop_pre_header
    _
  $region3: #{uresencoder_forward.16} parent=0 // loop_header
    %s9 = sphi 0, %s13
    %p10 = scmp.ge.s32.totalorder %s9, 4
    %s19 = sphi 0, %s21
    %s22 = sphi 0, %s19
    %s23 = sphi 0, %s22
    %s39 = sphi 0, %s23
    %s43 = sphi 0, %s43
    %s45 = sphi 0, %s43
    %s46 = sphi 0, %s45
    %s60 = sphi 0, %s46
    %s66 = sphi 0, %s68
    %s69 = sphi 0, %s66
    %s70 = sphi 0, %s69
    %s86 = sphi 0, %s70
    %s92 = sphi 0, %s94
    %s95 = sphi 0, %s92
    %s96 = sphi 0, %s95
    %s112 = sphi 0, %s96
  $region4: #{uresencoder_forward.16} parent=0 // loop_header_branch
    %12 = sbr.rel (%p10) target = $region8
  $region5: #{uresencoder_forward.16} parent=0 // loop_body
    %s14 = ssub.s32 %s9, 1
    %s15 = ssub.s32 %s9, 2
    %s16 = sadd.s32 %s9, 1
    %s17 = ssub.s32 %s9, %s16
    %p18 = scmp.eq.s32.totalorder %s17, 0
    %s20 = sadd.s32 %s19, 1
    %s21 = scalar_select %p18, %s19, %s20
    %p24 = pneg %p18
    %p25 = scmp.eq.s32.totalorder %s9, 1
    %p26 = por %p24, %p25
    %p27 = scmp.ne.s32.totalorder %s19, %s22
    %p28 = scmp.eq.s32.totalorder %s9, 0
    %p29 = por %p27, %p28
    %p30 = scmp.ne.s32.totalorder %s19, %s22
    %p31 = scmp.eq.s32.totalorder %s14, 1
    %p32 = por %p30, %p31
    %p33 = scmp.ne.s32.totalorder %s22, %s23
    %p34 = scmp.eq.s32.totalorder %s14, 0
    %p35 = por %p33, %p34
    %p36 = scmp.ne.s32.totalorder %s22, %s23
    %p37 = scmp.eq.s32.totalorder %s15, 1
    %p38 = por %p36, %p37
    %p40 = scmp.ne.s32.totalorder %s23, %s39
    %p41 = scmp.eq.s32.totalorder %s15, 0
    %p42 = por %p40, %p41
    %s44 = sadd.s32 %s43, 1
    %p47 = scmp.eq.s32.totalorder %s9, 1
    %p48 = scmp.ne.s32.totalorder %s43, %s45
    %p49 = scmp.eq.s32.totalorder %s9, 0
    %p50 = por %p48, %p49
    %p51 = scmp.ne.s32.totalorder %s43, %s45
    %p52 = scmp.eq.s32.totalorder %s14, 1
    %p53 = por %p51, %p52
    %p54 = scmp.ne.s32.totalorder %s45, %s46
    %p55 = scmp.eq.s32.totalorder %s14, 0
    %p56 = por %p54, %p55
    %p57 = scmp.ne.s32.totalorder %s45, %s46
    %p58 = scmp.eq.s32.totalorder %s15, 1
    %p59 = por %p57, %p58
    %p61 = scmp.ne.s32.totalorder %s46, %s60
    %p62 = scmp.eq.s32.totalorder %s15, 0
    %p63 = por %p61, %p62
    %s64 = ssub.s32 %s9, %s16
    %p65 = scmp.eq.s32.totalorder %s64, 0
    %s67 = sadd.s32 %s66, 1
    %s68 = scalar_select %p65, %s66, %s67
    %p71 = pneg %p65
    %p72 = scmp.eq.s32.totalorder %s9, 1
    %p73 = por %p71, %p72
    %p74 = scmp.ne.s32.totalorder %s66, %s69
    %p75 = scmp.eq.s32.totalorder %s9, 0
    %p76 = por %p74, %p75
    %p77 = scmp.ne.s32.totalorder %s66, %s69
    %p78 = scmp.eq.s32.totalorder %s14, 1
    %p79 = por %p77, %p78
    %p80 = scmp.ne.s32.totalorder %s69, %s70
    %p81 = scmp.eq.s32.totalorder %s14, 0
    %p82 = por %p80, %p81
    %p83 = scmp.ne.s32.totalorder %s69, %s70
    %p84 = scmp.eq.s32.totalorder %s15, 1
    %p85 = por %p83, %p84
    %p87 = scmp.ne.s32.totalorder %s70, %s86
    %p88 = scmp.eq.s32.totalorder %s15, 0
    %p89 = por %p87, %p88
    %s90 = ssub.s32 %s9, %s16
    %p91 = scmp.eq.s32.totalorder %s90, 0
    %s93 = sadd.s32 %s92, 1
    %s94 = scalar_select %p91, %s92, %s93
    %p97 = pneg %p91
    %p98 = scmp.eq.s32.totalorder %s9, 1
    %p99 = por %p97, %p98
    %p100 = scmp.ne.s32.totalorder %s92, %s95
    %p101 = scmp.eq.s32.totalorder %s9, 0
    %p102 = por %p100, %p101
    %p103 = scmp.ne.s32.totalorder %s92, %s95
    %p104 = scmp.eq.s32.totalorder %s14, 1
    %p105 = por %p103, %p104
    %p106 = scmp.ne.s32.totalorder %s95, %s96
    %p107 = scmp.eq.s32.totalorder %s14, 0
    %p108 = por %p106, %p107
    %p109 = scmp.ne.s32.totalorder %s95, %s96
    %p110 = scmp.eq.s32.totalorder %s15, 1
    %p111 = por %p109, %p110
    %p113 = scmp.ne.s32.totalorder %s96, %s112
    %p114 = scmp.eq.s32.totalorder %s15, 0
    %p115 = por %p113, %p114
    %p116 = scmp.le.s32.totalorder 1, %s9
    %p117 = scmp.lt.s32.totalorder %s9, 3
    %p118 = pnand %p116, %p117
    %p119 = pneg %p118
    // Predicated region
    $region9: #{uresencoder_forward.16} parent=5 // pred_check
      _
    $region10: #{uresencoder_forward.16} parent=5 // pred_check_branch
      %121 = sbr.rel (%p118) target = $region12
    $region11: #{uresencoder_forward.16} parent=5 // pred_region
      %s122 = ssub.s32 %s9, 1
      // Predicated region
      $region13: #{uresencoder_forward.16} parent=11 // pred_check
        %p123 = pneg %p56
      $region14: #{uresencoder_forward.16} parent=11 // pred_check_branch
        %125 = sbr.rel (%p123) target = $region16
      $region15: #{uresencoder_forward.16} parent=11 // pred_region
        _
      $region16: #{uresencoder_forward.16} parent=11 // pred_fallthru
        _
    $region12: #{uresencoder_forward.16} parent=5 // pred_fallthru
      _
    %p126 = scmp.lt.s32.totalorder %s9, 2
    // Predicated region
    $region17: #{uresencoder_forward.16} parent=5 // pred_check
      %p127 = pneg %p126
    $region18: #{uresencoder_forward.16} parent=5 // pred_check_branch
      %129 = sbr.rel (%p127) target = $region20
    $region19: #{uresencoder_forward.16} parent=5 // pred_region
      // Predicated region
      $region21: #{uresencoder_forward.16} parent=19 // pred_check
        %p130 = pneg %p29
      $region22: #{uresencoder_forward.16} parent=19 // pred_check_branch
        %132 = sbr.rel (%p130) target = $region24
      $region23: #{uresencoder_forward.16} parent=19 // pred_region
        %s133 = smul.u32 8, %s9
        %p134 = scmp.lt.s32.totalorder %s133, 15
        %s135 = scalar_select %p134, %s133, 15
        %s136 = smul.addr %s135, 2
        %s137 = smul.addr %s136, 4
        %s138 = scalar_lea.vmem %s0, %s137
        %s139 = smul.u32 8, %s9
      $region24: #{uresencoder_forward.16} parent=19 // pred_fallthru
        _
      // Predicated region
      $region25: #{uresencoder_forward.16} parent=19 // pred_check
        %p140 = pneg %p76
      $region26: #{uresencoder_forward.16} parent=19 // pred_check_branch
        %142 = sbr.rel (%p140) target = $region28
      $region27: #{uresencoder_forward.16} parent=19 // pred_region
        %s143 = smul.u32 8, %s9
        %p144 = scmp.lt.s32.totalorder %s143, 15
        %s145 = scalar_select %p144, %s143, 15
        %s146 = smul.addr %s145, 8
        %s147 = scalar_lea.vmem %s2, %s146
        %s148 = smul.u32 8, %s9
      $region28: #{uresencoder_forward.16} parent=19 // pred_fallthru
        _
    $region20: #{uresencoder_forward.16} parent=5 // pred_fallthru
      _
    %p149 = scmp.le.s32.totalorder 1, %s9
    %p150 = scmp.lt.s32.totalorder %s9, 3
    %p151 = pnand %p149, %p150
    %p152 = pneg %p151
    // Predicated region
    $region29: #{uresencoder_forward.16} parent=5 // pred_check
      _
    $region30: #{uresencoder_forward.16} parent=5 // pred_check_branch
      %154 = sbr.rel (%p151) target = $region32
    $region31: #{uresencoder_forward.16} parent=5 // pred_region
      %s155 = ssub.s32 %s9, 1
      %s156 = smul.u32 8, %s14
      %p157 = scmp.lt.s32.totalorder %s156, 15
      %s158 = scalar_select %p157, %s156, 15
      %s159 = smul.addr %s158, 2
      %s160 = smul.addr %s159, 4
      %s161 = scalar_lea.vmem %s0, %s160
      %p162 = pneg %p35
      %p163 = pneg %p32
      %p164 = pneg %p56
      %p165 = pneg %p53
      %s166 = smul.u32 8, %s14
      %p167 = scmp.lt.s32.totalorder %s166, 15
      %s168 = scalar_select %p167, %s166, 15
      %s169 = smul.addr %s168, 8
      %s170 = scalar_lea.vmem %s2, %s169
      %p171 = pneg %p82
      %p172 = pneg %p79
      %p173 = pneg %p108
      %p174 = pneg %p105
      %s175 = smul.u32 8, %s14
      %p176 = scmp.lt.s32.totalorder %s175, 15
      %s177 = scalar_select %p176, %s175, 15
      %s178 = smul.addr %s177, 8
      %s179 = scalar_lea.vmem %s3, %s178
      %s180 = smul.u32 8, %s14
      %p181 = scmp.lt.s32.totalorder %s180, 15
      %s182 = scalar_select %p181, %s180, 15
      %s183 = smul.addr %s182, 2
      %s184 = smul.addr %s183, 4
      %s185 = scalar_lea.vmem %s0, %s184
      %s186 = smul.u32 8, %s14
      %s187 = smul.u32 8, %s14
      %p188 = scmp.lt.s32.totalorder %s187, 15
      %s189 = scalar_select %p188, %s187, 15
      %s190 = smul.addr %s189, 8
      %s191 = scalar_lea.vmem %s2, %s190
      %s192 = smul.u32 8, %s14
      %s193 = smul.u32 8, %s14
      %p194 = scmp.lt.s32.totalorder %s193, 15
      %s195 = scalar_select %p194, %s193, 15
      %s196 = smul.addr %s195, 8
      %s197 = scalar_lea.vmem %s3, %s196
      %s198 = smul.u32 8, %s14
      %v200 = vld [vmem:[%s185] sm:$0xff]
      %v201 = vld [vmem:[%s185 + $0x8] sm:$0xff]
      %v202 = vld [vmem:[%s185 + $0x10] sm:$0xff]
      %v203 = vld [vmem:[%s185 + $0x18] sm:$0xff]
      %v204 = vld [vmem:[%s185 + $0x20] sm:$0xff]
      %v205 = vld [vmem:[%s185 + $0x28] sm:$0xff]
      %v206 = vld [vmem:[%s185 + $0x30] sm:$0xff]
      %v207 = vld [vmem:[%s185 + $0x38] sm:$0xff]
      %v208 = vld [vmem:[%s1] sm:$0xf]
      %v209 = vld [vmem:[%s1 + $0x4] sm:$0xf]
      %v210 = vld [vmem:[%s1 + $0x8] sm:$0xf]
      %v211 = vld [vmem:[%s1 + $0xc] sm:$0xf]
      %v212 = vld [vmem:[%s1 + $0x10] sm:$0xf]
      %v213 = vld [vmem:[%s1 + $0x14] sm:$0xf]
      %v214 = vld [vmem:[%s1 + $0x18] sm:$0xf]
      %v215 = vld [vmem:[%s1 + $0x1c] sm:$0xf]
      %v216 = vld [vmem:[%s1 + $0x20] sm:$0xf]
      %v217 = vld [vmem:[%s1 + $0x24] sm:$0xf]
      %v218 = vld [vmem:[%s1 + $0x28] sm:$0xf]
      %v219 = vld [vmem:[%s1 + $0x2c] sm:$0xf]
      %v220 = vld [vmem:[%s1 + $0x30] sm:$0xf]
      %v221 = vld [vmem:[%s1 + $0x34] sm:$0xf]
      %v222 = vld [vmem:[%s1 + $0x38] sm:$0xf]
      %v223 = vld [vmem:[%s1 + $0x3c] sm:$0xf]
      %v224 = vld [vmem:[%s1 + $0x40] sm:$0xf]
      %v225 = vld [vmem:[%s1 + $0x44] sm:$0xf]
      %v226 = vld [vmem:[%s191] sm:$0xff]
      %v227 = vld [vmem:[%s191 + $0x8] sm:$0xff]
      %v228 = vld [vmem:[%s191 + $0x10] sm:$0xff]
      %v229 = vld [vmem:[%s191 + $0x18] sm:$0xff]
      %v230 = vld [vmem:[%s191 + $0x20] sm:$0xff]
      %v231 = vld [vmem:[%s191 + $0x28] sm:$0xff]
      %v232 = vld [vmem:[%s191 + $0x30] sm:$0xff]
      %v233 = vld [vmem:[%s191 + $0x38] sm:$0xff]
      %v242 = vunpack.c.l.b16 %v200
      %v243 = vunpack.c.h.b16 %v200
      %v244 = vunpack.c.l.b16 %v201
      %v245 = vunpack.c.h.b16 %v201
      %v246 = vunpack.c.l.b16 %v202
      %v247 = vunpack.c.h.b16 %v202
      %v248 = vunpack.c.l.b16 %v203
      %v249 = vunpack.c.h.b16 %v203
      %v250 = vunpack.c.l.b16 %v204
      %v251 = vunpack.c.h.b16 %v204
      %v252 = vunpack.c.l.b16 %v205
      %v253 = vunpack.c.h.b16 %v205
      %v254 = vunpack.c.l.b16 %v206
      %v255 = vunpack.c.h.b16 %v206
      %v256 = vunpack.c.l.b16 %v207
      %v257 = vunpack.c.h.b16 %v207
      %v258 = vpack.c.b16 %v244, %v242
      %v259 = vpack.c.b16 %v245, %v243
      %v260 = vpack.c.b16 %v248, %v246
      %v261 = vpack.c.b16 %v249, %v247
      %v262 = vpack.c.b16 %v252, %v250
      %v263 = vpack.c.b16 %v253, %v251
      %v264 = vpack.c.b16 %v256, %v254
      %v265 = vpack.c.b16 %v257, %v255
      %v288 = vunpack.c.l.b16 %v208
      %v289 = vunpack.c.l.b16 %v209
      %v290 = vunpack.c.l.b16 %v210
      %v291 = vunpack.c.l.b16 %v211
      %v292 = vunpack.c.l.b16 %v212
      %v293 = vunpack.c.l.b16 %v213
      %v294 = vunpack.c.l.b16 %v214
      %v295 = vunpack.c.l.b16 %v215
      %v296 = vunpack.c.l.b16 %v216
      %v297 = vunpack.c.l.b16 %v217
      %v298 = vunpack.c.l.b16 %v218
      %v299 = vunpack.c.l.b16 %v219
      %v300 = vunpack.c.l.b16 %v220
      %v301 = vunpack.c.l.b16 %v221
      %v302 = vunpack.c.l.b16 %v222
      %v303 = vunpack.c.l.b16 %v223
      %v304 = vunpack.c.l.b16 %v224
      %v305 = vunpack.c.l.b16 %v225
      %v306 = vpack.c.b16 %v289, %v288
      %v307 = vpack.c.b16 %v291, %v290
      %v308 = vpack.c.b16 %v293, %v292
      %v309 = vpack.c.b16 %v295, %v294
      %v310 = vpack.c.b16 %v297, %v296
      %v311 = vpack.c.b16 %v299, %v298
      %v312 = vpack.c.b16 %v301, %v300
      %v313 = vpack.c.b16 %v303, %v302
      %v314 = vpack.c.b16 %v305, %v304
      %vm324 = vcmask 130048
      %v326 = vsel %vm324, %v259, 0
      %v329 = vsel %vm324, %v261, 0
      %v332 = vsel %vm324, %v263, 0
      %v335 = vsel %vm324, %v265, 0
      %337 = vmatprep.subr.bf16.mxu0 0
      %338 = vmatpush1.bf16.msra.mxu0 %v313
      %339 = vmatprep.subr.bf16.mxu0 0
      %340 = vmatpush1.bf16.msra.mxu0 %v312
      %341 = vmatprep.subr.bf16.mxu0 0
      %342 = vmatpush1.bf16.msra.mxu0 %v311
      %343 = vmatprep.subr.bf16.mxu0 0
      %344 = vmatpush1.bf16.msra.mxu0 %v310
      %345 = vmatprep.subr.bf16.mxu0 0
      %346 = vmatpush1.bf16.msra.mxu0 %v309
      %347 = vmatprep.subr.bf16.mxu0 0
      %348 = vmatpush1.bf16.msra.mxu0 %v308
      %349 = vmatprep.subr.bf16.mxu0 0
      %350 = vmatpush1.bf16.msra.mxu0 %v307
      %351 = vmatprep.subr.bf16.mxu0 0
      %352 = vmatpush1.bf16.msra.mxu0 %v306
      %353 = vmatprep.subr.bf16.mxu0 0
      %354 = vmatpush2.bf16.msra.mxu0 0
      %355 = vmatprep.subr.bf16.mxu0 0
      %356 = vmatpush2.bf16.msra.mxu0 0
      %357 = vmatprep.subr.bf16.mxu0 0
      %358 = vmatpush2.bf16.msra.mxu0 0
      %359 = vmatprep.subr.bf16.mxu0 0
      %360 = vmatpush2.bf16.msra.mxu0 0
      %361 = vmatprep.subr.bf16.mxu0 0
      %362 = vmatpush2.bf16.msra.mxu0 0
      %363 = vmatprep.subr.bf16.mxu0 0
      %364 = vmatpush2.bf16.msra.mxu0 0
      %365 = vmatprep.subr.bf16.mxu0 0
      %366 = vmatpush2.bf16.msra.mxu0 0
      %367 = vmatprep.subr.bf16.mxu0 0
      %368 = vmatpush2.bf16.msra.mxu0 %v314
      %369 = vmatprep.mubr.bf16.mxu0 %v326
      %370 = vmatmul.mubr.bf16.gmra.mxu0 %v258
      %v371 = vpop.f32.mrf.mxu0
      %v372 = vadd.f32 %v226, %v371
      %v373 = vpop.f32.mrf.mxu0
      %v374 = vpop.f32.mrf.mxu0
      %v375 = vadd.f32 %v227, %v374
      %v376 = vpop.f32.mrf.mxu0
      %377 = vmatprep.mubr.bf16.mxu0 %v329
      %378 = vmatmul.mubr.bf16.gmra.mxu0 %v260
      %v379 = vpop.f32.mrf.mxu0
      %v380 = vadd.f32 %v228, %v379
      %v381 = vpop.f32.mrf.mxu0
      %v382 = vpop.f32.mrf.mxu0
      %v383 = vadd.f32 %v229, %v382
      %v384 = vpop.f32.mrf.mxu0
      %385 = vmatprep.mubr.bf16.mxu0 %v332
      %386 = vmatmul.mubr.bf16.gmra.mxu0 %v262
      %v387 = vpop.f32.mrf.mxu0
      %v388 = vadd.f32 %v230, %v387
      %v389 = vpop.f32.mrf.mxu0
      %v390 = vpop.f32.mrf.mxu0
      %v391 = vadd.f32 %v231, %v390
      %v392 = vpop.f32.mrf.mxu0
      %393 = vmatprep.mubr.bf16.mxu0 %v335
      %394 = vmatmul.mubr.bf16.gmra.mxu0 %v264
      %v395 = vpop.f32.mrf.mxu0
      %v396 = vadd.f32 %v232, %v395
      %v397 = vpop.f32.mrf.mxu0
      %v398 = vpop.f32.mrf.mxu0
      %v399 = vadd.f32 %v233, %v398
      %v400 = vpop.f32.mrf.mxu0
      %401 = vdwg.mxu0
      %v402 = vmax.f32 %v372, 0.0
      %v403 = vmax.f32 %v375, 0.0
      %v404 = vmax.f32 %v380, 0.0
      %v405 = vmax.f32 %v383, 0.0
      %v406 = vmax.f32 %v388, 0.0
      %v407 = vmax.f32 %v391, 0.0
      %v408 = vmax.f32 %v396, 0.0
      %v409 = vmax.f32 %v399, 0.0
      %410 = vst.msk [vmem:[%s197] sm:$0xff] %vm324, %v402
      %411 = vst.msk [vmem:[%s197 + $0x8] sm:$0xff] %vm324, %v403
      %412 = vst.msk [vmem:[%s197 + $0x10] sm:$0xff] %vm324, %v404
      %413 = vst.msk [vmem:[%s197 + $0x18] sm:$0xff] %vm324, %v405
      %414 = vst.msk [vmem:[%s197 + $0x20] sm:$0xff] %vm324, %v406
      %415 = vst.msk [vmem:[%s197 + $0x28] sm:$0xff] %vm324, %v407
      %416 = vst.msk [vmem:[%s197 + $0x30] sm:$0xff] %vm324, %v408
      %417 = vst.msk [vmem:[%s197 + $0x38] sm:$0xff] %vm324, %v409
      %s418 = smul.u32 8, %s14
      %p419 = scmp.lt.s32.totalorder %s418, 15
      %s420 = scalar_select %p419, %s418, 15
      %s421 = smul.addr %s420, 8
      %s422 = scalar_lea.vmem %s3, %s421
      // Predicated region
      $region33: #{uresencoder_forward.16} parent=31 // pred_check
        %p423 = pneg %p105
      $region34: #{uresencoder_forward.16} parent=31 // pred_check_branch
        %425 = sbr.rel (%p423) target = $region36
      $region35: #{uresencoder_forward.16} parent=31 // pred_region
        %s426 = smul.u32 8, %s14
      $region36: #{uresencoder_forward.16} parent=31 // pred_fallthru
        _
    $region32: #{uresencoder_forward.16} parent=5 // pred_fallthru
      _
    %p427 = scmp.le.s32.totalorder 2, %s9
    // Predicated region
    $region37: #{uresencoder_forward.16} parent=5 // pred_check
      %p428 = pneg %p427
    $region38: #{uresencoder_forward.16} parent=5 // pred_check_branch
      %430 = sbr.rel (%p428) target = $region40
    $region39: #{uresencoder_forward.16} parent=5 // pred_region
      %s431 = ssub.s32 %s9, 2
      // Predicated region
      $region41: #{uresencoder_forward.16} parent=39 // pred_check
        %p432 = pneg %p111
      $region42: #{uresencoder_forward.16} parent=39 // pred_check_branch
        %434 = sbr.rel (%p432) target = $region44
      $region43: #{uresencoder_forward.16} parent=39 // pred_region
        %s435 = smul.u32 8, %s15
        %p436 = scmp.lt.s32.totalorder %s435, 15
        %s437 = scalar_select %p436, %s435, 15
        %s438 = smul.addr %s437, 8
        %s439 = scalar_lea.vmem %s3, %s438
      $region44: #{uresencoder_forward.16} parent=39 // pred_fallthru
        _
    $region40: #{uresencoder_forward.16} parent=5 // pred_fallthru
      _
  $region6: #{uresencoder_forward.16} parent=0 // loop_footer
    %s13 = sadd.s32 1, %s9
  $region7: #{uresencoder_forward.16} parent=0 // loop_footer_branch
    %8 = sbr.rel target = $region3
  $region8: #{uresencoder_forward.16} parent=0 // loop_exit
    _

// kernel: uresencoder_forward.17
$region0: #{uresencoder_forward.17}
  #allocation0 [shape = 'u32[]', space=smem, size = 0x4, offset = 0x4, fixed_abs, tag = 'smem constant byte address 0x4 - core index']
  #allocation1 [shape = 'u32[144,128]{1,0:T(1,128)}', space=vmem, size = 0x12000, scoped, tag = 'internal scratch']
  %s0 = inlined_call_operand.vmem [shape: bf16[128,144], index: 0, kind: input, shape index: {}]
  %s1 = inlined_call_operand.vmem [shape: bf16[144,16], index: 1, kind: input, shape index: {}]
  %s2 = inlined_call_operand.vmem [shape: f32[128,16], index: 2, kind: output, shape index: {}]
  %s3 = sld [smem:[#allocation0]]
  $region41: #{uresencoder_forward.17} parent=0
    _
  %s5 = ssub.s32 1, %s3
  %s6 = scalar_select 0, %s5, %s3
  loop: start=0, step=1, limit=4
  $region2: #{uresencoder_forward.17} parent=0 // loop_pre_header
    _
  $region3: #{uresencoder_forward.17} parent=0 // loop_header
    %s8 = sphi 0, %s12
    %p9 = scmp.ge.s32.totalorder %s8, 4
    %s18 = sphi 0, %s20
    %s21 = sphi 0, %s18
    %s22 = sphi 0, %s21
    %s38 = sphi 0, %s22
    %s42 = sphi 0, %s42
    %s44 = sphi 0, %s42
    %s45 = sphi 0, %s44
    %s59 = sphi 0, %s45
    %s65 = sphi 0, %s67
    %s68 = sphi 0, %s65
    %s69 = sphi 0, %s68
    %s85 = sphi 0, %s69
  $region4: #{uresencoder_forward.17} parent=0 // loop_header_branch
    %11 = sbr.rel (%p9) target = $region8
  $region5: #{uresencoder_forward.17} parent=0 // loop_body
    %s13 = ssub.s32 %s8, 1
    %s14 = ssub.s32 %s8, 2
    %s15 = sadd.s32 %s8, 1
    %s16 = ssub.s32 %s8, %s15
    %p17 = scmp.eq.s32.totalorder %s16, 0
    %s19 = sadd.s32 %s18, 1
    %s20 = scalar_select %p17, %s18, %s19
    %p23 = pneg %p17
    %p24 = scmp.eq.s32.totalorder %s8, 1
    %p25 = por %p23, %p24
    %p26 = scmp.ne.s32.totalorder %s18, %s21
    %p27 = scmp.eq.s32.totalorder %s8, 0
    %p28 = por %p26, %p27
    %p29 = scmp.ne.s32.totalorder %s18, %s21
    %p30 = scmp.eq.s32.totalorder %s13, 1
    %p31 = por %p29, %p30
    %p32 = scmp.ne.s32.totalorder %s21, %s22
    %p33 = scmp.eq.s32.totalorder %s13, 0
    %p34 = por %p32, %p33
    %p35 = scmp.ne.s32.totalorder %s21, %s22
    %p36 = scmp.eq.s32.totalorder %s14, 1
    %p37 = por %p35, %p36
    %p39 = scmp.ne.s32.totalorder %s22, %s38
    %p40 = scmp.eq.s32.totalorder %s14, 0
    %p41 = por %p39, %p40
    %s43 = sadd.s32 %s42, 1
    %p46 = scmp.eq.s32.totalorder %s8, 1
    %p47 = scmp.ne.s32.totalorder %s42, %s44
    %p48 = scmp.eq.s32.totalorder %s8, 0
    %p49 = por %p47, %p48
    %p50 = scmp.ne.s32.totalorder %s42, %s44
    %p51 = scmp.eq.s32.totalorder %s13, 1
    %p52 = por %p50, %p51
    %p53 = scmp.ne.s32.totalorder %s44, %s45
    %p54 = scmp.eq.s32.totalorder %s13, 0
    %p55 = por %p53, %p54
    %p56 = scmp.ne.s32.totalorder %s44, %s45
    %p57 = scmp.eq.s32.totalorder %s14, 1
    %p58 = por %p56, %p57
    %p60 = scmp.ne.s32.totalorder %s45, %s59
    %p61 = scmp.eq.s32.totalorder %s14, 0
    %p62 = por %p60, %p61
    %s63 = ssub.s32 %s8, %s15
    %p64 = scmp.eq.s32.totalorder %s63, 0
    %s66 = sadd.s32 %s65, 1
    %s67 = scalar_select %p64, %s65, %s66
    %p70 = pneg %p64
    %p71 = scmp.eq.s32.totalorder %s8, 1
    %p72 = por %p70, %p71
    %p73 = scmp.ne.s32.totalorder %s65, %s68
    %p74 = scmp.eq.s32.totalorder %s8, 0
    %p75 = por %p73, %p74
    %p76 = scmp.ne.s32.totalorder %s65, %s68
    %p77 = scmp.eq.s32.totalorder %s13, 1
    %p78 = por %p76, %p77
    %p79 = scmp.ne.s32.totalorder %s68, %s69
    %p80 = scmp.eq.s32.totalorder %s13, 0
    %p81 = por %p79, %p80
    %p82 = scmp.ne.s32.totalorder %s68, %s69
    %p83 = scmp.eq.s32.totalorder %s14, 1
    %p84 = por %p82, %p83
    %p86 = scmp.ne.s32.totalorder %s69, %s85
    %p87 = scmp.eq.s32.totalorder %s14, 0
    %p88 = por %p86, %p87
    %p89 = scmp.le.s32.totalorder 1, %s8
    %p90 = scmp.lt.s32.totalorder %s8, 3
    %p91 = pnand %p89, %p90
    %p92 = pneg %p91
    // Predicated region
    $region9: #{uresencoder_forward.17} parent=5 // pred_check
      _
    $region10: #{uresencoder_forward.17} parent=5 // pred_check_branch
      %94 = sbr.rel (%p91) target = $region12
    $region11: #{uresencoder_forward.17} parent=5 // pred_region
      %s95 = ssub.s32 %s8, 1
      // Predicated region
      $region13: #{uresencoder_forward.17} parent=11 // pred_check
        %p96 = pneg %p55
      $region14: #{uresencoder_forward.17} parent=11 // pred_check_branch
        %98 = sbr.rel (%p96) target = $region16
      $region15: #{uresencoder_forward.17} parent=11 // pred_region
        _
      $region16: #{uresencoder_forward.17} parent=11 // pred_fallthru
        _
    $region12: #{uresencoder_forward.17} parent=5 // pred_fallthru
      _
    %p99 = scmp.lt.s32.totalorder %s8, 2
    // Predicated region
    $region17: #{uresencoder_forward.17} parent=5 // pred_check
      %p100 = pneg %p99
    $region18: #{uresencoder_forward.17} parent=5 // pred_check_branch
      %102 = sbr.rel (%p100) target = $region20
    $region19: #{uresencoder_forward.17} parent=5 // pred_region
      // Predicated region
      $region21: #{uresencoder_forward.17} parent=19 // pred_check
        %p103 = pneg %p28
      $region22: #{uresencoder_forward.17} parent=19 // pred_check_branch
        %105 = sbr.rel (%p103) target = $region24
      $region23: #{uresencoder_forward.17} parent=19 // pred_region
        %s106 = smul.u32 8, %s8
        %p107 = scmp.lt.s32.totalorder %s106, 15
        %s108 = scalar_select %p107, %s106, 15
        %s109 = smul.addr %s108, 2
        %s110 = smul.addr %s109, 4
        %s111 = scalar_lea.vmem %s0, %s110
        %s112 = smul.u32 8, %s8
      $region24: #{uresencoder_forward.17} parent=19 // pred_fallthru
        _
    $region20: #{uresencoder_forward.17} parent=5 // pred_fallthru
      _
    %p113 = scmp.le.s32.totalorder 1, %s8
    %p114 = scmp.lt.s32.totalorder %s8, 3
    %p115 = pnand %p113, %p114
    %p116 = pneg %p115
    // Predicated region
    $region25: #{uresencoder_forward.17} parent=5 // pred_check
      _
    $region26: #{uresencoder_forward.17} parent=5 // pred_check_branch
      %118 = sbr.rel (%p115) target = $region28
    $region27: #{uresencoder_forward.17} parent=5 // pred_region
      %s119 = ssub.s32 %s8, 1
      %s120 = smul.u32 8, %s13
      %p121 = scmp.lt.s32.totalorder %s120, 15
      %s122 = scalar_select %p121, %s120, 15
      %s123 = smul.addr %s122, 2
      %s124 = smul.addr %s123, 4
      %s125 = scalar_lea.vmem %s0, %s124
      %p126 = pneg %p34
      %p127 = pneg %p31
      %p128 = pneg %p55
      %p129 = pneg %p52
      %p130 = pneg %p81
      %p131 = pneg %p78
      %s132 = smul.u32 8, %s13
      %p133 = scmp.lt.s32.totalorder %s132, 15
      %s134 = scalar_select %p133, %s132, 15
      %s135 = smul.addr %s134, 8
      %s136 = scalar_lea.vmem %s2, %s135
      %s137 = smul.u32 8, %s13
      %p138 = scmp.lt.s32.totalorder %s137, 15
      %s139 = scalar_select %p138, %s137, 15
      %s140 = smul.addr %s139, 2
      %s141 = smul.addr %s140, 4
      %s142 = scalar_lea.vmem %s0, %s141
      %s143 = smul.u32 8, %s13
      %s144 = smul.u32 8, %s13
      %p145 = scmp.lt.s32.totalorder %s144, 15
      %s146 = scalar_select %p145, %s144, 15
      %s147 = smul.addr %s146, 8
      %s148 = scalar_lea.vmem %s2, %s147
      %s149 = smul.u32 8, %s13
      %v151 = vld [vmem:[%s142] sm:$0xff]
      %v152 = vld [vmem:[%s142 + $0x8] sm:$0xff]
      %v153 = vld [vmem:[%s142 + $0x10] sm:$0xff]
      %v154 = vld [vmem:[%s142 + $0x18] sm:$0xff]
      %v155 = vld [vmem:[%s142 + $0x20] sm:$0xff]
      %v156 = vld [vmem:[%s142 + $0x28] sm:$0xff]
      %v157 = vld [vmem:[%s142 + $0x30] sm:$0xff]
      %v158 = vld [vmem:[%s142 + $0x38] sm:$0xff]
      %v159 = vld [vmem:[%s1] sm:$0xf]
      %v160 = vld [vmem:[%s1 + $0x4] sm:$0xf]
      %v161 = vld [vmem:[%s1 + $0x8] sm:$0xf]
      %v162 = vld [vmem:[%s1 + $0xc] sm:$0xf]
      %v163 = vld [vmem:[%s1 + $0x10] sm:$0xf]
      %v164 = vld [vmem:[%s1 + $0x14] sm:$0xf]
      %v165 = vld [vmem:[%s1 + $0x18] sm:$0xf]
      %v166 = vld [vmem:[%s1 + $0x1c] sm:$0xf]
      %v167 = vld [vmem:[%s1 + $0x20] sm:$0xf]
      %v168 = vld [vmem:[%s1 + $0x24] sm:$0xf]
      %v169 = vld [vmem:[%s1 + $0x28] sm:$0xf]
      %v170 = vld [vmem:[%s1 + $0x2c] sm:$0xf]
      %v171 = vld [vmem:[%s1 + $0x30] sm:$0xf]
      %v172 = vld [vmem:[%s1 + $0x34] sm:$0xf]
      %v173 = vld [vmem:[%s1 + $0x38] sm:$0xf]
      %v174 = vld [vmem:[%s1 + $0x3c] sm:$0xf]
      %v175 = vld [vmem:[%s1 + $0x40] sm:$0xf]
      %v176 = vld [vmem:[%s1 + $0x44] sm:$0xf]
      %v185 = vunpack.c.l.b16 %v151
      %v186 = vunpack.c.h.b16 %v151
      %v187 = vunpack.c.l.b16 %v152
      %v188 = vunpack.c.h.b16 %v152
      %v189 = vunpack.c.l.b16 %v153
      %v190 = vunpack.c.h.b16 %v153
      %v191 = vunpack.c.l.b16 %v154
      %v192 = vunpack.c.h.b16 %v154
      %v193 = vunpack.c.l.b16 %v155
      %v194 = vunpack.c.h.b16 %v155
      %v195 = vunpack.c.l.b16 %v156
      %v196 = vunpack.c.h.b16 %v156
      %v197 = vunpack.c.l.b16 %v157
      %v198 = vunpack.c.h.b16 %v157
      %v199 = vunpack.c.l.b16 %v158
      %v200 = vunpack.c.h.b16 %v158
      %v201 = vpack.c.b16 %v187, %v185
      %v202 = vpack.c.b16 %v188, %v186
      %v203 = vpack.c.b16 %v191, %v189
      %v204 = vpack.c.b16 %v192, %v190
      %v205 = vpack.c.b16 %v195, %v193
      %v206 = vpack.c.b16 %v196, %v194
      %v207 = vpack.c.b16 %v199, %v197
      %v208 = vpack.c.b16 %v200, %v198
      %v231 = vunpack.c.l.b16 %v159
      %v232 = vunpack.c.l.b16 %v160
      %v233 = vunpack.c.l.b16 %v161
      %v234 = vunpack.c.l.b16 %v162
      %v235 = vunpack.c.l.b16 %v163
      %v236 = vunpack.c.l.b16 %v164
      %v237 = vunpack.c.l.b16 %v165
      %v238 = vunpack.c.l.b16 %v166
      %v239 = vunpack.c.l.b16 %v167
      %v240 = vunpack.c.l.b16 %v168
      %v241 = vunpack.c.l.b16 %v169
      %v242 = vunpack.c.l.b16 %v170
      %v243 = vunpack.c.l.b16 %v171
      %v244 = vunpack.c.l.b16 %v172
      %v245 = vunpack.c.l.b16 %v173
      %v246 = vunpack.c.l.b16 %v174
      %v247 = vunpack.c.l.b16 %v175
      %v248 = vunpack.c.l.b16 %v176
      %v249 = vpack.c.b16 %v232, %v231
      %v250 = vpack.c.b16 %v234, %v233
      %v251 = vpack.c.b16 %v236, %v235
      %v252 = vpack.c.b16 %v238, %v237
      %v253 = vpack.c.b16 %v240, %v239
      %v254 = vpack.c.b16 %v242, %v241
      %v255 = vpack.c.b16 %v244, %v243
      %v256 = vpack.c.b16 %v246, %v245
      %v257 = vpack.c.b16 %v248, %v247
      %vm267 = vcmask 130048
      %v269 = vsel %vm267, %v202, 0
      %v272 = vsel %vm267, %v204, 0
      %v275 = vsel %vm267, %v206, 0
      %v278 = vsel %vm267, %v208, 0
      %280 = vmatprep.subr.bf16.mxu0 0
      %281 = vmatpush1.bf16.msra.mxu0 %v256
      %282 = vmatprep.subr.bf16.mxu0 0
      %283 = vmatpush1.bf16.msra.mxu0 %v255
      %284 = vmatprep.subr.bf16.mxu0 0
      %285 = vmatpush1.bf16.msra.mxu0 %v254
      %286 = vmatprep.subr.bf16.mxu0 0
      %287 = vmatpush1.bf16.msra.mxu0 %v253
      %288 = vmatprep.subr.bf16.mxu0 0
      %289 = vmatpush1.bf16.msra.mxu0 %v252
      %290 = vmatprep.subr.bf16.mxu0 0
      %291 = vmatpush1.bf16.msra.mxu0 %v251
      %292 = vmatprep.subr.bf16.mxu0 0
      %293 = vmatpush1.bf16.msra.mxu0 %v250
      %294 = vmatprep.subr.bf16.mxu0 0
      %295 = vmatpush1.bf16.msra.mxu0 %v249
      %296 = vmatprep.subr.bf16.mxu0 0
      %297 = vmatpush2.bf16.msra.mxu0 0
      %298 = vmatprep.subr.bf16.mxu0 0
      %299 = vmatpush2.bf16.msra.mxu0 0
      %300 = vmatprep.subr.bf16.mxu0 0
      %301 = vmatpush2.bf16.msra.mxu0 0
      %302 = vmatprep.subr.bf16.mxu0 0
      %303 = vmatpush2.bf16.msra.mxu0 0
      %304 = vmatprep.subr.bf16.mxu0 0
      %305 = vmatpush2.bf16.msra.mxu0 0
      %306 = vmatprep.subr.bf16.mxu0 0
      %307 = vmatpush2.bf16.msra.mxu0 0
      %308 = vmatprep.subr.bf16.mxu0 0
      %309 = vmatpush2.bf16.msra.mxu0 0
      %310 = vmatprep.subr.bf16.mxu0 0
      %311 = vmatpush2.bf16.msra.mxu0 %v257
      %312 = vmatprep.mubr.bf16.mxu0 %v269
      %313 = vmatmul.mubr.bf16.gmra.mxu0 %v201
      %v314 = vpop.f32.mrf.mxu0
      %v315 = vadd.f32 0.0, %v314
      %v316 = vpop.f32.mrf.mxu0
      %v317 = vpop.f32.mrf.mxu0
      %v318 = vadd.f32 0.0, %v317
      %v319 = vpop.f32.mrf.mxu0
      %320 = vmatprep.mubr.bf16.mxu0 %v272
      %321 = vmatmul.mubr.bf16.gmra.mxu0 %v203
      %v322 = vpop.f32.mrf.mxu0
      %v323 = vadd.f32 0.0, %v322
      %v324 = vpop.f32.mrf.mxu0
      %v325 = vpop.f32.mrf.mxu0
      %v326 = vadd.f32 0.0, %v325
      %v327 = vpop.f32.mrf.mxu0
      %328 = vmatprep.mubr.bf16.mxu0 %v275
      %329 = vmatmul.mubr.bf16.gmra.mxu0 %v205
      %v330 = vpop.f32.mrf.mxu0
      %v331 = vadd.f32 0.0, %v330
      %v332 = vpop.f32.mrf.mxu0
      %v333 = vpop.f32.mrf.mxu0
      %v334 = vadd.f32 0.0, %v333
      %v335 = vpop.f32.mrf.mxu0
      %336 = vmatprep.mubr.bf16.mxu0 %v278
      %337 = vmatmul.mubr.bf16.gmra.mxu0 %v207
      %v338 = vpop.f32.mrf.mxu0
      %v339 = vadd.f32 0.0, %v338
      %v340 = vpop.f32.mrf.mxu0
      %v341 = vpop.f32.mrf.mxu0
      %v342 = vadd.f32 0.0, %v341
      %v343 = vpop.f32.mrf.mxu0
      %344 = vdwg.mxu0
      %v345 = vmax.f32 %v315, 0.0
      %v346 = vmax.f32 %v318, 0.0
      %v347 = vmax.f32 %v323, 0.0
      %v348 = vmax.f32 %v326, 0.0
      %v349 = vmax.f32 %v331, 0.0
      %v350 = vmax.f32 %v334, 0.0
      %v351 = vmax.f32 %v339, 0.0
      %v352 = vmax.f32 %v342, 0.0
      %353 = vst.msk [vmem:[%s148] sm:$0xff] %vm267, %v345
      %354 = vst.msk [vmem:[%s148 + $0x8] sm:$0xff] %vm267, %v346
      %355 = vst.msk [vmem:[%s148 + $0x10] sm:$0xff] %vm267, %v347
      %356 = vst.msk [vmem:[%s148 + $0x18] sm:$0xff] %vm267, %v348
      %357 = vst.msk [vmem:[%s148 + $0x20] sm:$0xff] %vm267, %v349
      %358 = vst.msk [vmem:[%s148 + $0x28] sm:$0xff] %vm267, %v350
      %359 = vst.msk [vmem:[%s148 + $0x30] sm:$0xff] %vm267, %v351
      %360 = vst.msk [vmem:[%s148 + $0x38] sm:$0xff] %vm267, %v352
      %s361 = smul.u32 8, %s13
      %p362 = scmp.lt.s32.totalorder %s361, 15
      %s363 = scalar_select %p362, %s361, 15
      %s364 = smul.addr %s363, 8
      %s365 = scalar_lea.vmem %s2, %s364
      // Predicated region
      $region29: #{uresencoder_forward.17} parent=27 // pred_check
        %p366 = pneg %p78
      $region30: #{uresencoder_forward.17} parent=27 // pred_check_branch
        %368 = sbr.rel (%p366) target = $region32
      $region31: #{uresencoder_forward.17} parent=27 // pred_region
        %s369 = smul.u32 8, %s13
      $region32: #{uresencoder_forward.17} parent=27 // pred_fallthru
        _
    $region28: #{uresencoder_forward.17} parent=5 // pred_fallthru
      _
    %p370 = scmp.le.s32.totalorder 2, %s8
    // Predicated region
    $region33: #{uresencoder_forward.17} parent=5 // pred_check
      %p371 = pneg %p370
    $region34: #{uresencoder_forward.17} parent=5 // pred_check_branch
      %373 = sbr.rel (%p371) target = $region36
    $region35: #{uresencoder_forward.17} parent=5 // pred_region
      %s374 = ssub.s32 %s8, 2
      // Predicated region
      $region37: #{uresencoder_forward.17} parent=35 // pred_check
        %p375 = pneg %p84
      $region38: #{uresencoder_forward.17} parent=35 // pred_check_branch
        %377 = sbr.rel (%p375) target = $region40
      $region39: #{uresencoder_forward.17} parent=35 // pred_region
        %s378 = smul.u32 8, %s14
        %p379 = scmp.lt.s32.totalorder %s378, 15
        %s380 = scalar_select %p379, %s378, 15
        %s381 = smul.addr %s380, 8
        %s382 = scalar_lea.vmem %s2, %s381
      $region40: #{uresencoder_forward.17} parent=35 // pred_fallthru
        _
    $region36: #{uresencoder_forward.17} parent=5 // pred_fallthru
      _
  $region6: #{uresencoder_forward.17} parent=0 // loop_footer
    %s12 = sadd.s32 1, %s8
  $region7: #{uresencoder_forward.17} parent=0 // loop_footer_branch
    %7 = sbr.rel target = $region3
  $region8: #{uresencoder_forward.17} parent=0 // loop_exit
    _

// kernel: uresencoder_forward.19
$region0: #{uresencoder_forward.19}
  #allocation0 [shape = 'u32[]', space=smem, size = 0x4, offset = 0x4, fixed_abs, tag = 'smem constant byte address 0x4 - core index']
  #allocation1 [shape = 'u32[144,128]{1,0:T(1,128)}', space=vmem, size = 0x12000, scoped, tag = 'internal scratch']
  %s0 = inlined_call_operand.vmem [shape: bf16[32,144], index: 0, kind: input, shape index: {}]
  %s1 = inlined_call_operand.vmem [shape: bf16[144,32], index: 1, kind: input, shape index: {}]
  %s2 = inlined_call_operand.vmem [shape: f32[32,32], index: 2, kind: output, shape index: {}]
  %s3 = sld [smem:[#allocation0]]
  $region41: #{uresencoder_forward.19} parent=0
    _
  %s5 = ssub.s32 1, %s3
  %s6 = scalar_select 0, %s5, %s3
  loop: start=0, step=1, limit=4
  $region2: #{uresencoder_forward.19} parent=0 // loop_pre_header
    _
  $region3: #{uresencoder_forward.19} parent=0 // loop_header
    %s8 = sphi 0, %s12
    %p9 = scmp.ge.s32.totalorder %s8, 4
    %s18 = sphi 0, %s20
    %s21 = sphi 0, %s18
    %s22 = sphi 0, %s21
    %s38 = sphi 0, %s22
    %s42 = sphi 0, %s42
    %s44 = sphi 0, %s42
    %s45 = sphi 0, %s44
    %s59 = sphi 0, %s45
    %s65 = sphi 0, %s67
    %s68 = sphi 0, %s65
    %s69 = sphi 0, %s68
    %s85 = sphi 0, %s69
  $region4: #{uresencoder_forward.19} parent=0 // loop_header_branch
    %11 = sbr.rel (%p9) target = $region8
  $region5: #{uresencoder_forward.19} parent=0 // loop_body
    %s13 = ssub.s32 %s8, 1
    %s14 = ssub.s32 %s8, 2
    %s15 = sadd.s32 %s8, 1
    %s16 = ssub.s32 %s8, %s15
    %p17 = scmp.eq.s32.totalorder %s16, 0
    %s19 = sadd.s32 %s18, 1
    %s20 = scalar_select %p17, %s18, %s19
    %p23 = pneg %p17
    %p24 = scmp.eq.s32.totalorder %s8, 1
    %p25 = por %p23, %p24
    %p26 = scmp.ne.s32.totalorder %s18, %s21
    %p27 = scmp.eq.s32.totalorder %s8, 0
    %p28 = por %p26, %p27
    %p29 = scmp.ne.s32.totalorder %s18, %s21
    %p30 = scmp.eq.s32.totalorder %s13, 1
    %p31 = por %p29, %p30
    %p32 = scmp.ne.s32.totalorder %s21, %s22
    %p33 = scmp.eq.s32.totalorder %s13, 0
    %p34 = por %p32, %p33
    %p35 = scmp.ne.s32.totalorder %s21, %s22
    %p36 = scmp.eq.s32.totalorder %s14, 1
    %p37 = por %p35, %p36
    %p39 = scmp.ne.s32.totalorder %s22, %s38
    %p40 = scmp.eq.s32.totalorder %s14, 0
    %p41 = por %p39, %p40
    %s43 = sadd.s32 %s42, 1
    %p46 = scmp.eq.s32.totalorder %s8, 1
    %p47 = scmp.ne.s32.totalorder %s42, %s44
    %p48 = scmp.eq.s32.totalorder %s8, 0
    %p49 = por %p47, %p48
    %p50 = scmp.ne.s32.totalorder %s42, %s44
    %p51 = scmp.eq.s32.totalorder %s13, 1
    %p52 = por %p50, %p51
    %p53 = scmp.ne.s32.totalorder %s44, %s45
    %p54 = scmp.eq.s32.totalorder %s13, 0
    %p55 = por %p53, %p54
    %p56 = scmp.ne.s32.totalorder %s44, %s45
    %p57 = scmp.eq.s32.totalorder %s14, 1
    %p58 = por %p56, %p57
    %p60 = scmp.ne.s32.totalorder %s45, %s59
    %p61 = scmp.eq.s32.totalorder %s14, 0
    %p62 = por %p60, %p61
    %s63 = ssub.s32 %s8, %s15
    %p64 = scmp.eq.s32.totalorder %s63, 0
    %s66 = sadd.s32 %s65, 1
    %s67 = scalar_select %p64, %s65, %s66
    %p70 = pneg %p64
    %p71 = scmp.eq.s32.totalorder %s8, 1
    %p72 = por %p70, %p71
    %p73 = scmp.ne.s32.totalorder %s65, %s68
    %p74 = scmp.eq.s32.totalorder %s8, 0
    %p75 = por %p73, %p74
    %p76 = scmp.ne.s32.totalorder %s65, %s68
    %p77 = scmp.eq.s32.totalorder %s13, 1
    %p78 = por %p76, %p77
    %p79 = scmp.ne.s32.totalorder %s68, %s69
    %p80 = scmp.eq.s32.totalorder %s13, 0
    %p81 = por %p79, %p80
    %p82 = scmp.ne.s32.totalorder %s68, %s69
    %p83 = scmp.eq.s32.totalorder %s14, 1
    %p84 = por %p82, %p83
    %p86 = scmp.ne.s32.totalorder %s69, %s85
    %p87 = scmp.eq.s32.totalorder %s14, 0
    %p88 = por %p86, %p87
    %p89 = scmp.le.s32.totalorder 1, %s8
    %p90 = scmp.lt.s32.totalorder %s8, 3
    %p91 = pnand %p89, %p90
    %p92 = pneg %p91
    // Predicated region
    $region9: #{uresencoder_forward.19} parent=5 // pred_check
      _
    $region10: #{uresencoder_forward.19} parent=5 // pred_check_branch
      %94 = sbr.rel (%p91) target = $region12
    $region11: #{uresencoder_forward.19} parent=5 // pred_region
      %s95 = ssub.s32 %s8, 1
      // Predicated region
      $region13: #{uresencoder_forward.19} parent=11 // pred_check
        %p96 = pneg %p55
      $region14: #{uresencoder_forward.19} parent=11 // pred_check_branch
        %98 = sbr.rel (%p96) target = $region16
      $region15: #{uresencoder_forward.19} parent=11 // pred_region
        _
      $region16: #{uresencoder_forward.19} parent=11 // pred_fallthru
        _
    $region12: #{uresencoder_forward.19} parent=5 // pred_fallthru
      _
    %p99 = scmp.lt.s32.totalorder %s8, 2
    // Predicated region
    $region17: #{uresencoder_forward.19} parent=5 // pred_check
      %p100 = pneg %p99
    $region18: #{uresencoder_forward.19} parent=5 // pred_check_branch
      %102 = sbr.rel (%p100) target = $region20
    $region19: #{uresencoder_forward.19} parent=5 // pred_region
      // Predicated region
      $region21: #{uresencoder_forward.19} parent=19 // pred_check
        %p103 = pneg %p28
      $region22: #{uresencoder_forward.19} parent=19 // pred_check_branch
        %105 = sbr.rel (%p103) target = $region24
      $region23: #{uresencoder_forward.19} parent=19 // pred_region
        %s106 = smul.u32 2, %s8
        %p107 = scmp.lt.s32.totalorder %s106, 3
        %s108 = scalar_select %p107, %s106, 3
        %s109 = smul.addr %s108, 2
        %s110 = smul.addr %s109, 4
        %s111 = scalar_lea.vmem %s0, %s110
        %s112 = smul.u32 2, %s8
      $region24: #{uresencoder_forward.19} parent=19 // pred_fallthru
        _
    $region20: #{uresencoder_forward.19} parent=5 // pred_fallthru
      _
    %p113 = scmp.le.s32.totalorder 1, %s8
    %p114 = scmp.lt.s32.totalorder %s8, 3
    %p115 = pnand %p113, %p114
    %p116 = pneg %p115
    // Predicated region
    $region25: #{uresencoder_forward.19} parent=5 // pred_check
      _
    $region26: #{uresencoder_forward.19} parent=5 // pred_check_branch
      %118 = sbr.rel (%p115) target = $region28
    $region27: #{uresencoder_forward.19} parent=5 // pred_region
      %s119 = ssub.s32 %s8, 1
      %s120 = smul.u32 2, %s13
      %p121 = scmp.lt.s32.totalorder %s120, 3
      %s122 = scalar_select %p121, %s120, 3
      %s123 = smul.addr %s122, 2
      %s124 = smul.addr %s123, 4
      %s125 = scalar_lea.vmem %s0, %s124
      %p126 = pneg %p34
      %p127 = pneg %p31
      %p128 = pneg %p55
      %p129 = pneg %p52
      %p130 = pneg %p81
      %p131 = pneg %p78
      %s132 = smul.u32 2, %s13
      %p133 = scmp.lt.s32.totalorder %s132, 3
      %s134 = scalar_select %p133, %s132, 3
      %s135 = smul.addr %s134, 8
      %s136 = scalar_lea.vmem %s2, %s135
      %s137 = smul.u32 2, %s13
      %p138 = scmp.lt.s32.totalorder %s137, 3
      %s139 = scalar_select %p138, %s137, 3
      %s140 = smul.addr %s139, 2
      %s141 = smul.addr %s140, 4
      %s142 = scalar_lea.vmem %s0, %s141
      %s143 = smul.u32 2, %s13
      %s144 = smul.u32 2, %s13
      %p145 = scmp.lt.s32.totalorder %s144, 3
      %s146 = scalar_select %p145, %s144, 3
      %s147 = smul.addr %s146, 8
      %s148 = scalar_lea.vmem %s2, %s147
      %s149 = smul.u32 2, %s13
      %v151 = vld [vmem:[%s142] sm:$0xff]
      %v152 = vld [vmem:[%s142 + $0x8] sm:$0xff]
      %v153 = vld [vmem:[%s1] sm:$0xf]
      %v154 = vld [vmem:[%s1 + $0x4] sm:$0xf]
      %v155 = vld [vmem:[%s1 + $0x8] sm:$0xf]
      %v156 = vld [vmem:[%s1 + $0xc] sm:$0xf]
      %v157 = vld [vmem:[%s1 + $0x10] sm:$0xf]
      %v158 = vld [vmem:[%s1 + $0x14] sm:$0xf]
      %v159 = vld [vmem:[%s1 + $0x18] sm:$0xf]
      %v160 = vld [vmem:[%s1 + $0x1c] sm:$0xf]
      %v161 = vld [vmem:[%s1 + $0x20] sm:$0xf]
      %v162 = vld [vmem:[%s1 + $0x24] sm:$0xf]
      %v163 = vld [vmem:[%s1 + $0x28] sm:$0xf]
      %v164 = vld [vmem:[%s1 + $0x2c] sm:$0xf]
      %v165 = vld [vmem:[%s1 + $0x30] sm:$0xf]
      %v166 = vld [vmem:[%s1 + $0x34] sm:$0xf]
      %v167 = vld [vmem:[%s1 + $0x38] sm:$0xf]
      %v168 = vld [vmem:[%s1 + $0x3c] sm:$0xf]
      %v169 = vld [vmem:[%s1 + $0x40] sm:$0xf]
      %v170 = vld [vmem:[%s1 + $0x44] sm:$0xf]
      %v173 = vunpack.c.l.b16 %v151
      %v174 = vunpack.c.h.b16 %v151
      %v175 = vunpack.c.l.b16 %v152
      %v176 = vunpack.c.h.b16 %v152
      %v177 = vpack.c.b16 %v175, %v173
      %v178 = vpack.c.b16 %v176, %v174
      %v198 = vunpack.c.l.b16 %v153
      %v199 = vunpack.c.l.b16 %v154
      %v200 = vunpack.c.l.b16 %v155
      %v201 = vunpack.c.l.b16 %v156
      %v202 = vunpack.c.l.b16 %v157
      %v203 = vunpack.c.l.b16 %v158
      %v204 = vunpack.c.l.b16 %v159
      %v205 = vunpack.c.l.b16 %v160
      %v206 = vunpack.c.l.b16 %v161
      %v207 = vunpack.c.l.b16 %v162
      %v208 = vunpack.c.l.b16 %v163
      %v209 = vunpack.c.l.b16 %v164
      %v210 = vunpack.c.l.b16 %v165
      %v211 = vunpack.c.l.b16 %v166
      %v212 = vunpack.c.l.b16 %v167
      %v213 = vunpack.c.l.b16 %v168
      %v214 = vunpack.c.l.b16 %v169
      %v215 = vunpack.c.l.b16 %v170
      %v216 = vpack.c.b16 %v199, %v198
      %v217 = vpack.c.b16 %v201, %v200
      %v218 = vpack.c.b16 %v203, %v202
      %v219 = vpack.c.b16 %v205, %v204
      %v220 = vpack.c.b16 %v207, %v206
      %v221 = vpack.c.b16 %v209, %v208
      %v222 = vpack.c.b16 %v211, %v210
      %v223 = vpack.c.b16 %v213, %v212
      %v224 = vpack.c.b16 %v215, %v214
      %vm234 = vcmask 130048
      %v236 = vsel %vm234, %v178, 0
      %238 = vmatprep.subr.bf16.mxu0 0
      %239 = vmatpush1.bf16.msra.mxu0 %v223
      %240 = vmatprep.subr.bf16.mxu0 0
      %241 = vmatpush1.bf16.msra.mxu0 %v222
      %242 = vmatprep.subr.bf16.mxu0 0
      %243 = vmatpush1.bf16.msra.mxu0 %v221
      %244 = vmatprep.subr.bf16.mxu0 0
      %245 = vmatpush1.bf16.msra.mxu0 %v220
      %246 = vmatprep.subr.bf16.mxu0 0
      %247 = vmatpush1.bf16.msra.mxu0 %v219
      %248 = vmatprep.subr.bf16.mxu0 0
      %249 = vmatpush1.bf16.msra.mxu0 %v218
      %250 = vmatprep.subr.bf16.mxu0 0
      %251 = vmatpush1.bf16.msra.mxu0 %v217
      %252 = vmatprep.subr.bf16.mxu0 0
      %253 = vmatpush1.bf16.msra.mxu0 %v216
      %254 = vmatprep.subr.bf16.mxu0 0
      %255 = vmatpush2.bf16.msra.mxu0 0
      %256 = vmatprep.subr.bf16.mxu0 0
      %257 = vmatpush2.bf16.msra.mxu0 0
      %258 = vmatprep.subr.bf16.mxu0 0
      %259 = vmatpush2.bf16.msra.mxu0 0
      %260 = vmatprep.subr.bf16.mxu0 0
      %261 = vmatpush2.bf16.msra.mxu0 0
      %262 = vmatprep.subr.bf16.mxu0 0
      %263 = vmatpush2.bf16.msra.mxu0 0
      %264 = vmatprep.subr.bf16.mxu0 0
      %265 = vmatpush2.bf16.msra.mxu0 0
      %266 = vmatprep.subr.bf16.mxu0 0
      %267 = vmatpush2.bf16.msra.mxu0 0
      %268 = vmatprep.subr.bf16.mxu0 0
      %269 = vmatpush2.bf16.msra.mxu0 %v224
      %270 = vmatprep.mubr.bf16.mxu0 %v236
      %271 = vmatmul.mubr.bf16.gmra.mxu0 %v177
      %v272 = vpop.f32.mrf.mxu0
      %v273 = vadd.f32 0.0, %v272
      %v274 = vpop.f32.mrf.mxu0
      %v275 = vpop.f32.mrf.mxu0
      %v276 = vadd.f32 0.0, %v275
      %v277 = vpop.f32.mrf.mxu0
      %278 = vdwg.mxu0
      %v279 = vmax.f32 %v273, 0.0
      %v280 = vmax.f32 %v276, 0.0
      %vm281 = vcmask 261120
      %282 = vst.msk [vmem:[%s148] sm:$0xff] %vm281, %v279
      %283 = vst.msk [vmem:[%s148 + $0x8] sm:$0xff] %vm281, %v280
      %s284 = smul.u32 2, %s13
      %p285 = scmp.lt.s32.totalorder %s284, 3
      %s286 = scalar_select %p285, %s284, 3
      %s287 = smul.addr %s286, 8
      %s288 = scalar_lea.vmem %s2, %s287
      // Predicated region
      $region29: #{uresencoder_forward.19} parent=27 // pred_check
        %p289 = pneg %p78
      $region30: #{uresencoder_forward.19} parent=27 // pred_check_branch
        %291 = sbr.rel (%p289) target = $region32
      $region31: #{uresencoder_forward.19} parent=27 // pred_region
        %s292 = smul.u32 2, %s13
      $region32: #{uresencoder_forward.19} parent=27 // pred_fallthru
        _
    $region28: #{uresencoder_forward.19} parent=5 // pred_fallthru
      _
    %p293 = scmp.le.s32.totalorder 2, %s8
    // Predicated region
    $region33: #{uresencoder_forward.19} parent=5 // pred_check
      %p294 = pneg %p293
    $region34: #{uresencoder_forward.19} parent=5 // pred_check_branch
      %296 = sbr.rel (%p294) target = $region36
    $region35: #{uresencoder_forward.19} parent=5 // pred_region
      %s297 = ssub.s32 %s8, 2
      // Predicated region
      $region37: #{uresencoder_forward.19} parent=35 // pred_check
        %p298 = pneg %p84
      $region38: #{uresencoder_forward.19} parent=35 // pred_check_branch
        %300 = sbr.rel (%p298) target = $region40
      $region39: #{uresencoder_forward.19} parent=35 // pred_region
        %s301 = smul.u32 2, %s14
        %p302 = scmp.lt.s32.totalorder %s301, 3
        %s303 = scalar_select %p302, %s301, 3
        %s304 = smul.addr %s303, 8
        %s305 = scalar_lea.vmem %s2, %s304
      $region40: #{uresencoder_forward.19} parent=35 // pred_fallthru
        _
    $region36: #{uresencoder_forward.19} parent=5 // pred_fallthru
      _
  $region6: #{uresencoder_forward.19} parent=0 // loop_footer
    %s12 = sadd.s32 1, %s8
  $region7: #{uresencoder_forward.19} parent=0 // loop_footer_branch
    %7 = sbr.rel target = $region3
  $region8: #{uresencoder_forward.19} parent=0 // loop_exit
    _

// kernel: uresencoder_forward.20
$region0: #{uresencoder_forward.20}
  #allocation0 [shape = 'u32[]', space=smem, size = 0x4, offset = 0x4, fixed_abs, tag = 'smem constant byte address 0x4 - core index']
  #allocation1 [shape = 'u32[144,128]{1,0:T(1,128)}', space=vmem, size = 0x12000, scoped, tag = 'internal scratch']
  %s0 = inlined_call_operand.vmem [shape: bf16[32,144], index: 0, kind: input, shape index: {}]
  %s1 = inlined_call_operand.vmem [shape: bf16[144,32], index: 1, kind: input, shape index: {}]
  %s2 = inlined_call_operand.vmem [shape: f32[32,32], index: 2, kind: output, shape index: {}]
  %s3 = sld [smem:[#allocation0]]
  $region41: #{uresencoder_forward.20} parent=0
    _
  %s5 = ssub.s32 1, %s3
  %s6 = scalar_select 0, %s5, %s3
  loop: start=0, step=1, limit=4
  $region2: #{uresencoder_forward.20} parent=0 // loop_pre_header
    _
  $region3: #{uresencoder_forward.20} parent=0 // loop_header
    %s8 = sphi 0, %s12
    %p9 = scmp.ge.s32.totalorder %s8, 4
    %s18 = sphi 0, %s20
    %s21 = sphi 0, %s18
    %s22 = sphi 0, %s21
    %s38 = sphi 0, %s22
    %s42 = sphi 0, %s42
    %s44 = sphi 0, %s42
    %s45 = sphi 0, %s44
    %s59 = sphi 0, %s45
    %s65 = sphi 0, %s67
    %s68 = sphi 0, %s65
    %s69 = sphi 0, %s68
    %s85 = sphi 0, %s69
  $region4: #{uresencoder_forward.20} parent=0 // loop_header_branch
    %11 = sbr.rel (%p9) target = $region8
  $region5: #{uresencoder_forward.20} parent=0 // loop_body
    %s13 = ssub.s32 %s8, 1
    %s14 = ssub.s32 %s8, 2
    %s15 = sadd.s32 %s8, 1
    %s16 = ssub.s32 %s8, %s15
    %p17 = scmp.eq.s32.totalorder %s16, 0
    %s19 = sadd.s32 %s18, 1
    %s20 = scalar_select %p17, %s18, %s19
    %p23 = pneg %p17
    %p24 = scmp.eq.s32.totalorder %s8, 1
    %p25 = por %p23, %p24
    %p26 = scmp.ne.s32.totalorder %s18, %s21
    %p27 = scmp.eq.s32.totalorder %s8, 0
    %p28 = por %p26, %p27
    %p29 = scmp.ne.s32.totalorder %s18, %s21
    %p30 = scmp.eq.s32.totalorder %s13, 1
    %p31 = por %p29, %p30
    %p32 = scmp.ne.s32.totalorder %s21, %s22
    %p33 = scmp.eq.s32.totalorder %s13, 0
    %p34 = por %p32, %p33
    %p35 = scmp.ne.s32.totalorder %s21, %s22
    %p36 = scmp.eq.s32.totalorder %s14, 1
    %p37 = por %p35, %p36
    %p39 = scmp.ne.s32.totalorder %s22, %s38
    %p40 = scmp.eq.s32.totalorder %s14, 0
    %p41 = por %p39, %p40
    %s43 = sadd.s32 %s42, 1
    %p46 = scmp.eq.s32.totalorder %s8, 1
    %p47 = scmp.ne.s32.totalorder %s42, %s44
    %p48 = scmp.eq.s32.totalorder %s8, 0
    %p49 = por %p47, %p48
    %p50 = scmp.ne.s32.totalorder %s42, %s44
    %p51 = scmp.eq.s32.totalorder %s13, 1
    %p52 = por %p50, %p51
    %p53 = scmp.ne.s32.totalorder %s44, %s45
    %p54 = scmp.eq.s32.totalorder %s13, 0
    %p55 = por %p53, %p54
    %p56 = scmp.ne.s32.totalorder %s44, %s45
    %p57 = scmp.eq.s32.totalorder %s14, 1
    %p58 = por %p56, %p57
    %p60 = scmp.ne.s32.totalorder %s45, %s59
    %p61 = scmp.eq.s32.totalorder %s14, 0
    %p62 = por %p60, %p61
    %s63 = ssub.s32 %s8, %s15
    %p64 = scmp.eq.s32.totalorder %s63, 0
    %s66 = sadd.s32 %s65, 1
    %s67 = scalar_select %p64, %s65, %s66
    %p70 = pneg %p64
    %p71 = scmp.eq.s32.totalorder %s8, 1
    %p72 = por %p70, %p71
    %p73 = scmp.ne.s32.totalorder %s65, %s68
    %p74 = scmp.eq.s32.totalorder %s8, 0
    %p75 = por %p73, %p74
    %p76 = scmp.ne.s32.totalorder %s65, %s68
    %p77 = scmp.eq.s32.totalorder %s13, 1
    %p78 = por %p76, %p77
    %p79 = scmp.ne.s32.totalorder %s68, %s69
    %p80 = scmp.eq.s32.totalorder %s13, 0
    %p81 = por %p79, %p80
    %p82 = scmp.ne.s32.totalorder %s68, %s69
    %p83 = scmp.eq.s32.totalorder %s14, 1
    %p84 = por %p82, %p83
    %p86 = scmp.ne.s32.totalorder %s69, %s85
    %p87 = scmp.eq.s32.totalorder %s14, 0
    %p88 = por %p86, %p87
    %p89 = scmp.le.s32.totalorder 1, %s8
    %p90 = scmp.lt.s32.totalorder %s8, 3
    %p91 = pnand %p89, %p90
    %p92 = pneg %p91
    // Predicated region
    $region9: #{uresencoder_forward.20} parent=5 // pred_check
      _
    $region10: #{uresencoder_forward.20} parent=5 // pred_check_branch
      %94 = sbr.rel (%p91) target = $region12
    $region11: #{uresencoder_forward.20} parent=5 // pred_region
      %s95 = ssub.s32 %s8, 1
      // Predicated region
      $region13: #{uresencoder_forward.20} parent=11 // pred_check
        %p96 = pneg %p55
      $region14: #{uresencoder_forward.20} parent=11 // pred_check_branch
        %98 = sbr.rel (%p96) target = $region16
      $region15: #{uresencoder_forward.20} parent=11 // pred_region
        _
      $region16: #{uresencoder_forward.20} parent=11 // pred_fallthru
        _
    $region12: #{uresencoder_forward.20} parent=5 // pred_fallthru
      _
    %p99 = scmp.lt.s32.totalorder %s8, 2
    // Predicated region
    $region17: #{uresencoder_forward.20} parent=5 // pred_check
      %p100 = pneg %p99
    $region18: #{uresencoder_forward.20} parent=5 // pred_check_branch
      %102 = sbr.rel (%p100) target = $region20
    $region19: #{uresencoder_forward.20} parent=5 // pred_region
      // Predicated region
      $region21: #{uresencoder_forward.20} parent=19 // pred_check
        %p103 = pneg %p28
      $region22: #{uresencoder_forward.20} parent=19 // pred_check_branch
        %105 = sbr.rel (%p103) target = $region24
      $region23: #{uresencoder_forward.20} parent=19 // pred_region
        %s106 = smul.u32 2, %s8
        %p107 = scmp.lt.s32.totalorder %s106, 3
        %s108 = scalar_select %p107, %s106, 3
        %s109 = smul.addr %s108, 2
        %s110 = smul.addr %s109, 4
        %s111 = scalar_lea.vmem %s0, %s110
        %s112 = smul.u32 2, %s8
      $region24: #{uresencoder_forward.20} parent=19 // pred_fallthru
        _
    $region20: #{uresencoder_forward.20} parent=5 // pred_fallthru
      _
    %p113 = scmp.le.s32.totalorder 1, %s8
    %p114 = scmp.lt.s32.totalorder %s8, 3
    %p115 = pnand %p113, %p114
    %p116 = pneg %p115
    // Predicated region
    $region25: #{uresencoder_forward.20} parent=5 // pred_check
      _
    $region26: #{uresencoder_forward.20} parent=5 // pred_check_branch
      %118 = sbr.rel (%p115) target = $region28
    $region27: #{uresencoder_forward.20} parent=5 // pred_region
      %s119 = ssub.s32 %s8, 1
      %s120 = smul.u32 2, %s13
      %p121 = scmp.lt.s32.totalorder %s120, 3
      %s122 = scalar_select %p121, %s120, 3
      %s123 = smul.addr %s122, 2
      %s124 = smul.addr %s123, 4
      %s125 = scalar_lea.vmem %s0, %s124
      %p126 = pneg %p34
      %p127 = pneg %p31
      %p128 = pneg %p55
      %p129 = pneg %p52
      %p130 = pneg %p81
      %p131 = pneg %p78
      %s132 = smul.u32 2, %s13
      %p133 = scmp.lt.s32.totalorder %s132, 3
      %s134 = scalar_select %p133, %s132, 3
      %s135 = smul.addr %s134, 8
      %s136 = scalar_lea.vmem %s2, %s135
      %s137 = smul.u32 2, %s13
      %p138 = scmp.lt.s32.totalorder %s137, 3
      %s139 = scalar_select %p138, %s137, 3
      %s140 = smul.addr %s139, 2
      %s141 = smul.addr %s140, 4
      %s142 = scalar_lea.vmem %s0, %s141
      %s143 = smul.u32 2, %s13
      %s144 = smul.u32 2, %s13
      %p145 = scmp.lt.s32.totalorder %s144, 3
      %s146 = scalar_select %p145, %s144, 3
      %s147 = smul.addr %s146, 8
      %s148 = scalar_lea.vmem %s2, %s147
      %s149 = smul.u32 2, %s13
      %v151 = vld [vmem:[%s142] sm:$0xff]
      %v152 = vld [vmem:[%s142 + $0x8] sm:$0xff]
      %v153 = vld [vmem:[%s1] sm:$0xf]
      %v154 = vld [vmem:[%s1 + $0x4] sm:$0xf]
      %v155 = vld [vmem:[%s1 + $0x8] sm:$0xf]
      %v156 = vld [vmem:[%s1 + $0xc] sm:$0xf]
      %v157 = vld [vmem:[%s1 + $0x10] sm:$0xf]
      %v158 = vld [vmem:[%s1 + $0x14] sm:$0xf]
      %v159 = vld [vmem:[%s1 + $0x18] sm:$0xf]
      %v160 = vld [vmem:[%s1 + $0x1c] sm:$0xf]
      %v161 = vld [vmem:[%s1 + $0x20] sm:$0xf]
      %v162 = vld [vmem:[%s1 + $0x24] sm:$0xf]
      %v163 = vld [vmem:[%s1 + $0x28] sm:$0xf]
      %v164 = vld [vmem:[%s1 + $0x2c] sm:$0xf]
      %v165 = vld [vmem:[%s1 + $0x30] sm:$0xf]
      %v166 = vld [vmem:[%s1 + $0x34] sm:$0xf]
      %v167 = vld [vmem:[%s1 + $0x38] sm:$0xf]
      %v168 = vld [vmem:[%s1 + $0x3c] sm:$0xf]
      %v169 = vld [vmem:[%s1 + $0x40] sm:$0xf]
      %v170 = vld [vmem:[%s1 + $0x44] sm:$0xf]
      %v173 = vunpack.c.l.b16 %v151
      %v174 = vunpack.c.h.b16 %v151
      %v175 = vunpack.c.l.b16 %v152
      %v176 = vunpack.c.h.b16 %v152
      %v177 = vpack.c.b16 %v175, %v173
      %v178 = vpack.c.b16 %v176, %v174
      %v198 = vunpack.c.l.b16 %v153
      %v199 = vunpack.c.l.b16 %v154
      %v200 = vunpack.c.l.b16 %v155
      %v201 = vunpack.c.l.b16 %v156
      %v202 = vunpack.c.l.b16 %v157
      %v203 = vunpack.c.l.b16 %v158
      %v204 = vunpack.c.l.b16 %v159
      %v205 = vunpack.c.l.b16 %v160
      %v206 = vunpack.c.l.b16 %v161
      %v207 = vunpack.c.l.b16 %v162
      %v208 = vunpack.c.l.b16 %v163
      %v209 = vunpack.c.l.b16 %v164
      %v210 = vunpack.c.l.b16 %v165
      %v211 = vunpack.c.l.b16 %v166
      %v212 = vunpack.c.l.b16 %v167
      %v213 = vunpack.c.l.b16 %v168
      %v214 = vunpack.c.l.b16 %v169
      %v215 = vunpack.c.l.b16 %v170
      %v216 = vpack.c.b16 %v199, %v198
      %v217 = vpack.c.b16 %v201, %v200
      %v218 = vpack.c.b16 %v203, %v202
      %v219 = vpack.c.b16 %v205, %v204
      %v220 = vpack.c.b16 %v207, %v206
      %v221 = vpack.c.b16 %v209, %v208
      %v222 = vpack.c.b16 %v211, %v210
      %v223 = vpack.c.b16 %v213, %v212
      %v224 = vpack.c.b16 %v215, %v214
      %vm234 = vcmask 130048
      %v236 = vsel %vm234, %v178, 0
      %238 = vmatprep.subr.bf16.mxu0 0
      %239 = vmatpush1.bf16.msra.mxu0 %v223
      %240 = vmatprep.subr.bf16.mxu0 0
      %241 = vmatpush1.bf16.msra.mxu0 %v222
      %242 = vmatprep.subr.bf16.mxu0 0
      %243 = vmatpush1.bf16.msra.mxu0 %v221
      %244 = vmatprep.subr.bf16.mxu0 0
      %245 = vmatpush1.bf16.msra.mxu0 %v220
      %246 = vmatprep.subr.bf16.mxu0 0
      %247 = vmatpush1.bf16.msra.mxu0 %v219
      %248 = vmatprep.subr.bf16.mxu0 0
      %249 = vmatpush1.bf16.msra.mxu0 %v218
      %250 = vmatprep.subr.bf16.mxu0 0
      %251 = vmatpush1.bf16.msra.mxu0 %v217
      %252 = vmatprep.subr.bf16.mxu0 0
      %253 = vmatpush1.bf16.msra.mxu0 %v216
      %254 = vmatprep.subr.bf16.mxu0 0
      %255 = vmatpush2.bf16.msra.mxu0 0
      %256 = vmatprep.subr.bf16.mxu0 0
      %257 = vmatpush2.bf16.msra.mxu0 0
      %258 = vmatprep.subr.bf16.mxu0 0
      %259 = vmatpush2.bf16.msra.mxu0 0
      %260 = vmatprep.subr.bf16.mxu0 0
      %261 = vmatpush2.bf16.msra.mxu0 0
      %262 = vmatprep.subr.bf16.mxu0 0
      %263 = vmatpush2.bf16.msra.mxu0 0
      %264 = vmatprep.subr.bf16.mxu0 0
      %265 = vmatpush2.bf16.msra.mxu0 0
      %266 = vmatprep.subr.bf16.mxu0 0
      %267 = vmatpush2.bf16.msra.mxu0 0
      %268 = vmatprep.subr.bf16.mxu0 0
      %269 = vmatpush2.bf16.msra.mxu0 %v224
      %270 = vmatprep.mubr.bf16.mxu0 %v236
      %271 = vmatmul.mubr.bf16.gmra.mxu0 %v177
      %v272 = vpop.f32.mrf.mxu0
      %v273 = vadd.f32 0.0, %v272
      %v274 = vpop.f32.mrf.mxu0
      %v275 = vpop.f32.mrf.mxu0
      %v276 = vadd.f32 0.0, %v275
      %v277 = vpop.f32.mrf.mxu0
      %278 = vdwg.mxu0
      %vm279 = vcmask 261120
      %280 = vst.msk [vmem:[%s148] sm:$0xff] %vm279, %v273
      %281 = vst.msk [vmem:[%s148 + $0x8] sm:$0xff] %vm279, %v276
      %s282 = smul.u32 2, %s13
      %p283 = scmp.lt.s32.totalorder %s282, 3
      %s284 = scalar_select %p283, %s282, 3
      %s285 = smul.addr %s284, 8
      %s286 = scalar_lea.vmem %s2, %s285
      // Predicated region
      $region29: #{uresencoder_forward.20} parent=27 // pred_check
        %p287 = pneg %p78
      $region30: #{uresencoder_forward.20} parent=27 // pred_check_branch
        %289 = sbr.rel (%p287) target = $region32
      $region31: #{uresencoder_forward.20} parent=27 // pred_region
        %s290 = smul.u32 2, %s13
      $region32: #{uresencoder_forward.20} parent=27 // pred_fallthru
        _
    $region28: #{uresencoder_forward.20} parent=5 // pred_fallthru
      _
    %p291 = scmp.le.s32.totalorder 2, %s8
    // Predicated region
    $region33: #{uresencoder_forward.20} parent=5 // pred_check
      %p292 = pneg %p291
    $region34: #{uresencoder_forward.20} parent=5 // pred_check_branch
      %294 = sbr.rel (%p292) target = $region36
    $region35: #{uresencoder_forward.20} parent=5 // pred_region
      %s295 = ssub.s32 %s8, 2
      // Predicated region
      $region37: #{uresencoder_forward.20} parent=35 // pred_check
        %p296 = pneg %p84
      $region38: #{uresencoder_forward.20} parent=35 // pred_check_branch
        %298 = sbr.rel (%p296) target = $region40
      $region39: #{uresencoder_forward.20} parent=35 // pred_region
        %s299 = smul.u32 2, %s14
        %p300 = scmp.lt.s32.totalorder %s299, 3
        %s301 = scalar_select %p300, %s299, 3
        %s302 = smul.addr %s301, 8
        %s303 = scalar_lea.vmem %s2, %s302
      $region40: #{uresencoder_forward.20} parent=35 // pred_fallthru
        _
    $region36: #{uresencoder_forward.20} parent=5 // pred_fallthru
      _
  $region6: #{uresencoder_forward.20} parent=0 // loop_footer
    %s12 = sadd.s32 1, %s8
  $region7: #{uresencoder_forward.20} parent=0 // loop_footer_branch
    %7 = sbr.rel target = $region3
  $region8: #{uresencoder_forward.20} parent=0 // loop_exit
    _

// kernel: uresencoder_forward.22
$region0: #{uresencoder_forward.22}
  #allocation0 [shape = 'u32[]', space=smem, size = 0x4, offset = 0x4, fixed_abs, tag = 'smem constant byte address 0x4 - core index']
  #allocation1 [shape = 'u32[144,128]{1,0:T(1,128)}', space=vmem, size = 0x12000, scoped, tag = 'internal scratch']
  %s0 = inlined_call_operand.vmem [shape: bf16[32,288], index: 0, kind: input, shape index: {}]
  %s1 = inlined_call_operand.vmem [shape: bf16[288,32], index: 1, kind: input, shape index: {}]
  %s2 = inlined_call_operand.vmem [shape: f32[32,32], index: 2, kind: output, shape index: {}]
  %s3 = sld [smem:[#allocation0]]
  $region41: #{uresencoder_forward.22} parent=0
    _
  %s5 = ssub.s32 1, %s3
  %s6 = scalar_select 0, %s5, %s3
  loop: start=0, step=1, limit=4
  $region2: #{uresencoder_forward.22} parent=0 // loop_pre_header
    _
  $region3: #{uresencoder_forward.22} parent=0 // loop_header
    %s8 = sphi 0, %s12
    %p9 = scmp.ge.s32.totalorder %s8, 4
    %s18 = sphi 0, %s20
    %s21 = sphi 0, %s18
    %s22 = sphi 0, %s21
    %s38 = sphi 0, %s22
    %s42 = sphi 0, %s42
    %s44 = sphi 0, %s42
    %s45 = sphi 0, %s44
    %s59 = sphi 0, %s45
    %s65 = sphi 0, %s67
    %s68 = sphi 0, %s65
    %s69 = sphi 0, %s68
    %s85 = sphi 0, %s69
  $region4: #{uresencoder_forward.22} parent=0 // loop_header_branch
    %11 = sbr.rel (%p9) target = $region8
  $region5: #{uresencoder_forward.22} parent=0 // loop_body
    %s13 = ssub.s32 %s8, 1
    %s14 = ssub.s32 %s8, 2
    %s15 = sadd.s32 %s8, 1
    %s16 = ssub.s32 %s8, %s15
    %p17 = scmp.eq.s32.totalorder %s16, 0
    %s19 = sadd.s32 %s18, 1
    %s20 = scalar_select %p17, %s18, %s19
    %p23 = pneg %p17
    %p24 = scmp.eq.s32.totalorder %s8, 1
    %p25 = por %p23, %p24
    %p26 = scmp.ne.s32.totalorder %s18, %s21
    %p27 = scmp.eq.s32.totalorder %s8, 0
    %p28 = por %p26, %p27
    %p29 = scmp.ne.s32.totalorder %s18, %s21
    %p30 = scmp.eq.s32.totalorder %s13, 1
    %p31 = por %p29, %p30
    %p32 = scmp.ne.s32.totalorder %s21, %s22
    %p33 = scmp.eq.s32.totalorder %s13, 0
    %p34 = por %p32, %p33
    %p35 = scmp.ne.s32.totalorder %s21, %s22
    %p36 = scmp.eq.s32.totalorder %s14, 1
    %p37 = por %p35, %p36
    %p39 = scmp.ne.s32.totalorder %s22, %s38
    %p40 = scmp.eq.s32.totalorder %s14, 0
    %p41 = por %p39, %p40
    %s43 = sadd.s32 %s42, 1
    %p46 = scmp.eq.s32.totalorder %s8, 1
    %p47 = scmp.ne.s32.totalorder %s42, %s44
    %p48 = scmp.eq.s32.totalorder %s8, 0
    %p49 = por %p47, %p48
    %p50 = scmp.ne.s32.totalorder %s42, %s44
    %p51 = scmp.eq.s32.totalorder %s13, 1
    %p52 = por %p50, %p51
    %p53 = scmp.ne.s32.totalorder %s44, %s45
    %p54 = scmp.eq.s32.totalorder %s13, 0
    %p55 = por %p53, %p54
    %p56 = scmp.ne.s32.totalorder %s44, %s45
    %p57 = scmp.eq.s32.totalorder %s14, 1
    %p58 = por %p56, %p57
    %p60 = scmp.ne.s32.totalorder %s45, %s59
    %p61 = scmp.eq.s32.totalorder %s14, 0
    %p62 = por %p60, %p61
    %s63 = ssub.s32 %s8, %s15
    %p64 = scmp.eq.s32.totalorder %s63, 0
    %s66 = sadd.s32 %s65, 1
    %s67 = scalar_select %p64, %s65, %s66
    %p70 = pneg %p64
    %p71 = scmp.eq.s32.totalorder %s8, 1
    %p72 = por %p70, %p71
    %p73 = scmp.ne.s32.totalorder %s65, %s68
    %p74 = scmp.eq.s32.totalorder %s8, 0
    %p75 = por %p73, %p74
    %p76 = scmp.ne.s32.totalorder %s65, %s68
    %p77 = scmp.eq.s32.totalorder %s13, 1
    %p78 = por %p76, %p77
    %p79 = scmp.ne.s32.totalorder %s68, %s69
    %p80 = scmp.eq.s32.totalorder %s13, 0
    %p81 = por %p79, %p80
    %p82 = scmp.ne.s32.totalorder %s68, %s69
    %p83 = scmp.eq.s32.totalorder %s14, 1
    %p84 = por %p82, %p83
    %p86 = scmp.ne.s32.totalorder %s69, %s85
    %p87 = scmp.eq.s32.totalorder %s14, 0
    %p88 = por %p86, %p87
    %p89 = scmp.le.s32.totalorder 1, %s8
    %p90 = scmp.lt.s32.totalorder %s8, 3
    %p91 = pnand %p89, %p90
    %p92 = pneg %p91
    // Predicated region
    $region9: #{uresencoder_forward.22} parent=5 // pred_check
      _
    $region10: #{uresencoder_forward.22} parent=5 // pred_check_branch
      %94 = sbr.rel (%p91) target = $region12
    $region11: #{uresencoder_forward.22} parent=5 // pred_region
      %s95 = ssub.s32 %s8, 1
      // Predicated region
      $region13: #{uresencoder_forward.22} parent=11 // pred_check
        %p96 = pneg %p55
      $region14: #{uresencoder_forward.22} parent=11 // pred_check_branch
        %98 = sbr.rel (%p96) target = $region16
      $region15: #{uresencoder_forward.22} parent=11 // pred_region
        _
      $region16: #{uresencoder_forward.22} parent=11 // pred_fallthru
        _
    $region12: #{uresencoder_forward.22} parent=5 // pred_fallthru
      _
    %p99 = scmp.lt.s32.totalorder %s8, 2
    // Predicated region
    $region17: #{uresencoder_forward.22} parent=5 // pred_check
      %p100 = pneg %p99
    $region18: #{uresencoder_forward.22} parent=5 // pred_check_branch
      %102 = sbr.rel (%p100) target = $region20
    $region19: #{uresencoder_forward.22} parent=5 // pred_region
      // Predicated region
      $region21: #{uresencoder_forward.22} parent=19 // pred_check
        %p103 = pneg %p28
      $region22: #{uresencoder_forward.22} parent=19 // pred_check_branch
        %105 = sbr.rel (%p103) target = $region24
      $region23: #{uresencoder_forward.22} parent=19 // pred_region
        %s106 = smul.u32 2, %s8
        %p107 = scmp.lt.s32.totalorder %s106, 3
        %s108 = scalar_select %p107, %s106, 3
        %s109 = smul.addr %s108, 3
        %s110 = smul.addr %s109, 4
        %s111 = scalar_lea.vmem %s0, %s110
        %s112 = smul.u32 2, %s8
      $region24: #{uresencoder_forward.22} parent=19 // pred_fallthru
        _
    $region20: #{uresencoder_forward.22} parent=5 // pred_fallthru
      _
    %p113 = scmp.le.s32.totalorder 1, %s8
    %p114 = scmp.lt.s32.totalorder %s8, 3
    %p115 = pnand %p113, %p114
    %p116 = pneg %p115
    // Predicated region
    $region25: #{uresencoder_forward.22} parent=5 // pred_check
      _
    $region26: #{uresencoder_forward.22} parent=5 // pred_check_branch
      %118 = sbr.rel (%p115) target = $region28
    $region27: #{uresencoder_forward.22} parent=5 // pred_region
      %s119 = ssub.s32 %s8, 1
      %s120 = smul.u32 2, %s13
      %p121 = scmp.lt.s32.totalorder %s120, 3
      %s122 = scalar_select %p121, %s120, 3
      %s123 = smul.addr %s122, 3
      %s124 = smul.addr %s123, 4
      %s125 = scalar_lea.vmem %s0, %s124
      %p126 = pneg %p34
      %p127 = pneg %p31
      %p128 = pneg %p55
      %p129 = pneg %p52
      %p130 = pneg %p81
      %p131 = pneg %p78
      %s132 = smul.u32 2, %s13
      %p133 = scmp.lt.s32.totalorder %s132, 3
      %s134 = scalar_select %p133, %s132, 3
      %s135 = smul.addr %s134, 8
      %s136 = scalar_lea.vmem %s2, %s135
      %s137 = smul.u32 2, %s13
      %p138 = scmp.lt.s32.totalorder %s137, 3
      %s139 = scalar_select %p138, %s137, 3
      %s140 = smul.addr %s139, 3
      %s141 = smul.addr %s140, 4
      %s142 = scalar_lea.vmem %s0, %s141
      %s143 = smul.u32 2, %s13
      %s144 = smul.u32 2, %s13
      %p145 = scmp.lt.s32.totalorder %s144, 3
      %s146 = scalar_select %p145, %s144, 3
      %s147 = smul.addr %s146, 8
      %s148 = scalar_lea.vmem %s2, %s147
      %s149 = smul.u32 2, %s13
      %v151 = vld [vmem:[%s142] sm:$0xff]
      %v152 = vld [vmem:[%s142 + $0x8] sm:$0xf]
      %v153 = vld [vmem:[%s142 + $0xc] sm:$0xff]
      %v154 = vld [vmem:[%s142 + $0x14] sm:$0xf]
      %v155 = vld [vmem:[%s1] sm:$0xf]
      %v156 = vld [vmem:[%s1 + $0x4] sm:$0xf]
      %v157 = vld [vmem:[%s1 + $0x8] sm:$0xf]
      %v158 = vld [vmem:[%s1 + $0xc] sm:$0xf]
      %v159 = vld [vmem:[%s1 + $0x10] sm:$0xf]
      %v160 = vld [vmem:[%s1 + $0x14] sm:$0xf]
      %v161 = vld [vmem:[%s1 + $0x18] sm:$0xf]
      %v162 = vld [vmem:[%s1 + $0x1c] sm:$0xf]
      %v163 = vld [vmem:[%s1 + $0x20] sm:$0xf]
      %v164 = vld [vmem:[%s1 + $0x24] sm:$0xf]
      %v165 = vld [vmem:[%s1 + $0x28] sm:$0xf]
      %v166 = vld [vmem:[%s1 + $0x2c] sm:$0xf]
      %v167 = vld [vmem:[%s1 + $0x30] sm:$0xf]
      %v168 = vld [vmem:[%s1 + $0x34] sm:$0xf]
      %v169 = vld [vmem:[%s1 + $0x38] sm:$0xf]
      %v170 = vld [vmem:[%s1 + $0x3c] sm:$0xf]
      %v171 = vld [vmem:[%s1 + $0x40] sm:$0xf]
      %v172 = vld [vmem:[%s1 + $0x44] sm:$0xf]
      %v173 = vld [vmem:[%s1 + $0x48] sm:$0xf]
      %v174 = vld [vmem:[%s1 + $0x4c] sm:$0xf]
      %v175 = vld [vmem:[%s1 + $0x50] sm:$0xf]
      %v176 = vld [vmem:[%s1 + $0x54] sm:$0xf]
      %v177 = vld [vmem:[%s1 + $0x58] sm:$0xf]
      %v178 = vld [vmem:[%s1 + $0x5c] sm:$0xf]
      %v179 = vld [vmem:[%s1 + $0x60] sm:$0xf]
      %v180 = vld [vmem:[%s1 + $0x64] sm:$0xf]
      %v181 = vld [vmem:[%s1 + $0x68] sm:$0xf]
      %v182 = vld [vmem:[%s1 + $0x6c] sm:$0xf]
      %v183 = vld [vmem:[%s1 + $0x70] sm:$0xf]
      %v184 = vld [vmem:[%s1 + $0x74] sm:$0xf]
      %v185 = vld [vmem:[%s1 + $0x78] sm:$0xf]
      %v186 = vld [vmem:[%s1 + $0x7c] sm:$0xf]
      %v187 = vld [vmem:[%s1 + $0x80] sm:$0xf]
      %v188 = vld [vmem:[%s1 + $0x84] sm:$0xf]
      %v189 = vld [vmem:[%s1 + $0x88] sm:$0xf]
      %v190 = vld [vmem:[%s1 + $0x8c] sm:$0xf]
      %v195 = vunpack.c.l.b16 %v151
      %v196 = vunpack.c.h.b16 %v151
      %v197 = vunpack.c.l.b16 %v152
      %v198 = vunpack.c.l.b16 %v153
      %v199 = vunpack.c.h.b16 %v153
      %v200 = vunpack.c.l.b16 %v154
      %v201 = vpack.c.b16 %v198, %v195
      %v202 = vpack.c.b16 %v199, %v196
      %v203 = vpack.c.b16 %v200, %v197
      %v242 = vunpack.c.l.b16 %v155
      %v243 = vunpack.c.l.b16 %v156
      %v244 = vunpack.c.l.b16 %v157
      %v245 = vunpack.c.l.b16 %v158
      %v246 = vunpack.c.l.b16 %v159
      %v247 = vunpack.c.l.b16 %v160
      %v248 = vunpack.c.l.b16 %v161
      %v249 = vunpack.c.l.b16 %v162
      %v250 = vunpack.c.l.b16 %v163
      %v251 = vunpack.c.l.b16 %v164
      %v252 = vunpack.c.l.b16 %v165
      %v253 = vunpack.c.l.b16 %v166
      %v254 = vunpack.c.l.b16 %v167
      %v255 = vunpack.c.l.b16 %v168
      %v256 = vunpack.c.l.b16 %v169
      %v257 = vunpack.c.l.b16 %v170
      %v258 = vunpack.c.l.b16 %v171
      %v259 = vunpack.c.l.b16 %v172
      %v260 = vunpack.c.l.b16 %v173
      %v261 = vunpack.c.l.b16 %v174
      %v262 = vunpack.c.l.b16 %v175
      %v263 = vunpack.c.l.b16 %v176
      %v264 = vunpack.c.l.b16 %v177
      %v265 = vunpack.c.l.b16 %v178
      %v266 = vunpack.c.l.b16 %v179
      %v267 = vunpack.c.l.b16 %v180
      %v268 = vunpack.c.l.b16 %v181
      %v269 = vunpack.c.l.b16 %v182
      %v270 = vunpack.c.l.b16 %v183
      %v271 = vunpack.c.l.b16 %v184
      %v272 = vunpack.c.l.b16 %v185
      %v273 = vunpack.c.l.b16 %v186
      %v274 = vunpack.c.l.b16 %v187
      %v275 = vunpack.c.l.b16 %v188
      %v276 = vunpack.c.l.b16 %v189
      %v277 = vunpack.c.l.b16 %v190
      %v278 = vpack.c.b16 %v243, %v242
      %v279 = vpack.c.b16 %v245, %v244
      %v280 = vpack.c.b16 %v247, %v246
      %v281 = vpack.c.b16 %v249, %v248
      %v282 = vpack.c.b16 %v251, %v250
      %v283 = vpack.c.b16 %v253, %v252
      %v284 = vpack.c.b16 %v255, %v254
      %v285 = vpack.c.b16 %v257, %v256
      %v286 = vpack.c.b16 %v259, %v258
      %v287 = vpack.c.b16 %v261, %v260
      %v288 = vpack.c.b16 %v263, %v262
      %v289 = vpack.c.b16 %v265, %v264
      %v290 = vpack.c.b16 %v267, %v266
      %v291 = vpack.c.b16 %v269, %v268
      %v292 = vpack.c.b16 %v271, %v270
      %v293 = vpack.c.b16 %v273, %v272
      %v294 = vpack.c.b16 %v275, %v274
      %v295 = vpack.c.b16 %v277, %v276
      %vm314 = vcmask 261120
      %v316 = vsel %vm314, %v203, 0
      %318 = vmatprep.subr.bf16.mxu0 0
      %319 = vmatpush1.bf16.msra.mxu0 %v285
      %320 = vmatprep.subr.bf16.mxu0 0
      %321 = vmatpush1.bf16.msra.mxu0 %v284
      %322 = vmatprep.subr.bf16.mxu0 0
      %323 = vmatpush1.bf16.msra.mxu0 %v283
      %324 = vmatprep.subr.bf16.mxu0 0
      %325 = vmatpush1.bf16.msra.mxu0 %v282
      %326 = vmatprep.subr.bf16.mxu0 0
      %327 = vmatpush1.bf16.msra.mxu0 %v281
      %328 = vmatprep.subr.bf16.mxu0 0
      %329 = vmatpush1.bf16.msra.mxu0 %v280
      %330 = vmatprep.subr.bf16.mxu0 0
      %331 = vmatpush1.bf16.msra.mxu0 %v279
      %332 = vmatprep.subr.bf16.mxu0 0
      %333 = vmatpush1.bf16.msra.mxu0 %v278
      %334 = vmatprep.subr.bf16.mxu0 0
      %335 = vmatpush2.bf16.msra.mxu0 %v293
      %336 = vmatprep.subr.bf16.mxu0 0
      %337 = vmatpush2.bf16.msra.mxu0 %v292
      %338 = vmatprep.subr.bf16.mxu0 0
      %339 = vmatpush2.bf16.msra.mxu0 %v291
      %340 = vmatprep.subr.bf16.mxu0 0
      %341 = vmatpush2.bf16.msra.mxu0 %v290
      %342 = vmatprep.subr.bf16.mxu0 0
      %343 = vmatpush2.bf16.msra.mxu0 %v289
      %344 = vmatprep.subr.bf16.mxu0 0
      %345 = vmatpush2.bf16.msra.mxu0 %v288
      %346 = vmatprep.subr.bf16.mxu0 0
      %347 = vmatpush2.bf16.msra.mxu0 %v287
      %348 = vmatprep.subr.bf16.mxu0 0
      %349 = vmatpush2.bf16.msra.mxu0 %v286
      %350 = vmatprep.mubr.bf16.mxu0 %v202
      %351 = vmatmul.mubr.bf16.gmra.mxu0 %v201
      %v352 = vpop.f32.mrf.mxu0
      %v353 = vadd.f32 0.0, %v352
      %v354 = vpop.f32.mrf.mxu0
      %v355 = vpop.f32.mrf.mxu0
      %v356 = vadd.f32 0.0, %v355
      %v357 = vpop.f32.mrf.mxu0
      %358 = vdwg.mxu0
      %359 = vmatprep.subr.bf16.mxu0 0
      %360 = vmatpush1.bf16.msra.mxu0 0
      %361 = vmatprep.subr.bf16.mxu0 0
      %362 = vmatpush1.bf16.msra.mxu0 0
      %363 = vmatprep.subr.bf16.mxu0 0
      %364 = vmatpush1.bf16.msra.mxu0 0
      %365 = vmatprep.subr.bf16.mxu0 0
      %366 = vmatpush1.bf16.msra.mxu0 0
      %367 = vmatprep.subr.bf16.mxu0 0
      %368 = vmatpush1.bf16.msra.mxu0 0
      %369 = vmatprep.subr.bf16.mxu0 0
      %370 = vmatpush1.bf16.msra.mxu0 0
      %371 = vmatprep.subr.bf16.mxu0 0
      %372 = vmatpush1.bf16.msra.mxu0 %v295
      %373 = vmatprep.subr.bf16.mxu0 0
      %374 = vmatpush1.bf16.msra.mxu0 %v294
      %375 = vmatprep.subr.bf16.mxu0 0
      %376 = vmatpush2.bf16.msra.mxu0 0
      %377 = vmatprep.subr.bf16.mxu0 0
      %378 = vmatpush2.bf16.msra.mxu0 0
      %379 = vmatprep.subr.bf16.mxu0 0
      %380 = vmatpush2.bf16.msra.mxu0 0
      %381 = vmatprep.subr.bf16.mxu0 0
      %382 = vmatpush2.bf16.msra.mxu0 0
      %383 = vmatprep.subr.bf16.mxu0 0
      %384 = vmatpush2.bf16.msra.mxu0 0
      %385 = vmatprep.subr.bf16.mxu0 0
      %386 = vmatpush2.bf16.msra.mxu0 0
      %387 = vmatprep.subr.bf16.mxu0 0
      %388 = vmatpush2.bf16.msra.mxu0 0
      %389 = vmatprep.subr.bf16.mxu0 0
      %390 = vmatpush2.bf16.msra.mxu0 0
      %391 = vmatprep.mubr.bf16.mxu0 0
      %392 = vmatmul.mubr.bf16.gmra.mxu0 %v316
      %v393 = vpop.f32.mrf.mxu0
      %v394 = vadd.f32 %v353, %v393
      %v395 = vpop.f32.mrf.mxu0
      %v396 = vpop.f32.mrf.mxu0
      %v397 = vadd.f32 %v356, %v396
      %v398 = vpop.f32.mrf.mxu0
      %399 = vdwg.mxu0
      %v400 = vmax.f32 %v394, 0.0
      %v401 = vmax.f32 %v397, 0.0
      %402 = vst.msk [vmem:[%s148] sm:$0xff] %vm314, %v400
      %403 = vst.msk [vmem:[%s148 + $0x8] sm:$0xff] %vm314, %v401
      %s404 = smul.u32 2, %s13
      %p405 = scmp.lt.s32.totalorder %s404, 3
      %s406 = scalar_select %p405, %s404, 3
      %s407 = smul.addr %s406, 8
      %s408 = scalar_lea.vmem %s2, %s407
      // Predicated region
      $region29: #{uresencoder_forward.22} parent=27 // pred_check
        %p409 = pneg %p78
      $region30: #{uresencoder_forward.22} parent=27 // pred_check_branch
        %411 = sbr.rel (%p409) target = $region32
      $region31: #{uresencoder_forward.22} parent=27 // pred_region
        %s412 = smul.u32 2, %s13
      $region32: #{uresencoder_forward.22} parent=27 // pred_fallthru
        _
    $region28: #{uresencoder_forward.22} parent=5 // pred_fallthru
      _
    %p413 = scmp.le.s32.totalorder 2, %s8
    // Predicated region
    $region33: #{uresencoder_forward.22} parent=5 // pred_check
      %p414 = pneg %p413
    $region34: #{uresencoder_forward.22} parent=5 // pred_check_branch
      %416 = sbr.rel (%p414) target = $region36
    $region35: #{uresencoder_forward.22} parent=5 // pred_region
      %s417 = ssub.s32 %s8, 2
      // Predicated region
      $region37: #{uresencoder_forward.22} parent=35 // pred_check
        %p418 = pneg %p84
      $region38: #{uresencoder_forward.22} parent=35 // pred_check_branch
        %420 = sbr.rel (%p418) target = $region40
      $region39: #{uresencoder_forward.22} parent=35 // pred_region
        %s421 = smul.u32 2, %s14
        %p422 = scmp.lt.s32.totalorder %s421, 3
        %s423 = scalar_select %p422, %s421, 3
        %s424 = smul.addr %s423, 8
        %s425 = scalar_lea.vmem %s2, %s424
      $region40: #{uresencoder_forward.22} parent=35 // pred_fallthru
        _
    $region36: #{uresencoder_forward.22} parent=5 // pred_fallthru
      _
  $region6: #{uresencoder_forward.22} parent=0 // loop_footer
    %s12 = sadd.s32 1, %s8
  $region7: #{uresencoder_forward.22} parent=0 // loop_footer_branch
    %7 = sbr.rel target = $region3
  $region8: #{uresencoder_forward.22} parent=0 // loop_exit
    _

// kernel: uresencoder_forward.21
$region0: #{uresencoder_forward.21}
  #allocation0 [shape = 'u32[]', space=smem, size = 0x4, offset = 0x4, fixed_abs, tag = 'smem constant byte address 0x4 - core index']
  #allocation1 [shape = 'u32[144,128]{1,0:T(1,128)}', space=vmem, size = 0x12000, scoped, tag = 'internal scratch']
  %s0 = inlined_call_operand.vmem [shape: bf16[32,288], index: 0, kind: input, shape index: {}]
  %s1 = inlined_call_operand.vmem [shape: bf16[288,32], index: 1, kind: input, shape index: {}]
  %s2 = inlined_call_operand.vmem [shape: f32[32,32], index: 2, kind: input, shape index: {}]
  %s3 = inlined_call_operand.vmem [shape: f32[32,32], index: 3, kind: output, shape index: {}]
  %s4 = sld [smem:[#allocation0]]
  $region45: #{uresencoder_forward.21} parent=0
    _
  %s6 = ssub.s32 1, %s4
  %s7 = scalar_select 0, %s6, %s4
  loop: start=0, step=1, limit=4
  $region2: #{uresencoder_forward.21} parent=0 // loop_pre_header
    _
  $region3: #{uresencoder_forward.21} parent=0 // loop_header
    %s9 = sphi 0, %s13
    %p10 = scmp.ge.s32.totalorder %s9, 4
    %s19 = sphi 0, %s21
    %s22 = sphi 0, %s19
    %s23 = sphi 0, %s22
    %s39 = sphi 0, %s23
    %s43 = sphi 0, %s43
    %s45 = sphi 0, %s43
    %s46 = sphi 0, %s45
    %s60 = sphi 0, %s46
    %s66 = sphi 0, %s68
    %s69 = sphi 0, %s66
    %s70 = sphi 0, %s69
    %s86 = sphi 0, %s70
    %s92 = sphi 0, %s94
    %s95 = sphi 0, %s92
    %s96 = sphi 0, %s95
    %s112 = sphi 0, %s96
  $region4: #{uresencoder_forward.21} parent=0 // loop_header_branch
    %12 = sbr.rel (%p10) target = $region8
  $region5: #{uresencoder_forward.21} parent=0 // loop_body
    %s14 = ssub.s32 %s9, 1
    %s15 = ssub.s32 %s9, 2
    %s16 = sadd.s32 %s9, 1
    %s17 = ssub.s32 %s9, %s16
    %p18 = scmp.eq.s32.totalorder %s17, 0
    %s20 = sadd.s32 %s19, 1
    %s21 = scalar_select %p18, %s19, %s20
    %p24 = pneg %p18
    %p25 = scmp.eq.s32.totalorder %s9, 1
    %p26 = por %p24, %p25
    %p27 = scmp.ne.s32.totalorder %s19, %s22
    %p28 = scmp.eq.s32.totalorder %s9, 0
    %p29 = por %p27, %p28
    %p30 = scmp.ne.s32.totalorder %s19, %s22
    %p31 = scmp.eq.s32.totalorder %s14, 1
    %p32 = por %p30, %p31
    %p33 = scmp.ne.s32.totalorder %s22, %s23
    %p34 = scmp.eq.s32.totalorder %s14, 0
    %p35 = por %p33, %p34
    %p36 = scmp.ne.s32.totalorder %s22, %s23
    %p37 = scmp.eq.s32.totalorder %s15, 1
    %p38 = por %p36, %p37
    %p40 = scmp.ne.s32.totalorder %s23, %s39
    %p41 = scmp.eq.s32.totalorder %s15, 0
    %p42 = por %p40, %p41
    %s44 = sadd.s32 %s43, 1
    %p47 = scmp.eq.s32.totalorder %s9, 1
    %p48 = scmp.ne.s32.totalorder %s43, %s45
    %p49 = scmp.eq.s32.totalorder %s9, 0
    %p50 = por %p48, %p49
    %p51 = scmp.ne.s32.totalorder %s43, %s45
    %p52 = scmp.eq.s32.totalorder %s14, 1
    %p53 = por %p51, %p52
    %p54 = scmp.ne.s32.totalorder %s45, %s46
    %p55 = scmp.eq.s32.totalorder %s14, 0
    %p56 = por %p54, %p55
    %p57 = scmp.ne.s32.totalorder %s45, %s46
    %p58 = scmp.eq.s32.totalorder %s15, 1
    %p59 = por %p57, %p58
    %p61 = scmp.ne.s32.totalorder %s46, %s60
    %p62 = scmp.eq.s32.totalorder %s15, 0
    %p63 = por %p61, %p62
    %s64 = ssub.s32 %s9, %s16
    %p65 = scmp.eq.s32.totalorder %s64, 0
    %s67 = sadd.s32 %s66, 1
    %s68 = scalar_select %p65, %s66, %s67
    %p71 = pneg %p65
    %p72 = scmp.eq.s32.totalorder %s9, 1
    %p73 = por %p71, %p72
    %p74 = scmp.ne.s32.totalorder %s66, %s69
    %p75 = scmp.eq.s32.totalorder %s9, 0
    %p76 = por %p74, %p75
    %p77 = scmp.ne.s32.totalorder %s66, %s69
    %p78 = scmp.eq.s32.totalorder %s14, 1
    %p79 = por %p77, %p78
    %p80 = scmp.ne.s32.totalorder %s69, %s70
    %p81 = scmp.eq.s32.totalorder %s14, 0
    %p82 = por %p80, %p81
    %p83 = scmp.ne.s32.totalorder %s69, %s70
    %p84 = scmp.eq.s32.totalorder %s15, 1
    %p85 = por %p83, %p84
    %p87 = scmp.ne.s32.totalorder %s70, %s86
    %p88 = scmp.eq.s32.totalorder %s15, 0
    %p89 = por %p87, %p88
    %s90 = ssub.s32 %s9, %s16
    %p91 = scmp.eq.s32.totalorder %s90, 0
    %s93 = sadd.s32 %s92, 1
    %s94 = scalar_select %p91, %s92, %s93
    %p97 = pneg %p91
    %p98 = scmp.eq.s32.totalorder %s9, 1
    %p99 = por %p97, %p98
    %p100 = scmp.ne.s32.totalorder %s92, %s95
    %p101 = scmp.eq.s32.totalorder %s9, 0
    %p102 = por %p100, %p101
    %p103 = scmp.ne.s32.totalorder %s92, %s95
    %p104 = scmp.eq.s32.totalorder %s14, 1
    %p105 = por %p103, %p104
    %p106 = scmp.ne.s32.totalorder %s95, %s96
    %p107 = scmp.eq.s32.totalorder %s14, 0
    %p108 = por %p106, %p107
    %p109 = scmp.ne.s32.totalorder %s95, %s96
    %p110 = scmp.eq.s32.totalorder %s15, 1
    %p111 = por %p109, %p110
    %p113 = scmp.ne.s32.totalorder %s96, %s112
    %p114 = scmp.eq.s32.totalorder %s15, 0
    %p115 = por %p113, %p114
    %p116 = scmp.le.s32.totalorder 1, %s9
    %p117 = scmp.lt.s32.totalorder %s9, 3
    %p118 = pnand %p116, %p117
    %p119 = pneg %p118
    // Predicated region
    $region9: #{uresencoder_forward.21} parent=5 // pred_check
      _
    $region10: #{uresencoder_forward.21} parent=5 // pred_check_branch
      %121 = sbr.rel (%p118) target = $region12
    $region11: #{uresencoder_forward.21} parent=5 // pred_region
      %s122 = ssub.s32 %s9, 1
      // Predicated region
      $region13: #{uresencoder_forward.21} parent=11 // pred_check
        %p123 = pneg %p56
      $region14: #{uresencoder_forward.21} parent=11 // pred_check_branch
        %125 = sbr.rel (%p123) target = $region16
      $region15: #{uresencoder_forward.21} parent=11 // pred_region
        _
      $region16: #{uresencoder_forward.21} parent=11 // pred_fallthru
        _
    $region12: #{uresencoder_forward.21} parent=5 // pred_fallthru
      _
    %p126 = scmp.lt.s32.totalorder %s9, 2
    // Predicated region
    $region17: #{uresencoder_forward.21} parent=5 // pred_check
      %p127 = pneg %p126
    $region18: #{uresencoder_forward.21} parent=5 // pred_check_branch
      %129 = sbr.rel (%p127) target = $region20
    $region19: #{uresencoder_forward.21} parent=5 // pred_region
      // Predicated region
      $region21: #{uresencoder_forward.21} parent=19 // pred_check
        %p130 = pneg %p29
      $region22: #{uresencoder_forward.21} parent=19 // pred_check_branch
        %132 = sbr.rel (%p130) target = $region24
      $region23: #{uresencoder_forward.21} parent=19 // pred_region
        %s133 = smul.u32 2, %s9
        %p134 = scmp.lt.s32.totalorder %s133, 3
        %s135 = scalar_select %p134, %s133, 3
        %s136 = smul.addr %s135, 3
        %s137 = smul.addr %s136, 4
        %s138 = scalar_lea.vmem %s0, %s137
        %s139 = smul.u32 2, %s9
      $region24: #{uresencoder_forward.21} parent=19 // pred_fallthru
        _
      // Predicated region
      $region25: #{uresencoder_forward.21} parent=19 // pred_check
        %p140 = pneg %p76
      $region26: #{uresencoder_forward.21} parent=19 // pred_check_branch
        %142 = sbr.rel (%p140) target = $region28
      $region27: #{uresencoder_forward.21} parent=19 // pred_region
        %s143 = smul.u32 2, %s9
        %p144 = scmp.lt.s32.totalorder %s143, 3
        %s145 = scalar_select %p144, %s143, 3
        %s146 = smul.addr %s145, 8
        %s147 = scalar_lea.vmem %s2, %s146
        %s148 = smul.u32 2, %s9
      $region28: #{uresencoder_forward.21} parent=19 // pred_fallthru
        _
    $region20: #{uresencoder_forward.21} parent=5 // pred_fallthru
      _
    %p149 = scmp.le.s32.totalorder 1, %s9
    %p150 = scmp.lt.s32.totalorder %s9, 3
    %p151 = pnand %p149, %p150
    %p152 = pneg %p151
    // Predicated region
    $region29: #{uresencoder_forward.21} parent=5 // pred_check
      _
    $region30: #{uresencoder_forward.21} parent=5 // pred_check_branch
      %154 = sbr.rel (%p151) target = $region32
    $region31: #{uresencoder_forward.21} parent=5 // pred_region
      %s155 = ssub.s32 %s9, 1
      %s156 = smul.u32 2, %s14
      %p157 = scmp.lt.s32.totalorder %s156, 3
      %s158 = scalar_select %p157, %s156, 3
      %s159 = smul.addr %s158, 3
      %s160 = smul.addr %s159, 4
      %s161 = scalar_lea.vmem %s0, %s160
      %p162 = pneg %p35
      %p163 = pneg %p32
      %p164 = pneg %p56
      %p165 = pneg %p53
      %s166 = smul.u32 2, %s14
      %p167 = scmp.lt.s32.totalorder %s166, 3
      %s168 = scalar_select %p167, %s166, 3
      %s169 = smul.addr %s168, 8
      %s170 = scalar_lea.vmem %s2, %s169
      %p171 = pneg %p82
      %p172 = pneg %p79
      %p173 = pneg %p108
      %p174 = pneg %p105
      %s175 = smul.u32 2, %s14
      %p176 = scmp.lt.s32.totalorder %s175, 3
      %s177 = scalar_select %p176, %s175, 3
      %s178 = smul.addr %s177, 8
      %s179 = scalar_lea.vmem %s3, %s178
      %s180 = smul.u32 2, %s14
      %p181 = scmp.lt.s32.totalorder %s180, 3
      %s182 = scalar_select %p181, %s180, 3
      %s183 = smul.addr %s182, 3
      %s184 = smul.addr %s183, 4
      %s185 = scalar_lea.vmem %s0, %s184
      %s186 = smul.u32 2, %s14
      %s187 = smul.u32 2, %s14
      %p188 = scmp.lt.s32.totalorder %s187, 3
      %s189 = scalar_select %p188, %s187, 3
      %s190 = smul.addr %s189, 8
      %s191 = scalar_lea.vmem %s2, %s190
      %s192 = smul.u32 2, %s14
      %s193 = smul.u32 2, %s14
      %p194 = scmp.lt.s32.totalorder %s193, 3
      %s195 = scalar_select %p194, %s193, 3
      %s196 = smul.addr %s195, 8
      %s197 = scalar_lea.vmem %s3, %s196
      %s198 = smul.u32 2, %s14
      %v200 = vld [vmem:[%s185] sm:$0xff]
      %v201 = vld [vmem:[%s185 + $0x8] sm:$0xf]
      %v202 = vld [vmem:[%s185 + $0xc] sm:$0xff]
      %v203 = vld [vmem:[%s185 + $0x14] sm:$0xf]
      %v204 = vld [vmem:[%s1] sm:$0xf]
      %v205 = vld [vmem:[%s1 + $0x4] sm:$0xf]
      %v206 = vld [vmem:[%s1 + $0x8] sm:$0xf]
      %v207 = vld [vmem:[%s1 + $0xc] sm:$0xf]
      %v208 = vld [vmem:[%s1 + $0x10] sm:$0xf]
      %v209 = vld [vmem:[%s1 + $0x14] sm:$0xf]
      %v210 = vld [vmem:[%s1 + $0x18] sm:$0xf]
      %v211 = vld [vmem:[%s1 + $0x1c] sm:$0xf]
      %v212 = vld [vmem:[%s1 + $0x20] sm:$0xf]
      %v213 = vld [vmem:[%s1 + $0x24] sm:$0xf]
      %v214 = vld [vmem:[%s1 + $0x28] sm:$0xf]
      %v215 = vld [vmem:[%s1 + $0x2c] sm:$0xf]
      %v216 = vld [vmem:[%s1 + $0x30] sm:$0xf]
      %v217 = vld [vmem:[%s1 + $0x34] sm:$0xf]
      %v218 = vld [vmem:[%s1 + $0x38] sm:$0xf]
      %v219 = vld [vmem:[%s1 + $0x3c] sm:$0xf]
      %v220 = vld [vmem:[%s1 + $0x40] sm:$0xf]
      %v221 = vld [vmem:[%s1 + $0x44] sm:$0xf]
      %v222 = vld [vmem:[%s1 + $0x48] sm:$0xf]
      %v223 = vld [vmem:[%s1 + $0x4c] sm:$0xf]
      %v224 = vld [vmem:[%s1 + $0x50] sm:$0xf]
      %v225 = vld [vmem:[%s1 + $0x54] sm:$0xf]
      %v226 = vld [vmem:[%s1 + $0x58] sm:$0xf]
      %v227 = vld [vmem:[%s1 + $0x5c] sm:$0xf]
      %v228 = vld [vmem:[%s1 + $0x60] sm:$0xf]
      %v229 = vld [vmem:[%s1 + $0x64] sm:$0xf]
      %v230 = vld [vmem:[%s1 + $0x68] sm:$0xf]
      %v231 = vld [vmem:[%s1 + $0x6c] sm:$0xf]
      %v232 = vld [vmem:[%s1 + $0x70] sm:$0xf]
      %v233 = vld [vmem:[%s1 + $0x74] sm:$0xf]
      %v234 = vld [vmem:[%s1 + $0x78] sm:$0xf]
      %v235 = vld [vmem:[%s1 + $0x7c] sm:$0xf]
      %v236 = vld [vmem:[%s1 + $0x80] sm:$0xf]
      %v237 = vld [vmem:[%s1 + $0x84] sm:$0xf]
      %v238 = vld [vmem:[%s1 + $0x88] sm:$0xf]
      %v239 = vld [vmem:[%s1 + $0x8c] sm:$0xf]
      %v240 = vld [vmem:[%s191] sm:$0xff]
      %v241 = vld [vmem:[%s191 + $0x8] sm:$0xff]
      %v246 = vunpack.c.l.b16 %v200
      %v247 = vunpack.c.h.b16 %v200
      %v248 = vunpack.c.l.b16 %v201
      %v249 = vunpack.c.l.b16 %v202
      %v250 = vunpack.c.h.b16 %v202
      %v251 = vunpack.c.l.b16 %v203
      %v252 = vpack.c.b16 %v249, %v246
      %v253 = vpack.c.b16 %v250, %v247
      %v254 = vpack.c.b16 %v251, %v248
      %v293 = vunpack.c.l.b16 %v204
      %v294 = vunpack.c.l.b16 %v205
      %v295 = vunpack.c.l.b16 %v206
      %v296 = vunpack.c.l.b16 %v207
      %v297 = vunpack.c.l.b16 %v208
      %v298 = vunpack.c.l.b16 %v209
      %v299 = vunpack.c.l.b16 %v210
      %v300 = vunpack.c.l.b16 %v211
      %v301 = vunpack.c.l.b16 %v212
      %v302 = vunpack.c.l.b16 %v213
      %v303 = vunpack.c.l.b16 %v214
      %v304 = vunpack.c.l.b16 %v215
      %v305 = vunpack.c.l.b16 %v216
      %v306 = vunpack.c.l.b16 %v217
      %v307 = vunpack.c.l.b16 %v218
      %v308 = vunpack.c.l.b16 %v219
      %v309 = vunpack.c.l.b16 %v220
      %v310 = vunpack.c.l.b16 %v221
      %v311 = vunpack.c.l.b16 %v222
      %v312 = vunpack.c.l.b16 %v223
      %v313 = vunpack.c.l.b16 %v224
      %v314 = vunpack.c.l.b16 %v225
      %v315 = vunpack.c.l.b16 %v226
      %v316 = vunpack.c.l.b16 %v227
      %v317 = vunpack.c.l.b16 %v228
      %v318 = vunpack.c.l.b16 %v229
      %v319 = vunpack.c.l.b16 %v230
      %v320 = vunpack.c.l.b16 %v231
      %v321 = vunpack.c.l.b16 %v232
      %v322 = vunpack.c.l.b16 %v233
      %v323 = vunpack.c.l.b16 %v234
      %v324 = vunpack.c.l.b16 %v235
      %v325 = vunpack.c.l.b16 %v236
      %v326 = vunpack.c.l.b16 %v237
      %v327 = vunpack.c.l.b16 %v238
      %v328 = vunpack.c.l.b16 %v239
      %v329 = vpack.c.b16 %v294, %v293
      %v330 = vpack.c.b16 %v296, %v295
      %v331 = vpack.c.b16 %v298, %v297
      %v332 = vpack.c.b16 %v300, %v299
      %v333 = vpack.c.b16 %v302, %v301
      %v334 = vpack.c.b16 %v304, %v303
      %v335 = vpack.c.b16 %v306, %v305
      %v336 = vpack.c.b16 %v308, %v307
      %v337 = vpack.c.b16 %v310, %v309
      %v338 = vpack.c.b16 %v312, %v311
      %v339 = vpack.c.b16 %v314, %v313
      %v340 = vpack.c.b16 %v316, %v315
      %v341 = vpack.c.b16 %v318, %v317
      %v342 = vpack.c.b16 %v320, %v319
      %v343 = vpack.c.b16 %v322, %v321
      %v344 = vpack.c.b16 %v324, %v323
      %v345 = vpack.c.b16 %v326, %v325
      %v346 = vpack.c.b16 %v328, %v327
      %vm365 = vcmask 261120
      %v367 = vsel %vm365, %v254, 0
      %369 = vmatprep.subr.bf16.mxu0 0
      %370 = vmatpush1.bf16.msra.mxu0 %v336
      %371 = vmatprep.subr.bf16.mxu0 0
      %372 = vmatpush1.bf16.msra.mxu0 %v335
      %373 = vmatprep.subr.bf16.mxu0 0
      %374 = vmatpush1.bf16.msra.mxu0 %v334
      %375 = vmatprep.subr.bf16.mxu0 0
      %376 = vmatpush1.bf16.msra.mxu0 %v333
      %377 = vmatprep.subr.bf16.mxu0 0
      %378 = vmatpush1.bf16.msra.mxu0 %v332
      %379 = vmatprep.subr.bf16.mxu0 0
      %380 = vmatpush1.bf16.msra.mxu0 %v331
      %381 = vmatprep.subr.bf16.mxu0 0
      %382 = vmatpush1.bf16.msra.mxu0 %v330
      %383 = vmatprep.subr.bf16.mxu0 0
      %384 = vmatpush1.bf16.msra.mxu0 %v329
      %385 = vmatprep.subr.bf16.mxu0 0
      %386 = vmatpush2.bf16.msra.mxu0 %v344
      %387 = vmatprep.subr.bf16.mxu0 0
      %388 = vmatpush2.bf16.msra.mxu0 %v343
      %389 = vmatprep.subr.bf16.mxu0 0
      %390 = vmatpush2.bf16.msra.mxu0 %v342
      %391 = vmatprep.subr.bf16.mxu0 0
      %392 = vmatpush2.bf16.msra.mxu0 %v341
      %393 = vmatprep.subr.bf16.mxu0 0
      %394 = vmatpush2.bf16.msra.mxu0 %v340
      %395 = vmatprep.subr.bf16.mxu0 0
      %396 = vmatpush2.bf16.msra.mxu0 %v339
      %397 = vmatprep.subr.bf16.mxu0 0
      %398 = vmatpush2.bf16.msra.mxu0 %v338
      %399 = vmatprep.subr.bf16.mxu0 0
      %400 = vmatpush2.bf16.msra.mxu0 %v337
      %401 = vmatprep.mubr.bf16.mxu0 %v253
      %402 = vmatmul.mubr.bf16.gmra.mxu0 %v252
      %v403 = vpop.f32.mrf.mxu0
      %v404 = vadd.f32 %v240, %v403
      %v405 = vpop.f32.mrf.mxu0
      %v406 = vpop.f32.mrf.mxu0
      %v407 = vadd.f32 %v241, %v406
      %v408 = vpop.f32.mrf.mxu0
      %409 = vdwg.mxu0
      %410 = vmatprep.subr.bf16.mxu0 0
      %411 = vmatpush1.bf16.msra.mxu0 0
      %412 = vmatprep.subr.bf16.mxu0 0
      %413 = vmatpush1.bf16.msra.mxu0 0
      %414 = vmatprep.subr.bf16.mxu0 0
      %415 = vmatpush1.bf16.msra.mxu0 0
      %416 = vmatprep.subr.bf16.mxu0 0
      %417 = vmatpush1.bf16.msra.mxu0 0
      %418 = vmatprep.subr.bf16.mxu0 0
      %419 = vmatpush1.bf16.msra.mxu0 0
      %420 = vmatprep.subr.bf16.mxu0 0
      %421 = vmatpush1.bf16.msra.mxu0 0
      %422 = vmatprep.subr.bf16.mxu0 0
      %423 = vmatpush1.bf16.msra.mxu0 %v346
      %424 = vmatprep.subr.bf16.mxu0 0
      %425 = vmatpush1.bf16.msra.mxu0 %v345
      %426 = vmatprep.subr.bf16.mxu0 0
      %427 = vmatpush2.bf16.msra.mxu0 0
      %428 = vmatprep.subr.bf16.mxu0 0
      %429 = vmatpush2.bf16.msra.mxu0 0
      %430 = vmatprep.subr.bf16.mxu0 0
      %431 = vmatpush2.bf16.msra.mxu0 0
      %432 = vmatprep.subr.bf16.mxu0 0
      %433 = vmatpush2.bf16.msra.mxu0 0
      %434 = vmatprep.subr.bf16.mxu0 0
      %435 = vmatpush2.bf16.msra.mxu0 0
      %436 = vmatprep.subr.bf16.mxu0 0
      %437 = vmatpush2.bf16.msra.mxu0 0
      %438 = vmatprep.subr.bf16.mxu0 0
      %439 = vmatpush2.bf16.msra.mxu0 0
      %440 = vmatprep.subr.bf16.mxu0 0
      %441 = vmatpush2.bf16.msra.mxu0 0
      %442 = vmatprep.mubr.bf16.mxu0 0
      %443 = vmatmul.mubr.bf16.gmra.mxu0 %v367
      %v444 = vpop.f32.mrf.mxu0
      %v445 = vadd.f32 %v404, %v444
      %v446 = vpop.f32.mrf.mxu0
      %v447 = vpop.f32.mrf.mxu0
      %v448 = vadd.f32 %v407, %v447
      %v449 = vpop.f32.mrf.mxu0
      %450 = vdwg.mxu0
      %v451 = vmax.f32 %v445, 0.0
      %v452 = vmax.f32 %v448, 0.0
      %453 = vst.msk [vmem:[%s197] sm:$0xff] %vm365, %v451
      %454 = vst.msk [vmem:[%s197 + $0x8] sm:$0xff] %vm365, %v452
      %s455 = smul.u32 2, %s14
      %p456 = scmp.lt.s32.totalorder %s455, 3
      %s457 = scalar_select %p456, %s455, 3
      %s458 = smul.addr %s457, 8
      %s459 = scalar_lea.vmem %s3, %s458
      // Predicated region
      $region33: #{uresencoder_forward.21} parent=31 // pred_check
        %p460 = pneg %p105
      $region34: #{uresencoder_forward.21} parent=31 // pred_check_branch
        %462 = sbr.rel (%p460) target = $region36
      $region35: #{uresencoder_forward.21} parent=31 // pred_region
        %s463 = smul.u32 2, %s14
      $region36: #{uresencoder_forward.21} parent=31 // pred_fallthru
        _
    $region32: #{uresencoder_forward.21} parent=5 // pred_fallthru
      _
    %p464 = scmp.le.s32.totalorder 2, %s9
    // Predicated region
    $region37: #{uresencoder_forward.21} parent=5 // pred_check
      %p465 = pneg %p464
    $region38: #{uresencoder_forward.21} parent=5 // pred_check_branch
      %467 = sbr.rel (%p465) target = $region40
    $region39: #{uresencoder_forward.21} parent=5 // pred_region
      %s468 = ssub.s32 %s9, 2
      // Predicated region
      $region41: #{uresencoder_forward.21} parent=39 // pred_check
        %p469 = pneg %p111
      $region42: #{uresencoder_forward.21} parent=39 // pred_check_branch
        %471 = sbr.rel (%p469) target = $region44
      $region43: #{uresencoder_forward.21} parent=39 // pred_region
        %s472 = smul.u32 2, %s15
        %p473 = scmp.lt.s32.totalorder %s472, 3
        %s474 = scalar_select %p473, %s472, 3
        %s475 = smul.addr %s474, 8
        %s476 = scalar_lea.vmem %s3, %s475
      $region44: #{uresencoder_forward.21} parent=39 // pred_fallthru
        _
    $region40: #{uresencoder_forward.21} parent=5 // pred_fallthru
      _
  $region6: #{uresencoder_forward.21} parent=0 // loop_footer
    %s13 = sadd.s32 1, %s9
  $region7: #{uresencoder_forward.21} parent=0 // loop_footer_branch
    %8 = sbr.rel target = $region3
  $region8: #{uresencoder_forward.21} parent=0 // loop_exit
    _

// kernel: uresencoder_forward.24
$region0: #{uresencoder_forward.24}
  #allocation0 [shape = 'u32[]', space=smem, size = 0x4, offset = 0x4, fixed_abs, tag = 'smem constant byte address 0x4 - core index']
  #allocation1 [shape = 'u32[144,128]{1,0:T(1,128)}', space=vmem, size = 0x12000, scoped, tag = 'internal scratch']
  %s0 = inlined_call_operand.vmem [shape: bf16[32,288], index: 0, kind: input, shape index: {}]
  %s1 = inlined_call_operand.vmem [shape: bf16[288,32], index: 1, kind: input, shape index: {}]
  %s2 = inlined_call_operand.vmem [shape: f32[32,32], index: 2, kind: output, shape index: {}]
  %s3 = sld [smem:[#allocation0]]
  $region41: #{uresencoder_forward.24} parent=0
    _
  %s5 = ssub.s32 1, %s3
  %s6 = scalar_select 0, %s5, %s3
  loop: start=0, step=1, limit=4
  $region2: #{uresencoder_forward.24} parent=0 // loop_pre_header
    _
  $region3: #{uresencoder_forward.24} parent=0 // loop_header
    %s8 = sphi 0, %s12
    %p9 = scmp.ge.s32.totalorder %s8, 4
    %s18 = sphi 0, %s20
    %s21 = sphi 0, %s18
    %s22 = sphi 0, %s21
    %s38 = sphi 0, %s22
    %s42 = sphi 0, %s42
    %s44 = sphi 0, %s42
    %s45 = sphi 0, %s44
    %s59 = sphi 0, %s45
    %s65 = sphi 0, %s67
    %s68 = sphi 0, %s65
    %s69 = sphi 0, %s68
    %s85 = sphi 0, %s69
  $region4: #{uresencoder_forward.24} parent=0 // loop_header_branch
    %11 = sbr.rel (%p9) target = $region8
  $region5: #{uresencoder_forward.24} parent=0 // loop_body
    %s13 = ssub.s32 %s8, 1
    %s14 = ssub.s32 %s8, 2
    %s15 = sadd.s32 %s8, 1
    %s16 = ssub.s32 %s8, %s15
    %p17 = scmp.eq.s32.totalorder %s16, 0
    %s19 = sadd.s32 %s18, 1
    %s20 = scalar_select %p17, %s18, %s19
    %p23 = pneg %p17
    %p24 = scmp.eq.s32.totalorder %s8, 1
    %p25 = por %p23, %p24
    %p26 = scmp.ne.s32.totalorder %s18, %s21
    %p27 = scmp.eq.s32.totalorder %s8, 0
    %p28 = por %p26, %p27
    %p29 = scmp.ne.s32.totalorder %s18, %s21
    %p30 = scmp.eq.s32.totalorder %s13, 1
    %p31 = por %p29, %p30
    %p32 = scmp.ne.s32.totalorder %s21, %s22
    %p33 = scmp.eq.s32.totalorder %s13, 0
    %p34 = por %p32, %p33
    %p35 = scmp.ne.s32.totalorder %s21, %s22
    %p36 = scmp.eq.s32.totalorder %s14, 1
    %p37 = por %p35, %p36
    %p39 = scmp.ne.s32.totalorder %s22, %s38
    %p40 = scmp.eq.s32.totalorder %s14, 0
    %p41 = por %p39, %p40
    %s43 = sadd.s32 %s42, 1
    %p46 = scmp.eq.s32.totalorder %s8, 1
    %p47 = scmp.ne.s32.totalorder %s42, %s44
    %p48 = scmp.eq.s32.totalorder %s8, 0
    %p49 = por %p47, %p48
    %p50 = scmp.ne.s32.totalorder %s42, %s44
    %p51 = scmp.eq.s32.totalorder %s13, 1
    %p52 = por %p50, %p51
    %p53 = scmp.ne.s32.totalorder %s44, %s45
    %p54 = scmp.eq.s32.totalorder %s13, 0
    %p55 = por %p53, %p54
    %p56 = scmp.ne.s32.totalorder %s44, %s45
    %p57 = scmp.eq.s32.totalorder %s14, 1
    %p58 = por %p56, %p57
    %p60 = scmp.ne.s32.totalorder %s45, %s59
    %p61 = scmp.eq.s32.totalorder %s14, 0
    %p62 = por %p60, %p61
    %s63 = ssub.s32 %s8, %s15
    %p64 = scmp.eq.s32.totalorder %s63, 0
    %s66 = sadd.s32 %s65, 1
    %s67 = scalar_select %p64, %s65, %s66
    %p70 = pneg %p64
    %p71 = scmp.eq.s32.totalorder %s8, 1
    %p72 = por %p70, %p71
    %p73 = scmp.ne.s32.totalorder %s65, %s68
    %p74 = scmp.eq.s32.totalorder %s8, 0
    %p75 = por %p73, %p74
    %p76 = scmp.ne.s32.totalorder %s65, %s68
    %p77 = scmp.eq.s32.totalorder %s13, 1
    %p78 = por %p76, %p77
    %p79 = scmp.ne.s32.totalorder %s68, %s69
    %p80 = scmp.eq.s32.totalorder %s13, 0
    %p81 = por %p79, %p80
    %p82 = scmp.ne.s32.totalorder %s68, %s69
    %p83 = scmp.eq.s32.totalorder %s14, 1
    %p84 = por %p82, %p83
    %p86 = scmp.ne.s32.totalorder %s69, %s85
    %p87 = scmp.eq.s32.totalorder %s14, 0
    %p88 = por %p86, %p87
    %p89 = scmp.le.s32.totalorder 1, %s8
    %p90 = scmp.lt.s32.totalorder %s8, 3
    %p91 = pnand %p89, %p90
    %p92 = pneg %p91
    // Predicated region
    $region9: #{uresencoder_forward.24} parent=5 // pred_check
      _
    $region10: #{uresencoder_forward.24} parent=5 // pred_check_branch
      %94 = sbr.rel (%p91) target = $region12
    $region11: #{uresencoder_forward.24} parent=5 // pred_region
      %s95 = ssub.s32 %s8, 1
      // Predicated region
      $region13: #{uresencoder_forward.24} parent=11 // pred_check
        %p96 = pneg %p55
      $region14: #{uresencoder_forward.24} parent=11 // pred_check_branch
        %98 = sbr.rel (%p96) target = $region16
      $region15: #{uresencoder_forward.24} parent=11 // pred_region
        _
      $region16: #{uresencoder_forward.24} parent=11 // pred_fallthru
        _
    $region12: #{uresencoder_forward.24} parent=5 // pred_fallthru
      _
    %p99 = scmp.lt.s32.totalorder %s8, 2
    // Predicated region
    $region17: #{uresencoder_forward.24} parent=5 // pred_check
      %p100 = pneg %p99
    $region18: #{uresencoder_forward.24} parent=5 // pred_check_branch
      %102 = sbr.rel (%p100) target = $region20
    $region19: #{uresencoder_forward.24} parent=5 // pred_region
      // Predicated region
      $region21: #{uresencoder_forward.24} parent=19 // pred_check
        %p103 = pneg %p28
      $region22: #{uresencoder_forward.24} parent=19 // pred_check_branch
        %105 = sbr.rel (%p103) target = $region24
      $region23: #{uresencoder_forward.24} parent=19 // pred_region
        %s106 = smul.u32 2, %s8
        %p107 = scmp.lt.s32.totalorder %s106, 3
        %s108 = scalar_select %p107, %s106, 3
        %s109 = smul.addr %s108, 3
        %s110 = smul.addr %s109, 4
        %s111 = scalar_lea.vmem %s0, %s110
        %s112 = smul.u32 2, %s8
      $region24: #{uresencoder_forward.24} parent=19 // pred_fallthru
        _
    $region20: #{uresencoder_forward.24} parent=5 // pred_fallthru
      _
    %p113 = scmp.le.s32.totalorder 1, %s8
    %p114 = scmp.lt.s32.totalorder %s8, 3
    %p115 = pnand %p113, %p114
    %p116 = pneg %p115
    // Predicated region
    $region25: #{uresencoder_forward.24} parent=5 // pred_check
      _
    $region26: #{uresencoder_forward.24} parent=5 // pred_check_branch
      %118 = sbr.rel (%p115) target = $region28
    $region27: #{uresencoder_forward.24} parent=5 // pred_region
      %s119 = ssub.s32 %s8, 1
      %s120 = smul.u32 2, %s13
      %p121 = scmp.lt.s32.totalorder %s120, 3
      %s122 = scalar_select %p121, %s120, 3
      %s123 = smul.addr %s122, 3
      %s124 = smul.addr %s123, 4
      %s125 = scalar_lea.vmem %s0, %s124
      %p126 = pneg %p34
      %p127 = pneg %p31
      %p128 = pneg %p55
      %p129 = pneg %p52
      %p130 = pneg %p81
      %p131 = pneg %p78
      %s132 = smul.u32 2, %s13
      %p133 = scmp.lt.s32.totalorder %s132, 3
      %s134 = scalar_select %p133, %s132, 3
      %s135 = smul.addr %s134, 8
      %s136 = scalar_lea.vmem %s2, %s135
      %s137 = smul.u32 2, %s13
      %p138 = scmp.lt.s32.totalorder %s137, 3
      %s139 = scalar_select %p138, %s137, 3
      %s140 = smul.addr %s139, 3
      %s141 = smul.addr %s140, 4
      %s142 = scalar_lea.vmem %s0, %s141
      %s143 = smul.u32 2, %s13
      %s144 = smul.u32 2, %s13
      %p145 = scmp.lt.s32.totalorder %s144, 3
      %s146 = scalar_select %p145, %s144, 3
      %s147 = smul.addr %s146, 8
      %s148 = scalar_lea.vmem %s2, %s147
      %s149 = smul.u32 2, %s13
      %v151 = vld [vmem:[%s142] sm:$0xff]
      %v152 = vld [vmem:[%s142 + $0x8] sm:$0xf]
      %v153 = vld [vmem:[%s142 + $0xc] sm:$0xff]
      %v154 = vld [vmem:[%s142 + $0x14] sm:$0xf]
      %v155 = vld [vmem:[%s1] sm:$0xf]
      %v156 = vld [vmem:[%s1 + $0x4] sm:$0xf]
      %v157 = vld [vmem:[%s1 + $0x8] sm:$0xf]
      %v158 = vld [vmem:[%s1 + $0xc] sm:$0xf]
      %v159 = vld [vmem:[%s1 + $0x10] sm:$0xf]
      %v160 = vld [vmem:[%s1 + $0x14] sm:$0xf]
      %v161 = vld [vmem:[%s1 + $0x18] sm:$0xf]
      %v162 = vld [vmem:[%s1 + $0x1c] sm:$0xf]
      %v163 = vld [vmem:[%s1 + $0x20] sm:$0xf]
      %v164 = vld [vmem:[%s1 + $0x24] sm:$0xf]
      %v165 = vld [vmem:[%s1 + $0x28] sm:$0xf]
      %v166 = vld [vmem:[%s1 + $0x2c] sm:$0xf]
      %v167 = vld [vmem:[%s1 + $0x30] sm:$0xf]
      %v168 = vld [vmem:[%s1 + $0x34] sm:$0xf]
      %v169 = vld [vmem:[%s1 + $0x38] sm:$0xf]
      %v170 = vld [vmem:[%s1 + $0x3c] sm:$0xf]
      %v171 = vld [vmem:[%s1 + $0x40] sm:$0xf]
      %v172 = vld [vmem:[%s1 + $0x44] sm:$0xf]
      %v173 = vld [vmem:[%s1 + $0x48] sm:$0xf]
      %v174 = vld [vmem:[%s1 + $0x4c] sm:$0xf]
      %v175 = vld [vmem:[%s1 + $0x50] sm:$0xf]
      %v176 = vld [vmem:[%s1 + $0x54] sm:$0xf]
      %v177 = vld [vmem:[%s1 + $0x58] sm:$0xf]
      %v178 = vld [vmem:[%s1 + $0x5c] sm:$0xf]
      %v179 = vld [vmem:[%s1 + $0x60] sm:$0xf]
      %v180 = vld [vmem:[%s1 + $0x64] sm:$0xf]
      %v181 = vld [vmem:[%s1 + $0x68] sm:$0xf]
      %v182 = vld [vmem:[%s1 + $0x6c] sm:$0xf]
      %v183 = vld [vmem:[%s1 + $0x70] sm:$0xf]
      %v184 = vld [vmem:[%s1 + $0x74] sm:$0xf]
      %v185 = vld [vmem:[%s1 + $0x78] sm:$0xf]
      %v186 = vld [vmem:[%s1 + $0x7c] sm:$0xf]
      %v187 = vld [vmem:[%s1 + $0x80] sm:$0xf]
      %v188 = vld [vmem:[%s1 + $0x84] sm:$0xf]
      %v189 = vld [vmem:[%s1 + $0x88] sm:$0xf]
      %v190 = vld [vmem:[%s1 + $0x8c] sm:$0xf]
      %v195 = vunpack.c.l.b16 %v151
      %v196 = vunpack.c.h.b16 %v151
      %v197 = vunpack.c.l.b16 %v152
      %v198 = vunpack.c.l.b16 %v153
      %v199 = vunpack.c.h.b16 %v153
      %v200 = vunpack.c.l.b16 %v154
      %v201 = vpack.c.b16 %v198, %v195
      %v202 = vpack.c.b16 %v199, %v196
      %v203 = vpack.c.b16 %v200, %v197
      %v242 = vunpack.c.l.b16 %v155
      %v243 = vunpack.c.l.b16 %v156
      %v244 = vunpack.c.l.b16 %v157
      %v245 = vunpack.c.l.b16 %v158
      %v246 = vunpack.c.l.b16 %v159
      %v247 = vunpack.c.l.b16 %v160
      %v248 = vunpack.c.l.b16 %v161
      %v249 = vunpack.c.l.b16 %v162
      %v250 = vunpack.c.l.b16 %v163
      %v251 = vunpack.c.l.b16 %v164
      %v252 = vunpack.c.l.b16 %v165
      %v253 = vunpack.c.l.b16 %v166
      %v254 = vunpack.c.l.b16 %v167
      %v255 = vunpack.c.l.b16 %v168
      %v256 = vunpack.c.l.b16 %v169
      %v257 = vunpack.c.l.b16 %v170
      %v258 = vunpack.c.l.b16 %v171
      %v259 = vunpack.c.l.b16 %v172
      %v260 = vunpack.c.l.b16 %v173
      %v261 = vunpack.c.l.b16 %v174
      %v262 = vunpack.c.l.b16 %v175
      %v263 = vunpack.c.l.b16 %v176
      %v264 = vunpack.c.l.b16 %v177
      %v265 = vunpack.c.l.b16 %v178
      %v266 = vunpack.c.l.b16 %v179
      %v267 = vunpack.c.l.b16 %v180
      %v268 = vunpack.c.l.b16 %v181
      %v269 = vunpack.c.l.b16 %v182
      %v270 = vunpack.c.l.b16 %v183
      %v271 = vunpack.c.l.b16 %v184
      %v272 = vunpack.c.l.b16 %v185
      %v273 = vunpack.c.l.b16 %v186
      %v274 = vunpack.c.l.b16 %v187
      %v275 = vunpack.c.l.b16 %v188
      %v276 = vunpack.c.l.b16 %v189
      %v277 = vunpack.c.l.b16 %v190
      %v278 = vpack.c.b16 %v243, %v242
      %v279 = vpack.c.b16 %v245, %v244
      %v280 = vpack.c.b16 %v247, %v246
      %v281 = vpack.c.b16 %v249, %v248
      %v282 = vpack.c.b16 %v251, %v250
      %v283 = vpack.c.b16 %v253, %v252
      %v284 = vpack.c.b16 %v255, %v254
      %v285 = vpack.c.b16 %v257, %v256
      %v286 = vpack.c.b16 %v259, %v258
      %v287 = vpack.c.b16 %v261, %v260
      %v288 = vpack.c.b16 %v263, %v262
      %v289 = vpack.c.b16 %v265, %v264
      %v290 = vpack.c.b16 %v267, %v266
      %v291 = vpack.c.b16 %v269, %v268
      %v292 = vpack.c.b16 %v271, %v270
      %v293 = vpack.c.b16 %v273, %v272
      %v294 = vpack.c.b16 %v275, %v274
      %v295 = vpack.c.b16 %v277, %v276
      %vm314 = vcmask 261120
      %v316 = vsel %vm314, %v203, 0
      %318 = vmatprep.subr.bf16.mxu0 0
      %319 = vmatpush1.bf16.msra.mxu0 %v285
      %320 = vmatprep.subr.bf16.mxu0 0
      %321 = vmatpush1.bf16.msra.mxu0 %v284
      %322 = vmatprep.subr.bf16.mxu0 0
      %323 = vmatpush1.bf16.msra.mxu0 %v283
      %324 = vmatprep.subr.bf16.mxu0 0
      %325 = vmatpush1.bf16.msra.mxu0 %v282
      %326 = vmatprep.subr.bf16.mxu0 0
      %327 = vmatpush1.bf16.msra.mxu0 %v281
      %328 = vmatprep.subr.bf16.mxu0 0
      %329 = vmatpush1.bf16.msra.mxu0 %v280
      %330 = vmatprep.subr.bf16.mxu0 0
      %331 = vmatpush1.bf16.msra.mxu0 %v279
      %332 = vmatprep.subr.bf16.mxu0 0
      %333 = vmatpush1.bf16.msra.mxu0 %v278
      %334 = vmatprep.subr.bf16.mxu0 0
      %335 = vmatpush2.bf16.msra.mxu0 %v293
      %336 = vmatprep.subr.bf16.mxu0 0
      %337 = vmatpush2.bf16.msra.mxu0 %v292
      %338 = vmatprep.subr.bf16.mxu0 0
      %339 = vmatpush2.bf16.msra.mxu0 %v291
      %340 = vmatprep.subr.bf16.mxu0 0
      %341 = vmatpush2.bf16.msra.mxu0 %v290
      %342 = vmatprep.subr.bf16.mxu0 0
      %343 = vmatpush2.bf16.msra.mxu0 %v289
      %344 = vmatprep.subr.bf16.mxu0 0
      %345 = vmatpush2.bf16.msra.mxu0 %v288
      %346 = vmatprep.subr.bf16.mxu0 0
      %347 = vmatpush2.bf16.msra.mxu0 %v287
      %348 = vmatprep.subr.bf16.mxu0 0
      %349 = vmatpush2.bf16.msra.mxu0 %v286
      %350 = vmatprep.mubr.bf16.mxu0 %v202
      %351 = vmatmul.mubr.bf16.gmra.mxu0 %v201
      %v352 = vpop.f32.mrf.mxu0
      %v353 = vadd.f32 0.0, %v352
      %v354 = vpop.f32.mrf.mxu0
      %v355 = vpop.f32.mrf.mxu0
      %v356 = vadd.f32 0.0, %v355
      %v357 = vpop.f32.mrf.mxu0
      %358 = vdwg.mxu0
      %359 = vmatprep.subr.bf16.mxu0 0
      %360 = vmatpush1.bf16.msra.mxu0 0
      %361 = vmatprep.subr.bf16.mxu0 0
      %362 = vmatpush1.bf16.msra.mxu0 0
      %363 = vmatprep.subr.bf16.mxu0 0
      %364 = vmatpush1.bf16.msra.mxu0 0
      %365 = vmatprep.subr.bf16.mxu0 0
      %366 = vmatpush1.bf16.msra.mxu0 0
      %367 = vmatprep.subr.bf16.mxu0 0
      %368 = vmatpush1.bf16.msra.mxu0 0
      %369 = vmatprep.subr.bf16.mxu0 0
      %370 = vmatpush1.bf16.msra.mxu0 0
      %371 = vmatprep.subr.bf16.mxu0 0
      %372 = vmatpush1.bf16.msra.mxu0 %v295
      %373 = vmatprep.subr.bf16.mxu0 0
      %374 = vmatpush1.bf16.msra.mxu0 %v294
      %375 = vmatprep.subr.bf16.mxu0 0
      %376 = vmatpush2.bf16.msra.mxu0 0
      %377 = vmatprep.subr.bf16.mxu0 0
      %378 = vmatpush2.bf16.msra.mxu0 0
      %379 = vmatprep.subr.bf16.mxu0 0
      %380 = vmatpush2.bf16.msra.mxu0 0
      %381 = vmatprep.subr.bf16.mxu0 0
      %382 = vmatpush2.bf16.msra.mxu0 0
      %383 = vmatprep.subr.bf16.mxu0 0
      %384 = vmatpush2.bf16.msra.mxu0 0
      %385 = vmatprep.subr.bf16.mxu0 0
      %386 = vmatpush2.bf16.msra.mxu0 0
      %387 = vmatprep.subr.bf16.mxu0 0
      %388 = vmatpush2.bf16.msra.mxu0 0
      %389 = vmatprep.subr.bf16.mxu0 0
      %390 = vmatpush2.bf16.msra.mxu0 0
      %391 = vmatprep.mubr.bf16.mxu0 0
      %392 = vmatmul.mubr.bf16.gmra.mxu0 %v316
      %v393 = vpop.f32.mrf.mxu0
      %v394 = vadd.f32 %v353, %v393
      %v395 = vpop.f32.mrf.mxu0
      %v396 = vpop.f32.mrf.mxu0
      %v397 = vadd.f32 %v356, %v396
      %v398 = vpop.f32.mrf.mxu0
      %399 = vdwg.mxu0
      %400 = vst.msk [vmem:[%s148] sm:$0xff] %vm314, %v394
      %401 = vst.msk [vmem:[%s148 + $0x8] sm:$0xff] %vm314, %v397
      %s402 = smul.u32 2, %s13
      %p403 = scmp.lt.s32.totalorder %s402, 3
      %s404 = scalar_select %p403, %s402, 3
      %s405 = smul.addr %s404, 8
      %s406 = scalar_lea.vmem %s2, %s405
      // Predicated region
      $region29: #{uresencoder_forward.24} parent=27 // pred_check
        %p407 = pneg %p78
      $region30: #{uresencoder_forward.24} parent=27 // pred_check_branch
        %409 = sbr.rel (%p407) target = $region32
      $region31: #{uresencoder_forward.24} parent=27 // pred_region
        %s410 = smul.u32 2, %s13
      $region32: #{uresencoder_forward.24} parent=27 // pred_fallthru
        _
    $region28: #{uresencoder_forward.24} parent=5 // pred_fallthru
      _
    %p411 = scmp.le.s32.totalorder 2, %s8
    // Predicated region
    $region33: #{uresencoder_forward.24} parent=5 // pred_check
      %p412 = pneg %p411
    $region34: #{uresencoder_forward.24} parent=5 // pred_check_branch
      %414 = sbr.rel (%p412) target = $region36
    $region35: #{uresencoder_forward.24} parent=5 // pred_region
      %s415 = ssub.s32 %s8, 2
      // Predicated region
      $region37: #{uresencoder_forward.24} parent=35 // pred_check
        %p416 = pneg %p84
      $region38: #{uresencoder_forward.24} parent=35 // pred_check_branch
        %418 = sbr.rel (%p416) target = $region40
      $region39: #{uresencoder_forward.24} parent=35 // pred_region
        %s419 = smul.u32 2, %s14
        %p420 = scmp.lt.s32.totalorder %s419, 3
        %s421 = scalar_select %p420, %s419, 3
        %s422 = smul.addr %s421, 8
        %s423 = scalar_lea.vmem %s2, %s422
      $region40: #{uresencoder_forward.24} parent=35 // pred_fallthru
        _
    $region36: #{uresencoder_forward.24} parent=5 // pred_fallthru
      _
  $region6: #{uresencoder_forward.24} parent=0 // loop_footer
    %s12 = sadd.s32 1, %s8
  $region7: #{uresencoder_forward.24} parent=0 // loop_footer_branch
    %7 = sbr.rel target = $region3
  $region8: #{uresencoder_forward.24} parent=0 // loop_exit
    _

// kernel: uresencoder_forward.25
$region0: #{uresencoder_forward.25}
  #allocation0 [shape = 'u32[]', space=smem, size = 0x4, offset = 0x4, fixed_abs, tag = 'smem constant byte address 0x4 - core index']
  #allocation1 [shape = 'u32[144,128]{1,0:T(1,128)}', space=vmem, size = 0x12000, scoped, tag = 'internal scratch']
  %s0 = inlined_call_operand.vmem [shape: f32[32,32], index: 0, kind: input, shape index: {}]
  %s1 = inlined_call_operand.hbm [shape: f32[32,32], index: 1, kind: output, shape index: {}]
  %s2 = sld [smem:[#allocation0]]
  $region37: #{uresencoder_forward.25} parent=0
    _
  %s4 = ssub.s32 1, %s2
  %s5 = scalar_select 0, %s4, %s2
  $region1: #{uresencoder_forward.25} parent=0
    #allocation2 [shape = 'u8[16384]{0}', space=vmem, size = 0x4000, scoped, tag = 'output window, operand 0']
    #allocation3 [shape = 's32[2]{0}', space=sflag, size = 0x8, scoped, tag = 'scoped memory for uresencoder_forward.25']
    %6 = vsyncpa [#allocation3], 0
    %s7 = scalar_lea.sflag [#allocation3], 1
    %8 = vsyncpa %s7, 0
    loop: start=0, step=1, limit=4
    $region2: #{uresencoder_forward.25} parent=1 // loop_pre_header
      _
    $region3: #{uresencoder_forward.25} parent=1 // loop_header
      %s10 = sphi 0, %s14
      %p11 = scmp.ge.s32.totalorder %s10, 4
      %s20 = sphi 0, %s22
      %s23 = sphi 0, %s20
      %s24 = sphi 0, %s23
      %s40 = sphi 0, %s24
      %s46 = sphi 0, %s48
      %s49 = sphi 0, %s46
      %s50 = sphi 0, %s49
      %s66 = sphi 0, %s50
    $region4: #{uresencoder_forward.25} parent=1 // loop_header_branch
      %13 = sbr.rel (%p11) target = $region8
    $region5: #{uresencoder_forward.25} parent=1 // loop_body
      %s15 = ssub.s32 %s10, 1
      %s16 = ssub.s32 %s10, 2
      %s17 = sadd.s32 %s10, 1
      %s18 = ssub.s32 %s10, %s17
      %p19 = scmp.eq.s32.totalorder %s18, 0
      %s21 = sadd.s32 %s20, 1
      %s22 = scalar_select %p19, %s20, %s21
      %p25 = pneg %p19
      %p26 = scmp.eq.s32.totalorder %s10, 1
      %p27 = por %p25, %p26
      %p28 = scmp.ne.s32.totalorder %s20, %s23
      %p29 = scmp.eq.s32.totalorder %s10, 0
      %p30 = por %p28, %p29
      %p31 = scmp.ne.s32.totalorder %s20, %s23
      %p32 = scmp.eq.s32.totalorder %s15, 1
      %p33 = por %p31, %p32
      %p34 = scmp.ne.s32.totalorder %s23, %s24
      %p35 = scmp.eq.s32.totalorder %s15, 0
      %p36 = por %p34, %p35
      %p37 = scmp.ne.s32.totalorder %s23, %s24
      %p38 = scmp.eq.s32.totalorder %s16, 1
      %p39 = por %p37, %p38
      %p41 = scmp.ne.s32.totalorder %s24, %s40
      %p42 = scmp.eq.s32.totalorder %s16, 0
      %p43 = por %p41, %p42
      %s44 = ssub.s32 %s10, %s17
      %p45 = scmp.eq.s32.totalorder %s44, 0
      %s47 = sadd.s32 %s46, 1
      %s48 = scalar_select %p45, %s46, %s47
      %p51 = pneg %p45
      %p52 = scmp.eq.s32.totalorder %s10, 1
      %p53 = por %p51, %p52
      %p54 = scmp.ne.s32.totalorder %s46, %s49
      %p55 = scmp.eq.s32.totalorder %s10, 0
      %p56 = por %p54, %p55
      %p57 = scmp.ne.s32.totalorder %s46, %s49
      %p58 = scmp.eq.s32.totalorder %s15, 1
      %p59 = por %p57, %p58
      %p60 = scmp.ne.s32.totalorder %s49, %s50
      %p61 = scmp.eq.s32.totalorder %s15, 0
      %p62 = por %p60, %p61
      %p63 = scmp.ne.s32.totalorder %s49, %s50
      %p64 = scmp.eq.s32.totalorder %s16, 1
      %p65 = por %p63, %p64
      %p67 = scmp.ne.s32.totalorder %s50, %s66
      %p68 = scmp.eq.s32.totalorder %s16, 0
      %p69 = por %p67, %p68
      %p70 = scmp.le.s32.totalorder 1, %s10
      %p71 = scmp.lt.s32.totalorder %s10, 3
      %p72 = pnand %p70, %p71
      %p73 = pneg %p72
      // Predicated region
      $region9: #{uresencoder_forward.25} parent=5 // pred_check
        _
      $region10: #{uresencoder_forward.25} parent=5 // pred_check_branch
        %75 = sbr.rel (%p72) target = $region12
      $region11: #{uresencoder_forward.25} parent=5 // pred_region
        %s76 = ssub.s32 %s10, 1
      $region12: #{uresencoder_forward.25} parent=5 // pred_fallthru
        _
      %p77 = scmp.lt.s32.totalorder %s10, 2
      // Predicated region
      $region13: #{uresencoder_forward.25} parent=5 // pred_check
        %p78 = pneg %p77
      $region14: #{uresencoder_forward.25} parent=5 // pred_check_branch
        %80 = sbr.rel (%p78) target = $region16
      $region15: #{uresencoder_forward.25} parent=5 // pred_region
        // Predicated region
        $region17: #{uresencoder_forward.25} parent=15 // pred_check
          %p81 = pneg %p30
        $region18: #{uresencoder_forward.25} parent=15 // pred_check_branch
          %83 = sbr.rel (%p81) target = $region20
        $region19: #{uresencoder_forward.25} parent=15 // pred_region
          %s84 = smul.u32 2, %s10
          %p85 = scmp.lt.s32.totalorder %s84, 3
          %s86 = scalar_select %p85, %s84, 3
          %s87 = smul.addr %s86, 8
          %s88 = scalar_lea.vmem %s0, %s87
          %s89 = smul.u32 2, %s10
        $region20: #{uresencoder_forward.25} parent=15 // pred_fallthru
          _
      $region16: #{uresencoder_forward.25} parent=5 // pred_fallthru
        _
      %p90 = scmp.le.s32.totalorder 1, %s10
      %p91 = scmp.lt.s32.totalorder %s10, 3
      %p92 = pnand %p90, %p91
      %p93 = pneg %p92
      // Predicated region
      $region21: #{uresencoder_forward.25} parent=5 // pred_check
        _
      $region22: #{uresencoder_forward.25} parent=5 // pred_check_branch
        %95 = sbr.rel (%p92) target = $region24
      $region23: #{uresencoder_forward.25} parent=5 // pred_region
        %s96 = ssub.s32 %s10, 1
        %s97 = smul.u32 2, %s15
        %p98 = scmp.lt.s32.totalorder %s97, 3
        %s99 = scalar_select %p98, %s97, 3
        %s100 = smul.addr %s99, 8
        %s101 = scalar_lea.vmem %s0, %s100
        %p102 = pneg %p36
        %p103 = pneg %p33
        %p104 = pneg %p62
        %p105 = pneg %p59
        %s106 = sand.u32 %s49, 1
        %s107 = scalar_lea.sflag [#allocation3], %s106
        %s108 = sand.u32 %s49, 1
        %s109 = smul.addr %s108, 16
        %s110 = scalar_lea.vmem [#allocation2], %s109
        %s111 = smul.u32 2, %s15
        %p112 = scmp.lt.s32.totalorder %s111, 3
        %s113 = scalar_select %p112, %s111, 3
        %s114 = smul.addr %s113, 8
        %s115 = scalar_lea.vmem %s0, %s114
        %s116 = smul.u32 2, %s15
        %s117 = smul.u32 2, %s15
        %v118 = vld [vmem:[%s115] sm:$0xff]
        %v119 = vld [vmem:[%s115 + $0x8] sm:$0xff]
        %v120 = vand.u32 2147483647, %v118
        %v121 = vand.u32 2147483647, %v119
        %vm122 = vcmask 261120
        %v123 = vsel %vm122, %v120, 0.0
        %124 = vadd.xlane.f32.xlu0 %v123
        %v125 = vpop.xlane.xlu0 %124
        %v126 = vsel %vm122, %v121, 0.0
        %127 = vadd.xlane.f32.xlu0 %v126
        %v128 = vpop.xlane.xlu0 %127
        %v129 = vmax.f32 %v125, 1e-12
        %v130 = vmax.f32 %v128, 1e-12
        %v131 = vrcp.pop %v129
        %v132 = vmul.f32 %v118, %v131
        %v133 = vrcp.pop %v130
        %v134 = vmul.f32 %v119, %v133
        %135 = vst.msk [vmem:[%s110] sm:$0xff] %vm122, %v132
        %136 = vst.msk [vmem:[%s110 + $0x8] sm:$0xff] %vm122, %v134
        %s137 = sand.u32 %s49, 1
        %s138 = scalar_lea.sflag [#allocation3], %s137
        %s139 = sand.u32 %s49, 1
        %s140 = smul.addr %s139, 16
        %s141 = scalar_lea.vmem [#allocation2], %s140
        // Predicated region
        $region25: #{uresencoder_forward.25} parent=23 // pred_check
          %p142 = pneg %p59
        $region26: #{uresencoder_forward.25} parent=23 // pred_check_branch
          %144 = sbr.rel (%p142) target = $region28
        $region27: #{uresencoder_forward.25} parent=23 // pred_region
          %s145 = smul.u32 2, %s15
          %s147 = ssub.s32 256, 256
          %148 = vsyncadd %s138, %s147
          %s149 = smul.addr %s145, 128
          %s150 = scalar_lea.hbm %s1, %s149
          %s151 = sshll.u32 %s141, 4
          %s152 = int_to_ptr.vmem [resolvable:$true] %s151
          %157 = dma.vmem_to_hbm [thread:$0]  %s152, 256, %s150, %s138, 128, 128, 8
        $region28: #{uresencoder_forward.25} parent=23 // pred_fallthru
          _
      $region24: #{uresencoder_forward.25} parent=5 // pred_fallthru
        _
      %p158 = scmp.le.s32.totalorder 2, %s10
      // Predicated region
      $region29: #{uresencoder_forward.25} parent=5 // pred_check
        %p159 = pneg %p158
      $region30: #{uresencoder_forward.25} parent=5 // pred_check_branch
        %161 = sbr.rel (%p159) target = $region32
      $region31: #{uresencoder_forward.25} parent=5 // pred_region
        %s162 = ssub.s32 %s10, 2
        // Predicated region
        $region33: #{uresencoder_forward.25} parent=31 // pred_check
          %p163 = pneg %p65
        $region34: #{uresencoder_forward.25} parent=31 // pred_check_branch
          %165 = sbr.rel (%p163) target = $region36
        $region35: #{uresencoder_forward.25} parent=31 // pred_region
          %s166 = sand.u32 %s50, 1
          %s167 = scalar_lea.sflag [#allocation3], %s166
          %s168 = sand.u32 %s50, 1
          %s169 = smul.addr %s168, 16
          %s170 = scalar_lea.vmem [#allocation2], %s169
          %171 = dma.done %s167, 256
        $region36: #{uresencoder_forward.25} parent=31 // pred_fallthru
          _
      $region32: #{uresencoder_forward.25} parent=5 // pred_fallthru
        _
    $region6: #{uresencoder_forward.25} parent=1 // loop_footer
      %s14 = sadd.s32 1, %s10
    $region7: #{uresencoder_forward.25} parent=1 // loop_footer_branch
      %9 = sbr.rel target = $region3
    $region8: #{uresencoder_forward.25} parent=1 // loop_exit
      _
    %172 = vsyncpa [#allocation3], 1
    %s173 = scalar_lea.sflag [#allocation3], 1
    %174 = vsyncpa %s173, 1

</llo_original>
